<compile_context>
chip_gen: v7x
topology: tpu7x:2x2x1
jax: 0.10.0
libtpu: 0.0.40
codegen_flags: <defaults>
</compile_context>

<pallas_src>
import math

import jax
import jax.numpy as jnp
import numpy as np
from jax.experimental import pallas as pl
from jax.experimental.pallas import tpu as pltpu

PAD_ID = 0
NEG_INF = -1e30  # large finite negative: safe even if a whole row is masked

# Parameter ordering for the stacked (leading layer axis) weights.
_STACK_ORDER = (
    "wq", "bq", "wk", "bk", "wv", "bv",          # per-head QKV projections
    "wo", "bo", "ln1_g", "ln1_b",                # attn output proj + LayerNorm
    "w1", "b1", "w2", "b2", "ln2_g", "ln2_b",    # FFN (Conv1d k=1 == matmul) + LayerNorm
)


def _layer_norm(x, gamma, beta, eps=1e-5):
    mean = jnp.mean(x, axis=-1, keepdims=True)
    var = jnp.mean((x - mean) ** 2, axis=-1, keepdims=True)
    return (x - mean) * jax.lax.rsqrt(var + eps) * gamma + beta


# ------------------------------- the kernel --------------------------------

def encoder_stack_kernel(bias_ref, x_ref,
                         wq_ref, bq_ref, wk_ref, bk_ref, wv_ref, bv_ref,
                         wo_ref, bo_ref, g1_ref, be1_ref,
                         w1_ref, fb1_ref, w2_ref, fb2_ref, g2_ref, be2_ref,
                         out_ref, attn_ref, x_scr):
    """grid = (batch, layer). One batch row, one encoder layer per step."""
    layer = pl.program_id(1)

    # Load the embedded input into the resident VMEM activation at layer 0;
    # later layers read/write the scratch (no HBM round-trip between layers).
    @pl.when(layer == 0)
    def _():
        x_scr[...] = x_ref[...]

    x = x_scr[...]                                   # (S, D)
    S, D = x.shape
    H = wq_ref.shape[0]

    # Heads on a leading batch axis: never sliced along the lane dimension.
    xh = jnp.broadcast_to(x[None], (H, S, D))

    # 1/sqrt(d_k) is already folded into wq/bq on the host.
    q = jnp.einsum("hsd,hdk->hsk", xh, wq_ref[...],
                   preferred_element_type=jnp.float32) + bq_ref[...]
    k = jnp.einsum("hsd,hdk->hsk", xh, wk_ref[...],
                   preferred_element_type=jnp.float32) + bk_ref[...]
    v = jnp.einsum("hsd,hdk->hsk", xh, wv_ref[...],
                   preferred_element_type=jnp.float32) + bv_ref[...]

    # Scores + key-padding additive bias (hoisted out of any per-head work).
    s = jnp.einsum("hqd,hkd->hqk", q, k, preferred_element_type=jnp.float32)
    s = s + bias_ref[...][None]                      # (1, S) -> broadcast (H, S, S)

    # Stable softmax over keys, all heads at once.
    m = jnp.max(s, axis=-1, keepdims=True)
    e = jnp.exp(s - m)
    p = e * pl.reciprocal(jnp.sum(e, axis=-1, keepdims=True), approx=False)
    attn_ref[...] = p                                # single (H, S, S) store per layer

    # Context + output projection:  sum_h ctx_h @ Wo_h  ==  concat(heads) @ Wo.
    ctx = jnp.einsum("hqk,hkv->hqv", p, v, preferred_element_type=jnp.float32)
    o = jnp.einsum("hqv,hvd->hqd", ctx, wo_ref[...],
                   preferred_element_type=jnp.float32)
    o = jnp.sum(o, axis=0) + bo_ref[...]             # (S, D)

    # TODO(synk): nn.Dropout skipped (identity; inference semantics).
    y1 = _layer_norm(o + x, g1_ref[...], be1_ref[...])

    # Position-wise FFN: Conv1d(D->d_hidden,k=1) -> ReLU -> Conv1d(d_hidden->D,k=1)
    h1 = jnp.maximum(
        jnp.dot(y1, w1_ref[...], preferred_element_type=jnp.float32) + fb1_ref[...],
        0.0)
    h2 = jnp.dot(h1, w2_ref[...], preferred_element_type=jnp.float32) + fb2_ref[...]
    y2 = _layer_norm(h2 + y1, g2_ref[...], be2_ref[...])

    x_scr[...] = y2                                  # carry activation to next layer
    out_ref[...] = y2                                # module returns every layer output


# ------------------------------ host wrapper --------------------------------

def _prep_layer_params(p, *, n_heads, d_k, d_v):
    """Reshape canonical (Linear-style) weights to head-leading kernel layout,
    folding the 1/sqrt(d_k) attention scale into Wq / bq."""
    d_model = p["wq"].shape[0]
    d_hidden = p["w1"].shape[1]
    scale = 1.0 / math.sqrt(d_k)
    return {
        "wq": (p["wq"] * scale).reshape(d_model, n_heads, d_k).transpose(1, 0, 2),
        "bq": (p["bq"] * scale).reshape(n_heads, 1, d_k),
        "wk": p["wk"].reshape(d_model, n_heads, d_k).transpose(1, 0, 2),
        "bk": p["bk"].reshape(n_heads, 1, d_k),
        "wv": p["wv"].reshape(d_model, n_heads, d_v).transpose(1, 0, 2),
        "bv": p["bv"].reshape(n_heads, 1, d_v),
        "wo": p["wo"].reshape(n_heads, d_v, d_model),
        "bo": p["bo"].reshape(1, d_model),
        "ln1_g": p["ln1_g"].reshape(1, d_model),
        "ln1_b": p["ln1_b"].reshape(1, d_model),
        "w1": p["w1"],
        "b1": p["b1"].reshape(1, d_hidden),
        "w2": p["w2"],
        "b2": p["b2"].reshape(1, d_model),
        "ln2_g": p["ln2_g"].reshape(1, d_model),
        "ln2_b": p["ln2_b"].reshape(1, d_model),
    }


def encoder_stack(x, key_bias, stacked, *, n_heads):
    """One pallas_call for the whole encoder-layer stack."""
    B, S, D = x.shape
    L = stacked["wq"].shape[0]
    H = n_heads

    def _wspec(name):
        shp = stacked[name].shape
        nd = len(shp) - 1
        return pl.BlockSpec((None,) + shp[1:],
                            lambda b, l, _nd=nd: (l,) + (0,) * _nd)

    in_specs = [
        pl.BlockSpec((None, 1, S), lambda b, l: (b, 0, 0)),   # key-padding bias
        pl.BlockSpec((None, S, D), lambda b, l: (b, 0, 0)),   # embedded input
    ] + [_wspec(name) for name in _STACK_ORDER]

    out_specs = (
        pl.BlockSpec((None, None, S, D), lambda b, l: (l, b, 0, 0)),
        pl.BlockSpec((None, None, H, S, S), lambda b, l: (l, b, 0, 0, 0)),
    )
    out_shape = (
        jax.ShapeDtypeStruct((L, B, S, D), jnp.float32),
        jax.ShapeDtypeStruct((L, B, H, S, S), jnp.float32),
    )

    outs, attns = pl.pallas_call(
        encoder_stack_kernel,
        grid=(B, L),
        in_specs=in_specs,
        out_specs=out_specs,
        out_shape=out_shape,
        scratch_shapes=[pltpu.VMEM((S, D), jnp.float32)],
        compiler_params=pltpu.CompilerParams(
            dimension_semantics=("parallel", "arbitrary")),
    )(key_bias, x, *[stacked[name] for name in _STACK_ORDER])
    return outs, attns


# ----------------------------- parameter setup -----------------------------

def sinusoid_position_table(n_position, d_model, padding_idx=0):
    pos = np.arange(n_position)[:, None].astype(np.float64)
    j = np.arange(d_model)[None, :]
    angle = pos / np.power(10000.0, 2.0 * (j // 2) / d_model)
    table = np.where(j % 2 == 0, np.sin(angle), np.cos(angle))
    table[padding_idx] = 0.0
    return jnp.asarray(table, dtype=jnp.float32)


def init_layer_params(key, d_model, d_hidden, n_heads, d_k, d_v):
    ks = jax.random.split(key, 6)
    std = 0.1
    return {
        "wq": jax.random.normal(ks[0], (d_model, n_heads * d_k), jnp.float32) * std,
        "bq": jnp.zeros((n_heads * d_k,), jnp.float32),
        "wk": jax.random.normal(ks[1], (d_model, n_heads * d_k), jnp.float32) * std,
        "bk": jnp.zeros((n_heads * d_k,), jnp.float32),
        "wv": jax.random.normal(ks[2], (d_model, n_heads * d_v), jnp.float32) * std,
        "bv": jnp.zeros((n_heads * d_v,), jnp.float32),
        "wo": jax.random.normal(ks[3], (n_heads * d_v, d_model), jnp.float32) * std,
        "bo": jnp.zeros((d_model,), jnp.float32),
        "ln1_g": jnp.ones((d_model,), jnp.float32),
        "ln1_b": jnp.zeros((d_model,), jnp.float32),
        "w1": jax.random.normal(ks[4], (d_model, d_hidden), jnp.float32) * std,
        "b1": jnp.zeros((d_hidden,), jnp.float32),
        "w2": jax.random.normal(ks[5], (d_hidden, d_model), jnp.float32) * std,
        "b2": jnp.zeros((d_model,), jnp.float32),
        "ln2_g": jnp.ones((d_model,), jnp.float32),
        "ln2_b": jnp.zeros((d_model,), jnp.float32),
    }


def init_encoder_params(key, vocab_size, max_len, n_layers, d_model, d_emb,
                        d_hidden, n_heads, d_k, d_v, pad_id=PAD_ID):
    keys = jax.random.split(key, n_layers + 1)
    emb = jax.random.normal(keys[0], (vocab_size, d_emb), jnp.float32) * 0.1
    emb = emb.at[pad_id].set(0.0)                      # padding_idx row = 0
    pos_table = sinusoid_position_table(max_len + 1, d_emb, padding_idx=pad_id)
    layers = [init_layer_params(keys[i + 1], d_model, d_hidden, n_heads, d_k, d_v)
              for i in range(n_layers)]
    return {"emb": emb, "pos_table": pos_table, "layers": layers}


# ----------------------------- forward passes -----------------------------

def encoder_forward(seq, pos, params, *, n_heads, d_k, d_v, pad_id=PAD_ID):
    B, S = seq.shape
    # Key-padding additive bias (B, 1, S): NEG_INF where key position is PAD.
    key_bias = (seq == pad_id).astype(jnp.float32)[:, None, :] * NEG_INF
    embedded = params["emb"][seq] + params["pos_table"][pos]   # glue: gathers

    prepped = [_prep_layer_params(lp, n_heads=n_heads, d_k=d_k, d_v=d_v)
               for lp in params["layers"]]
    stacked = {name: jnp.stack([lp[name] for lp in prepped], axis=0)
               for name in _STACK_ORDER}

    outs, attns = encoder_stack(embedded, key_bias, stacked, n_heads=n_heads)
    L = len(params["layers"])
    return [outs[i] for i in range(L)], [attns[i] for i in range(L)]


def _ref_layer(x, mask, p, n_heads, d_k, d_v):
    """Pure-JAX reference for one encoder layer (canonical weights)."""
    B, S, D = x.shape
    q = (x @ p["wq"] + p["bq"]).reshape(B, S, n_heads, d_k).transpose(0, 2, 1, 3)
    k = (x @ p["wk"] + p["bk"]).reshape(B, S, n_heads, d_k).transpose(0, 2, 1, 3)
    v = (x @ p["wv"] + p["bv"]).reshape(B, S, n_heads, d_v).transpose(0, 2, 1, 3)
    s = jnp.einsum("bhqd,bhkd->bhqk", q, k) / math.sqrt(d_k)
    s = jnp.where(mask[:, None] > 0, NEG_INF, s)
    attn = jax.nn.softmax(s, axis=-1)
    o = jnp.einsum("bhqk,bhkd->bhqd", attn, v).transpose(0, 2, 1, 3).reshape(B, S, -1)
    o = o @ p["wo"] + p["bo"]
    y1 = _layer_norm(o + x, p["ln1_g"], p["ln1_b"])
    h1 = jnp.maximum(y1 @ p["w1"] + p["b1"], 0.0)
    h2 = h1 @ p["w2"] + p["b2"]
    y2 = _layer_norm(h2 + y1, p["ln2_g"], p["ln2_b"])
    return y2, attn


def _ref_forward(seq, pos, params, *, n_heads, d_k, d_v, pad_id=PAD_ID):
    B, S = seq.shape
    mask = jnp.broadcast_to((seq == pad_id)[:, None, :], (B, S, S)).astype(jnp.int32)
    output = params["emb"][seq] + params["pos_table"][pos]
    outputs, attns = [], []
    for lp in params["layers"]:
        output, attn = _ref_layer(output, mask, lp, n_heads, d_k, d_v)
        outputs.append(output)
        attns.append(attn)
    return outputs, attns


if __name__ == "__main__":
    # Small config consistent with the module's constructor arguments.
    vocab_size, max_len = 50, 10
    n_layers, d_model, d_emb, d_hidden = 2, 32, 32, 64
    n_heads, d_k, d_v = 4, 8, 8
    B, S = 2, 8

    key = jax.random.PRNGKey(0)
    pkey, _ = jax.random.split(key)
    params = init_encoder_params(pkey, vocab_size, max_len, n_layers, d_model,
                                 d_emb, d_hidden, n_heads, d_k, d_v)

    # Deterministic token ids with trailing PAD (=0) positions.
    seq = jnp.array([[5, 12, 7, 3, 9, 2, 0, 0],
                     [4, 8, 1, 6, 11, 13, 15, 0]], dtype=jnp.int32)
    pos = jnp.array([[1, 2, 3, 4, 5, 6, 0, 0],
                     [1, 2, 3, 4, 5, 6, 7, 0]], dtype=jnp.int32)

    outputs, attns = encoder_forward(seq, pos, params,
                                     n_heads=n_heads, d_k=d_k, d_v=d_v)
    jax.block_until_ready(outputs)
    jax.block_until_ready(attns)

    # Correctness check against pure-JAX reference.
    ref_outputs, ref_attns = _ref_forward(seq, pos, params,
                                          n_heads=n_heads, d_k=d_k, d_v=d_v)
    for o, ro in zip(outputs, ref_outputs):
        np.testing.assert_allclose(np.asarray(o), np.asarray(ro), atol=1e-4, rtol=1e-4)
    for a, ra in zip(attns, ref_attns):
        np.testing.assert_allclose(np.asarray(a), np.asarray(ra), atol=1e-4, rtol=1e-4)

    print("KERNEL_OK")
</pallas_src>

<mosaic_0001>
module attributes {stable_mosaic.version = 11 : i64} {
  func.func @encoder_stack_kernel(%arg0: i32, %arg1: i32, %arg2: memref<1x1x8xf32, #tpu.memory_space<vmem>>, %arg3: memref<1x8x32xf32, #tpu.memory_space<vmem>>, %arg4: memref<1x4x32x8xf32, #tpu.memory_space<vmem>>, %arg5: memref<1x4x1x8xf32, #tpu.memory_space<vmem>>, %arg6: memref<1x4x32x8xf32, #tpu.memory_space<vmem>>, %arg7: memref<1x4x1x8xf32, #tpu.memory_space<vmem>>, %arg8: memref<1x4x32x8xf32, #tpu.memory_space<vmem>>, %arg9: memref<1x4x1x8xf32, #tpu.memory_space<vmem>>, %arg10: memref<1x4x8x32xf32, #tpu.memory_space<vmem>>, %arg11: memref<1x1x32xf32, #tpu.memory_space<vmem>>, %arg12: memref<1x1x32xf32, #tpu.memory_space<vmem>>, %arg13: memref<1x1x32xf32, #tpu.memory_space<vmem>>, %arg14: memref<1x32x64xf32, #tpu.memory_space<vmem>>, %arg15: memref<1x1x64xf32, #tpu.memory_space<vmem>>, %arg16: memref<1x64x32xf32, #tpu.memory_space<vmem>>, %arg17: memref<1x1x32xf32, #tpu.memory_space<vmem>>, %arg18: memref<1x1x32xf32, #tpu.memory_space<vmem>>, %arg19: memref<1x1x32xf32, #tpu.memory_space<vmem>>, %arg20: memref<1x1x8x32xf32, #tpu.memory_space<vmem>>, %arg21: memref<1x1x4x8x8xf32, #tpu.memory_space<vmem>>, %arg22: memref<8x32xf32, #tpu.memory_space<vmem>>) attributes {dimension_semantics = [#tpu.dimension_semantics<parallel>, #tpu.dimension_semantics<arbitrary>], iteration_bounds = array<i64: 2, 2>, scalar_prefetch = 0 : i64, scratch_operands = 1 : i64, tpu.core_type = #tpu.core_type<tc>, window_params = [{transform_indices = @transform_0, window_bounds = array<i64: 1, 1, 8>}, {transform_indices = @transform_1, window_bounds = array<i64: 1, 8, 32>}, {transform_indices = @transform_2, window_bounds = array<i64: 1, 4, 32, 8>}, {transform_indices = @transform_3, window_bounds = array<i64: 1, 4, 1, 8>}, {transform_indices = @transform_4, window_bounds = array<i64: 1, 4, 32, 8>}, {transform_indices = @transform_5, window_bounds = array<i64: 1, 4, 1, 8>}, {transform_indices = @transform_6, window_bounds = array<i64: 1, 4, 32, 8>}, {transform_indices = @transform_7, window_bounds = array<i64: 1, 4, 1, 8>}, {transform_indices = @transform_8, window_bounds = array<i64: 1, 4, 8, 32>}, {transform_indices = @transform_9, window_bounds = array<i64: 1, 1, 32>}, {transform_indices = @transform_10, window_bounds = array<i64: 1, 1, 32>}, {transform_indices = @transform_11, window_bounds = array<i64: 1, 1, 32>}, {transform_indices = @transform_12, window_bounds = array<i64: 1, 32, 64>}, {transform_indices = @transform_13, window_bounds = array<i64: 1, 1, 64>}, {transform_indices = @transform_14, window_bounds = array<i64: 1, 64, 32>}, {transform_indices = @transform_15, window_bounds = array<i64: 1, 1, 32>}, {transform_indices = @transform_16, window_bounds = array<i64: 1, 1, 32>}, {transform_indices = @transform_17, window_bounds = array<i64: 1, 1, 32>}, {transform_indices = @transform_18, window_bounds = array<i64: 1, 1, 8, 32>}, {transform_indices = @transform_19, window_bounds = array<i64: 1, 1, 4, 8, 8>}]} {
    %c0_i32 = arith.constant 0 : i32
    %0 = arith.cmpi eq, %arg1, %c0_i32 : i32
    %1 = arith.extui %0 : i1 to i32
    %c0_i32_0 = arith.constant 0 : i32
    %2 = arith.cmpi ne, %1, %c0_i32_0 : i32
    scf.if %2 {
      %c0_92 = arith.constant 0 : index
      %c0_93 = arith.constant 0 : index
      %c0_94 = arith.constant 0 : index
      %130 = vector.load %arg3[%c0_92, %c0_93, %c0_94] : memref<1x8x32xf32, #tpu.memory_space<vmem>>, vector<1x8x32xf32>
      %131 = vector.shape_cast %130 : vector<1x8x32xf32> to vector<8x32xf32>
      %c0_95 = arith.constant 0 : index
      %c0_96 = arith.constant 0 : index
      %132 = vector.load %arg22[%c0_95, %c0_96] : memref<8x32xf32, #tpu.memory_space<vmem>>, vector<8x32xf32>
      tpu.vector_store %arg22[%c0_95, %c0_96], %131 {strides = array<i32>} : memref<8x32xf32, #tpu.memory_space<vmem>>, vector<8x32xf32>,
    } else {
    }
    %c0 = arith.constant 0 : index
    %c0_1 = arith.constant 0 : index
    %3 = vector.load %arg22[%c0, %c0_1] : memref<8x32xf32, #tpu.memory_space<vmem>>, vector<8x32xf32>
    %4 = vector.shape_cast %3 : vector<8x32xf32> to vector<1x8x32xf32>
    %5 = vector.shape_cast %4 : vector<1x8x32xf32> to vector<1x8x32xf32>
    %6 = vector.broadcast %5 : vector<1x8x32xf32> to vector<4x8x32xf32>
    %c0_2 = arith.constant 0 : index
    %c0_3 = arith.constant 0 : index
    %c0_4 = arith.constant 0 : index
    %c0_5 = arith.constant 0 : index
    %7 = vector.load %arg4[%c0_2, %c0_3, %c0_4, %c0_5] : memref<1x4x32x8xf32, #tpu.memory_space<vmem>>, vector<1x4x32x8xf32>
    %8 = vector.shape_cast %7 : vector<1x4x32x8xf32> to vector<4x32x8xf32>
    "tpu.trace_start"() <{level = 10 : i32, message = "hsd,hdk->hsk"}> : () -> ()
    %cst = arith.constant dense<0.000000e+00> : vector<4x8x8xf32>
    %9 = tpu.matmul %6, %8, %cst {dimension_numbers = #tpu.dot_dimension_numbers<[2], [1], [1], [2], [0, 0, 0, 1, 1, 2], [0], [0]>} : vector<4x8x32xf32>, vector<4x32x8xf32>, vector<4x8x8xf32> -> vector<4x8x8xf32>
    "tpu.trace_stop"() : () -> ()
    %c0_6 = arith.constant 0 : index
    %c0_7 = arith.constant 0 : index
    %c0_8 = arith.constant 0 : index
    %c0_9 = arith.constant 0 : index
    %10 = vector.load %arg5[%c0_6, %c0_7, %c0_8, %c0_9] : memref<1x4x1x8xf32, #tpu.memory_space<vmem>>, vector<1x4x1x8xf32>
    %11 = vector.shape_cast %10 : vector<1x4x1x8xf32> to vector<4x1x8xf32>
    %12 = vector.broadcast %11 : vector<4x1x8xf32> to vector<4x8x8xf32>
    %13 = arith.addf %9, %12 : vector<4x8x8xf32>
    %c0_10 = arith.constant 0 : index
    %c0_11 = arith.constant 0 : index
    %c0_12 = arith.constant 0 : index
    %c0_13 = arith.constant 0 : index
    %14 = vector.load %arg6[%c0_10, %c0_11, %c0_12, %c0_13] : memref<1x4x32x8xf32, #tpu.memory_space<vmem>>, vector<1x4x32x8xf32>
    %15 = vector.shape_cast %14 : vector<1x4x32x8xf32> to vector<4x32x8xf32>
    "tpu.trace_start"() <{level = 10 : i32, message = "hsd,hdk->hsk"}> : () -> ()
    %cst_14 = arith.constant dense<0.000000e+00> : vector<4x8x8xf32>
    %16 = tpu.matmul %6, %15, %cst_14 {dimension_numbers = #tpu.dot_dimension_numbers<[2], [1], [1], [2], [0, 0, 0, 1, 1, 2], [0], [0]>} : vector<4x8x32xf32>, vector<4x32x8xf32>, vector<4x8x8xf32> -> vector<4x8x8xf32>
    "tpu.trace_stop"() : () -> ()
    %c0_15 = arith.constant 0 : index
    %c0_16 = arith.constant 0 : index
    %c0_17 = arith.constant 0 : index
    %c0_18 = arith.constant 0 : index
    %17 = vector.load %arg7[%c0_15, %c0_16, %c0_17, %c0_18] : memref<1x4x1x8xf32, #tpu.memory_space<vmem>>, vector<1x4x1x8xf32>
    %18 = vector.shape_cast %17 : vector<1x4x1x8xf32> to vector<4x1x8xf32>
    %19 = vector.broadcast %18 : vector<4x1x8xf32> to vector<4x8x8xf32>
    %20 = arith.addf %16, %19 : vector<4x8x8xf32>
    %c0_19 = arith.constant 0 : index
    %c0_20 = arith.constant 0 : index
    %c0_21 = arith.constant 0 : index
    %c0_22 = arith.constant 0 : index
    %21 = vector.load %arg8[%c0_19, %c0_20, %c0_21, %c0_22] : memref<1x4x32x8xf32, #tpu.memory_space<vmem>>, vector<1x4x32x8xf32>
    %22 = vector.shape_cast %21 : vector<1x4x32x8xf32> to vector<4x32x8xf32>
    "tpu.trace_start"() <{level = 10 : i32, message = "hsd,hdk->hsk"}> : () -> ()
    %cst_23 = arith.constant dense<0.000000e+00> : vector<4x8x8xf32>
    %23 = tpu.matmul %6, %22, %cst_23 {dimension_numbers = #tpu.dot_dimension_numbers<[2], [1], [1], [2], [0, 0, 0, 1, 1, 2], [0], [0]>} : vector<4x8x32xf32>, vector<4x32x8xf32>, vector<4x8x8xf32> -> vector<4x8x8xf32>
    "tpu.trace_stop"() : () -> ()
    %c0_24 = arith.constant 0 : index
    %c0_25 = arith.constant 0 : index
    %c0_26 = arith.constant 0 : index
    %c0_27 = arith.constant 0 : index
    %24 = vector.load %arg9[%c0_24, %c0_25, %c0_26, %c0_27] : memref<1x4x1x8xf32, #tpu.memory_space<vmem>>, vector<1x4x1x8xf32>
    %25 = vector.shape_cast %24 : vector<1x4x1x8xf32> to vector<4x1x8xf32>
    %26 = vector.broadcast %25 : vector<4x1x8xf32> to vector<4x8x8xf32>
    %27 = arith.addf %23, %26 : vector<4x8x8xf32>
    "tpu.trace_start"() <{level = 10 : i32, message = "hqd,hkd->hqk"}> : () -> ()
    %cst_28 = arith.constant dense<0.000000e+00> : vector<4x8x8xf32>
    %28 = tpu.matmul %13, %20, %cst_28 {dimension_numbers = #tpu.dot_dimension_numbers<[2], [2], [1], [1], [0, 0, 0, 1, 1, 1], [0], [0]>} : vector<4x8x8xf32>, vector<4x8x8xf32>, vector<4x8x8xf32> -> vector<4x8x8xf32>
    "tpu.trace_stop"() : () -> ()
    %c0_29 = arith.constant 0 : index
    %c0_30 = arith.constant 0 : index
    %c0_31 = arith.constant 0 : index
    %29 = vector.load %arg2[%c0_29, %c0_30, %c0_31] : memref<1x1x8xf32, #tpu.memory_space<vmem>>, vector<1x1x8xf32>
    %30 = vector.shape_cast %29 : vector<1x1x8xf32> to vector<1x8xf32>
    %31 = vector.shape_cast %30 : vector<1x8xf32> to vector<1x1x8xf32>
    %32 = vector.broadcast %31 : vector<1x1x8xf32> to vector<4x8x8xf32>
    %33 = arith.addf %28, %32 : vector<4x8x8xf32>
    %cst_32 = arith.constant dense<0xFF800000> : vector<4x8xf32>
    %34 = vector.multi_reduction <maximumf>, %33, %cst_32 [2] : vector<4x8x8xf32> to vector<4x8xf32>
    %35 = vector.shape_cast %34 : vector<4x8xf32> to vector<4x8x1xf32>
    %36 = vector.broadcast %35 : vector<4x8x1xf32> to vector<4x8x8xf32>
    %37 = arith.subf %33, %36 : vector<4x8x8xf32>
    %38 = math.exp %37 : vector<4x8x8xf32>
    %cst_33 = arith.constant dense<0.000000e+00> : vector<4x8xf32>
    %39 = vector.multi_reduction <add>, %38, %cst_33 [2] : vector<4x8x8xf32> to vector<4x8xf32>
    %40 = vector.shape_cast %39 : vector<4x8xf32> to vector<4x8x1xf32>
    %41 = tpu.reciprocal %40 : vector<4x8x1xf32> -> vector<4x8x1xf32>
    %42 = vector.broadcast %41 : vector<4x8x1xf32> to vector<4x8x8xf32>
    %43 = arith.mulf %38, %42 : vector<4x8x8xf32>
    %c0_34 = arith.constant 0 : index
    %c0_35 = arith.constant 0 : index
    %c0_36 = arith.constant 0 : index
    %c0_37 = arith.constant 0 : index
    %c0_38 = arith.constant 0 : index
    %44 = vector.load %arg21[%c0_34, %c0_35, %c0_36, %c0_37, %c0_38] : memref<1x1x4x8x8xf32, #tpu.memory_space<vmem>>, vector<1x1x4x8x8xf32>
    %45 = vector.shape_cast %44 : vector<1x1x4x8x8xf32> to vector<4x8x8xf32>
    %46 = vector.shape_cast %43 : vector<4x8x8xf32> to vector<1x1x4x8x8xf32>
    tpu.vector_store %arg21[%c0_34, %c0_35, %c0_36, %c0_37, %c0_38], %46 {strides = array<i32>} : memref<1x1x4x8x8xf32, #tpu.memory_space<vmem>>, vector<1x1x4x8x8xf32>,
    "tpu.trace_start"() <{level = 10 : i32, message = "hqk,hkv->hqv"}> : () -> ()
    %cst_39 = arith.constant dense<0.000000e+00> : vector<4x8x8xf32>
    %47 = tpu.matmul %43, %27, %cst_39 {dimension_numbers = #tpu.dot_dimension_numbers<[2], [1], [1], [2], [0, 0, 0, 1, 1, 2], [0], [0]>} : vector<4x8x8xf32>, vector<4x8x8xf32>, vector<4x8x8xf32> -> vector<4x8x8xf32>
    "tpu.trace_stop"() : () -> ()
    %c0_40 = arith.constant 0 : index
    %c0_41 = arith.constant 0 : index
    %c0_42 = arith.constant 0 : index
    %c0_43 = arith.constant 0 : index
    %48 = vector.load %arg10[%c0_40, %c0_41, %c0_42, %c0_43] : memref<1x4x8x32xf32, #tpu.memory_space<vmem>>, vector<1x4x8x32xf32>
    %49 = vector.shape_cast %48 : vector<1x4x8x32xf32> to vector<4x8x32xf32>
    "tpu.trace_start"() <{level = 10 : i32, message = "hqv,hvd->hqd"}> : () -> ()
    %cst_44 = arith.constant dense<0.000000e+00> : vector<4x8x32xf32>
    %50 = tpu.matmul %47, %49, %cst_44 {dimension_numbers = #tpu.dot_dimension_numbers<[2], [1], [1], [2], [0, 0, 0, 1, 1, 2], [0], [0]>} : vector<4x8x8xf32>, vector<4x8x32xf32>, vector<4x8x32xf32> -> vector<4x8x32xf32>
    "tpu.trace_stop"() : () -> ()
    %cst_45 = arith.constant dense<0.000000e+00> : vector<8x32xf32>
    %51 = vector.multi_reduction <add>, %50, %cst_45 [0] : vector<4x8x32xf32> to vector<8x32xf32>
    %c0_46 = arith.constant 0 : index
    %c0_47 = arith.constant 0 : index
    %c0_48 = arith.constant 0 : index
    %52 = vector.load %arg11[%c0_46, %c0_47, %c0_48] : memref<1x1x32xf32, #tpu.memory_space<vmem>>, vector<1x1x32xf32>
    %53 = vector.shape_cast %52 : vector<1x1x32xf32> to vector<1x32xf32>
    %54 = vector.broadcast %53 : vector<1x32xf32> to vector<8x32xf32>
    %55 = arith.addf %51, %54 : vector<8x32xf32>
    %56 = arith.addf %55, %3 : vector<8x32xf32>
    %c0_49 = arith.constant 0 : index
    %c0_50 = arith.constant 0 : index
    %c0_51 = arith.constant 0 : index
    %57 = vector.load %arg12[%c0_49, %c0_50, %c0_51] : memref<1x1x32xf32, #tpu.memory_space<vmem>>, vector<1x1x32xf32>
    %58 = vector.shape_cast %57 : vector<1x1x32xf32> to vector<1x32xf32>
    %c0_52 = arith.constant 0 : index
    %c0_53 = arith.constant 0 : index
    %c0_54 = arith.constant 0 : index
    %59 = vector.load %arg13[%c0_52, %c0_53, %c0_54] : memref<1x1x32xf32, #tpu.memory_space<vmem>>, vector<1x1x32xf32>
    %60 = vector.shape_cast %59 : vector<1x1x32xf32> to vector<1x32xf32>
    %cst_55 = arith.constant dense<0.000000e+00> : vector<8xf32>
    %61 = vector.multi_reduction <add>, %56, %cst_55 [1] : vector<8x32xf32> to vector<8xf32>
    %62 = vector.shape_cast %61 : vector<8xf32> to vector<8x1xf32>
    %cst_56 = arith.constant 3.200000e+01 : f32
    %63 = vector.broadcast %cst_56 : f32 to vector<8x1xf32>
    %64 = arith.divf %62, %63 : vector<8x1xf32>
    %65 = vector.broadcast %64 : vector<8x1xf32> to vector<8x32xf32>
    %66 = arith.subf %56, %65 : vector<8x32xf32>
    %67 = arith.mulf %66, %66 : vector<8x32xf32>
    %cst_57 = arith.constant dense<0.000000e+00> : vector<8xf32>
    %68 = vector.multi_reduction <add>, %67, %cst_57 [1] : vector<8x32xf32> to vector<8xf32>
    %69 = vector.shape_cast %68 : vector<8xf32> to vector<8x1xf32>
    %cst_58 = arith.constant 3.200000e+01 : f32
    %70 = vector.broadcast %cst_58 : f32 to vector<8x1xf32>
    %71 = arith.divf %69, %70 : vector<8x1xf32>
    %72 = vector.broadcast %64 : vector<8x1xf32> to vector<8x32xf32>
    %73 = arith.subf %56, %72 : vector<8x32xf32>
    %cst_59 = arith.constant 9.99999974E-6 : f32
    %74 = vector.broadcast %cst_59 : f32 to vector<8x1xf32>
    %75 = arith.addf %71, %74 : vector<8x1xf32>
    %76 = math.rsqrt %75 : vector<8x1xf32>
    %77 = vector.broadcast %76 : vector<8x1xf32> to vector<8x32xf32>
    %78 = arith.mulf %73, %77 : vector<8x32xf32>
    %79 = vector.broadcast %58 : vector<1x32xf32> to vector<8x32xf32>
    %80 = arith.mulf %78, %79 : vector<8x32xf32>
    %81 = vector.broadcast %60 : vector<1x32xf32> to vector<8x32xf32>
    %82 = arith.addf %80, %81 : vector<8x32xf32>
    %c0_60 = arith.constant 0 : index
    %c0_61 = arith.constant 0 : index
    %c0_62 = arith.constant 0 : index
    %83 = vector.load %arg14[%c0_60, %c0_61, %c0_62] : memref<1x32x64xf32, #tpu.memory_space<vmem>>, vector<1x32x64xf32>
    %84 = vector.shape_cast %83 : vector<1x32x64xf32> to vector<32x64xf32>
    %cst_63 = arith.constant dense<0.000000e+00> : vector<8x64xf32>
    %85 = tpu.matmul %82, %84, %cst_63 {dimension_numbers = #tpu.dot_dimension_numbers<[1], [0], [0], [1], [0, 0, 1, 1], [], []>} : vector<8x32xf32>, vector<32x64xf32>, vector<8x64xf32> -> vector<8x64xf32>
    %c0_64 = arith.constant 0 : index
    %c0_65 = arith.constant 0 : index
    %c0_66 = arith.constant 0 : index
    %86 = vector.load %arg15[%c0_64, %c0_65, %c0_66] : memref<1x1x64xf32, #tpu.memory_space<vmem>>, vector<1x1x64xf32>
    %87 = vector.shape_cast %86 : vector<1x1x64xf32> to vector<1x64xf32>
    %88 = vector.broadcast %87 : vector<1x64xf32> to vector<8x64xf32>
    %89 = arith.addf %85, %88 : vector<8x64xf32>
    %cst_67 = arith.constant 0.000000e+00 : f32
    %90 = vector.broadcast %cst_67 : f32 to vector<8x64xf32>
    %91 = arith.maximumf %89, %90 : vector<8x64xf32>
    %c0_68 = arith.constant 0 : index
    %c0_69 = arith.constant 0 : index
    %c0_70 = arith.constant 0 : index
    %92 = vector.load %arg16[%c0_68, %c0_69, %c0_70] : memref<1x64x32xf32, #tpu.memory_space<vmem>>, vector<1x64x32xf32>
    %93 = vector.shape_cast %92 : vector<1x64x32xf32> to vector<64x32xf32>
    %cst_71 = arith.constant dense<0.000000e+00> : vector<8x32xf32>
    %94 = tpu.matmul %91, %93, %cst_71 {dimension_numbers = #tpu.dot_dimension_numbers<[1], [0], [0], [1], [0, 0, 1, 1], [], []>} : vector<8x64xf32>, vector<64x32xf32>, vector<8x32xf32> -> vector<8x32xf32>
    %c0_72 = arith.constant 0 : index
    %c0_73 = arith.constant 0 : index
    %c0_74 = arith.constant 0 : index
    %95 = vector.load %arg17[%c0_72, %c0_73, %c0_74] : memref<1x1x32xf32, #tpu.memory_space<vmem>>, vector<1x1x32xf32>
    %96 = vector.shape_cast %95 : vector<1x1x32xf32> to vector<1x32xf32>
    %97 = vector.broadcast %96 : vector<1x32xf32> to vector<8x32xf32>
    %98 = arith.addf %94, %97 : vector<8x32xf32>
    %99 = arith.addf %98, %82 : vector<8x32xf32>
    %c0_75 = arith.constant 0 : index
    %c0_76 = arith.constant 0 : index
    %c0_77 = arith.constant 0 : index
    %100 = vector.load %arg18[%c0_75, %c0_76, %c0_77] : memref<1x1x32xf32, #tpu.memory_space<vmem>>, vector<1x1x32xf32>
    %101 = vector.shape_cast %100 : vector<1x1x32xf32> to vector<1x32xf32>
    %c0_78 = arith.constant 0 : index
    %c0_79 = arith.constant 0 : index
    %c0_80 = arith.constant 0 : index
    %102 = vector.load %arg19[%c0_78, %c0_79, %c0_80] : memref<1x1x32xf32, #tpu.memory_space<vmem>>, vector<1x1x32xf32>
    %103 = vector.shape_cast %102 : vector<1x1x32xf32> to vector<1x32xf32>
    %cst_81 = arith.constant dense<0.000000e+00> : vector<8xf32>
    %104 = vector.multi_reduction <add>, %99, %cst_81 [1] : vector<8x32xf32> to vector<8xf32>
    %105 = vector.shape_cast %104 : vector<8xf32> to vector<8x1xf32>
    %cst_82 = arith.constant 3.200000e+01 : f32
    %106 = vector.broadcast %cst_82 : f32 to vector<8x1xf32>
    %107 = arith.divf %105, %106 : vector<8x1xf32>
    %108 = vector.broadcast %107 : vector<8x1xf32> to vector<8x32xf32>
    %109 = arith.subf %99, %108 : vector<8x32xf32>
    %110 = arith.mulf %109, %109 : vector<8x32xf32>
    %cst_83 = arith.constant dense<0.000000e+00> : vector<8xf32>
    %111 = vector.multi_reduction <add>, %110, %cst_83 [1] : vector<8x32xf32> to vector<8xf32>
    %112 = vector.shape_cast %111 : vector<8xf32> to vector<8x1xf32>
    %cst_84 = arith.constant 3.200000e+01 : f32
    %113 = vector.broadcast %cst_84 : f32 to vector<8x1xf32>
    %114 = arith.divf %112, %113 : vector<8x1xf32>
    %115 = vector.broadcast %107 : vector<8x1xf32> to vector<8x32xf32>
    %116 = arith.subf %99, %115 : vector<8x32xf32>
    %cst_85 = arith.constant 9.99999974E-6 : f32
    %117 = vector.broadcast %cst_85 : f32 to vector<8x1xf32>
    %118 = arith.addf %114, %117 : vector<8x1xf32>
    %119 = math.rsqrt %118 : vector<8x1xf32>
    %120 = vector.broadcast %119 : vector<8x1xf32> to vector<8x32xf32>
    %121 = arith.mulf %116, %120 : vector<8x32xf32>
    %122 = vector.broadcast %101 : vector<1x32xf32> to vector<8x32xf32>
    %123 = arith.mulf %121, %122 : vector<8x32xf32>
    %124 = vector.broadcast %103 : vector<1x32xf32> to vector<8x32xf32>
    %125 = arith.addf %123, %124 : vector<8x32xf32>
    %c0_86 = arith.constant 0 : index
    %c0_87 = arith.constant 0 : index
    %126 = vector.load %arg22[%c0_86, %c0_87] : memref<8x32xf32, #tpu.memory_space<vmem>>, vector<8x32xf32>
    tpu.vector_store %arg22[%c0_86, %c0_87], %125 {strides = array<i32>} : memref<8x32xf32, #tpu.memory_space<vmem>>, vector<8x32xf32>,
    %c0_88 = arith.constant 0 : index
    %c0_89 = arith.constant 0 : index
    %c0_90 = arith.constant 0 : index
    %c0_91 = arith.constant 0 : index
    %127 = vector.load %arg20[%c0_88, %c0_89, %c0_90, %c0_91] : memref<1x1x8x32xf32, #tpu.memory_space<vmem>>, vector<1x1x8x32xf32>
    %128 = vector.shape_cast %127 : vector<1x1x8x32xf32> to vector<8x32xf32>
    %129 = vector.shape_cast %125 : vector<8x32xf32> to vector<1x1x8x32xf32>
    tpu.vector_store %arg20[%c0_88, %c0_89, %c0_90, %c0_91], %129 {strides = array<i32>} : memref<1x1x8x32xf32, #tpu.memory_space<vmem>>, vector<1x1x8x32xf32>,
    return
  }
  func.func @transform_0(%arg0: i32, %arg1: i32) -> (i32, i32, i32) {
    %c0_i32 = arith.constant 0 : i32
    %c0_i32_0 = arith.constant 0 : i32
    %c0_i32_1 = arith.constant 0 : i32
    return %arg0, %c0_i32, %c0_i32_0 : i32, i32, i32
  }
  func.func @transform_1(%arg0: i32, %arg1: i32) -> (i32, i32, i32) {
    %c0_i32 = arith.constant 0 : i32
    %c0_i32_0 = arith.constant 0 : i32
    %c0_i32_1 = arith.constant 0 : i32
    return %arg0, %c0_i32, %c0_i32_0 : i32, i32, i32
  }
  func.func @transform_2(%arg0: i32, %arg1: i32) -> (i32, i32, i32, i32) {
    %c0_i32 = arith.constant 0 : i32
    %c0_i32_0 = arith.constant 0 : i32
    %c0_i32_1 = arith.constant 0 : i32
    %c0_i32_2 = arith.constant 0 : i32
    return %arg1, %c0_i32, %c0_i32_0, %c0_i32_1 : i32, i32, i32, i32
  }
  func.func @transform_3(%arg0: i32, %arg1: i32) -> (i32, i32, i32, i32) {
    %c0_i32 = arith.constant 0 : i32
    %c0_i32_0 = arith.constant 0 : i32
    %c0_i32_1 = arith.constant 0 : i32
    %c0_i32_2 = arith.constant 0 : i32
    return %arg1, %c0_i32, %c0_i32_0, %c0_i32_1 : i32, i32, i32, i32
  }
  func.func @transform_4(%arg0: i32, %arg1: i32) -> (i32, i32, i32, i32) {
    %c0_i32 = arith.constant 0 : i32
    %c0_i32_0 = arith.constant 0 : i32
    %c0_i32_1 = arith.constant 0 : i32
    %c0_i32_2 = arith.constant 0 : i32
    return %arg1, %c0_i32, %c0_i32_0, %c0_i32_1 : i32, i32, i32, i32
  }
  func.func @transform_5(%arg0: i32, %arg1: i32) -> (i32, i32, i32, i32) {
    %c0_i32 = arith.constant 0 : i32
    %c0_i32_0 = arith.constant 0 : i32
    %c0_i32_1 = arith.constant 0 : i32
    %c0_i32_2 = arith.constant 0 : i32
    return %arg1, %c0_i32, %c0_i32_0, %c0_i32_1 : i32, i32, i32, i32
  }
  func.func @transform_6(%arg0: i32, %arg1: i32) -> (i32, i32, i32, i32) {
    %c0_i32 = arith.constant 0 : i32
    %c0_i32_0 = arith.constant 0 : i32
    %c0_i32_1 = arith.constant 0 : i32
    %c0_i32_2 = arith.constant 0 : i32
    return %arg1, %c0_i32, %c0_i32_0, %c0_i32_1 : i32, i32, i32, i32
  }
  func.func @transform_7(%arg0: i32, %arg1: i32) -> (i32, i32, i32, i32) {
    %c0_i32 = arith.constant 0 : i32
    %c0_i32_0 = arith.constant 0 : i32
    %c0_i32_1 = arith.constant 0 : i32
    %c0_i32_2 = arith.constant 0 : i32
    return %arg1, %c0_i32, %c0_i32_0, %c0_i32_1 : i32, i32, i32, i32
  }
  func.func @transform_8(%arg0: i32, %arg1: i32) -> (i32, i32, i32, i32) {
    %c0_i32 = arith.constant 0 : i32
    %c0_i32_0 = arith.constant 0 : i32
    %c0_i32_1 = arith.constant 0 : i32
    %c0_i32_2 = arith.constant 0 : i32
    return %arg1, %c0_i32, %c0_i32_0, %c0_i32_1 : i32, i32, i32, i32
  }
  func.func @transform_9(%arg0: i32, %arg1: i32) -> (i32, i32, i32) {
    %c0_i32 = arith.constant 0 : i32
    %c0_i32_0 = arith.constant 0 : i32
    %c0_i32_1 = arith.constant 0 : i32
    return %arg1, %c0_i32, %c0_i32_0 : i32, i32, i32
  }
  func.func @transform_10(%arg0: i32, %arg1: i32) -> (i32, i32, i32) {
    %c0_i32 = arith.constant 0 : i32
    %c0_i32_0 = arith.constant 0 : i32
    %c0_i32_1 = arith.constant 0 : i32
    return %arg1, %c0_i32, %c0_i32_0 : i32, i32, i32
  }
  func.func @transform_11(%arg0: i32, %arg1: i32) -> (i32, i32, i32) {
    %c0_i32 = arith.constant 0 : i32
    %c0_i32_0 = arith.constant 0 : i32
    %c0_i32_1 = arith.constant 0 : i32
    return %arg1, %c0_i32, %c0_i32_0 : i32, i32, i32
  }
  func.func @transform_12(%arg0: i32, %arg1: i32) -> (i32, i32, i32) {
    %c0_i32 = arith.constant 0 : i32
    %c0_i32_0 = arith.constant 0 : i32
    %c0_i32_1 = arith.constant 0 : i32
    return %arg1, %c0_i32, %c0_i32_0 : i32, i32, i32
  }
  func.func @transform_13(%arg0: i32, %arg1: i32) -> (i32, i32, i32) {
    %c0_i32 = arith.constant 0 : i32
    %c0_i32_0 = arith.constant 0 : i32
    %c0_i32_1 = arith.constant 0 : i32
    return %arg1, %c0_i32, %c0_i32_0 : i32, i32, i32
  }
  func.func @transform_14(%arg0: i32, %arg1: i32) -> (i32, i32, i32) {
    %c0_i32 = arith.constant 0 : i32
    %c0_i32_0 = arith.constant 0 : i32
    %c0_i32_1 = arith.constant 0 : i32
    return %arg1, %c0_i32, %c0_i32_0 : i32, i32, i32
  }
  func.func @transform_15(%arg0: i32, %arg1: i32) -> (i32, i32, i32) {
    %c0_i32 = arith.constant 0 : i32
    %c0_i32_0 = arith.constant 0 : i32
    %c0_i32_1 = arith.constant 0 : i32
    return %arg1, %c0_i32, %c0_i32_0 : i32, i32, i32
  }
  func.func @transform_16(%arg0: i32, %arg1: i32) -> (i32, i32, i32) {
    %c0_i32 = arith.constant 0 : i32
    %c0_i32_0 = arith.constant 0 : i32
    %c0_i32_1 = arith.constant 0 : i32
    return %arg1, %c0_i32, %c0_i32_0 : i32, i32, i32
  }
  func.func @transform_17(%arg0: i32, %arg1: i32) -> (i32, i32, i32) {
    %c0_i32 = arith.constant 0 : i32
    %c0_i32_0 = arith.constant 0 : i32
    %c0_i32_1 = arith.constant 0 : i32
    return %arg1, %c0_i32, %c0_i32_0 : i32, i32, i32
  }
  func.func @transform_18(%arg0: i32, %arg1: i32) -> (i32, i32, i32, i32) {
    %c0_i32 = arith.constant 0 : i32
    %c0_i32_0 = arith.constant 0 : i32
    %c0_i32_1 = arith.constant 0 : i32
    return %arg1, %arg0, %c0_i32, %c0_i32_0 : i32, i32, i32, i32
  }
  func.func @transform_19(%arg0: i32, %arg1: i32) -> (i32, i32, i32, i32, i32) {
    %c0_i32 = arith.constant 0 : i32
    %c0_i32_0 = arith.constant 0 : i32
    %c0_i32_1 = arith.constant 0 : i32
    %c0_i32_2 = arith.constant 0 : i32
    return %arg1, %arg0, %c0_i32, %c0_i32_0, %c0_i32_1 : i32, i32, i32, i32, i32
  }
}

</mosaic_0001>

<llo_original>
// kernel: tpu_custom_call.1
$region0: #{tpu_custom_call.1}
  #allocation0 [shape = 'u32[]', space=smem, size = 0x4, offset = 0x4, fixed_abs, tag = 'smem constant byte address 0x4 - core index']
  #allocation1 [shape = 'u32[144,128]{1,0:T(1,128)}', space=vmem, size = 0x12000, scoped, tag = 'internal scratch']
  #allocation2 [shape = 'f32[8,32]{1,0:T(8,128)}', space=vmem, size = 0x1000, scoped, tag = 'scratch operand']
  %s0 = inlined_call_operand.vmem [shape: f32[2,1,8], index: 0, kind: input, shape index: {}]
  %s1 = inlined_call_operand.vmem [shape: f32[2,8,32], index: 1, kind: input, shape index: {}]
  %s2 = inlined_call_operand.vmem [shape: f32[2,4,32,8], index: 2, kind: input, shape index: {}]
  %s3 = inlined_call_operand.vmem [shape: f32[2,4,1,8], index: 3, kind: input, shape index: {}]
  %s4 = inlined_call_operand.vmem [shape: f32[2,4,32,8], index: 4, kind: input, shape index: {}]
  %s5 = inlined_call_operand.vmem [shape: f32[2,4,1,8], index: 5, kind: input, shape index: {}]
  %s6 = inlined_call_operand.vmem [shape: f32[2,4,32,8], index: 6, kind: input, shape index: {}]
  %s7 = inlined_call_operand.vmem [shape: f32[2,4,1,8], index: 7, kind: input, shape index: {}]
  %s8 = inlined_call_operand.vmem [shape: f32[2,4,8,32], index: 8, kind: input, shape index: {}]
  %s9 = inlined_call_operand.vmem [shape: f32[2,1,32], index: 9, kind: input, shape index: {}]
  %s10 = inlined_call_operand.vmem [shape: f32[2,1,32], index: 10, kind: input, shape index: {}]
  %s11 = inlined_call_operand.vmem [shape: f32[2,1,32], index: 11, kind: input, shape index: {}]
  %s12 = inlined_call_operand.vmem [shape: f32[2,32,64], index: 12, kind: input, shape index: {}]
  %s13 = inlined_call_operand.vmem [shape: f32[2,1,64], index: 13, kind: input, shape index: {}]
  %s14 = inlined_call_operand.vmem [shape: f32[2,64,32], index: 14, kind: input, shape index: {}]
  %s15 = inlined_call_operand.vmem [shape: f32[2,1,32], index: 15, kind: input, shape index: {}]
  %s16 = inlined_call_operand.vmem [shape: f32[2,1,32], index: 16, kind: input, shape index: {}]
  %s17 = inlined_call_operand.vmem [shape: f32[2,1,32], index: 17, kind: input, shape index: {}]
  %s18 = inlined_call_operand.hbm [shape: f32[2,2,8,32], index: 18, kind: output, shape index: {0}]
  %s19 = inlined_call_operand.hbm [shape: f32[2,2,4,8,8], index: 19, kind: output, shape index: {1}]
  %20 = xla_tuple %s18, %s19
  %s21 = sld [smem:[#allocation0]]
  $region117: #{tpu_custom_call.1} parent=0
    _
  %s23 = ssub.s32 1, %s21
  %s24 = scalar_select 0, %s23, %s21
  $region1: #{tpu_custom_call.1} parent=0
    #allocation3 [shape = 'u8[8192]{0}', space=vmem, size = 0x2000, scoped, tag = 'output window, operand 0']
    #allocation4 [shape = 's32[2]{0}', space=sflag, size = 0x8, scoped, tag = 'scoped memory for tpu_custom_call.1']
    #allocation5 [shape = 'u8[32768]{0}', space=vmem, size = 0x8000, scoped, tag = 'output window, operand 1']
    #allocation6 [shape = 's32[2]{0}', space=sflag, size = 0x8, scoped, tag = 'scoped memory for tpu_custom_call.1']
    %25 = vsyncpa [#allocation4], 0
    %s26 = scalar_lea.sflag [#allocation4], 1
    %27 = vsyncpa %s26, 0
    %28 = vsyncpa [#allocation6], 0
    %s29 = scalar_lea.sflag [#allocation6], 1
    %30 = vsyncpa %s29, 0
    loop: start=0, step=1, limit=6
    $region2: #{tpu_custom_call.1} parent=1 // loop_pre_header
      _
    $region3: #{tpu_custom_call.1} parent=1 // loop_header
      %s32 = sphi 0, %s36
      %p33 = scmp.ge.s32.totalorder %s32, 6
      %s39 = sphi 0, %s51
      %s40 = sphi 0, %s47
      %s41 = sphi 0, %s39
      %s42 = sphi 0, %s40
      %s43 = sphi 0, %s41
      %s44 = sphi 0, %s42
      %s54 = sphi 0, %s56
      %s57 = sphi 0, %s54
      %s58 = sphi 0, %s57
      %s74 = sphi 0, %s58
      %s80 = sphi 0, %s82
      %s83 = sphi 0, %s80
      %s84 = sphi 0, %s83
      %s100 = sphi 0, %s84
      %s106 = sphi 0, %s108
      %s109 = sphi 0, %s106
      %s110 = sphi 0, %s109
      %s126 = sphi 0, %s110
      %s132 = sphi 0, %s134
      %s135 = sphi 0, %s132
      %s136 = sphi 0, %s135
      %s152 = sphi 0, %s136
      %s158 = sphi 0, %s160
      %s161 = sphi 0, %s158
      %s162 = sphi 0, %s161
      %s178 = sphi 0, %s162
      %s184 = sphi 0, %s186
      %s187 = sphi 0, %s184
      %s188 = sphi 0, %s187
      %s204 = sphi 0, %s188
      %s210 = sphi 0, %s212
      %s213 = sphi 0, %s210
      %s214 = sphi 0, %s213
      %s230 = sphi 0, %s214
      %s236 = sphi 0, %s238
      %s239 = sphi 0, %s236
      %s240 = sphi 0, %s239
      %s256 = sphi 0, %s240
      %s262 = sphi 0, %s264
      %s265 = sphi 0, %s262
      %s266 = sphi 0, %s265
      %s282 = sphi 0, %s266
      %s288 = sphi 0, %s290
      %s291 = sphi 0, %s288
      %s292 = sphi 0, %s291
      %s308 = sphi 0, %s292
      %s314 = sphi 0, %s316
      %s317 = sphi 0, %s314
      %s318 = sphi 0, %s317
      %s334 = sphi 0, %s318
      %s340 = sphi 0, %s342
      %s343 = sphi 0, %s340
      %s344 = sphi 0, %s343
      %s360 = sphi 0, %s344
      %s366 = sphi 0, %s368
      %s369 = sphi 0, %s366
      %s370 = sphi 0, %s369
      %s386 = sphi 0, %s370
      %s392 = sphi 0, %s394
      %s395 = sphi 0, %s392
      %s396 = sphi 0, %s395
      %s412 = sphi 0, %s396
      %s418 = sphi 0, %s420
      %s421 = sphi 0, %s418
      %s422 = sphi 0, %s421
      %s438 = sphi 0, %s422
      %s444 = sphi 0, %s446
      %s447 = sphi 0, %s444
      %s448 = sphi 0, %s447
      %s464 = sphi 0, %s448
      %s470 = sphi 0, %s472
      %s473 = sphi 0, %s470
      %s474 = sphi 0, %s473
      %s490 = sphi 0, %s474
      %s496 = sphi 0, %s498
      %s499 = sphi 0, %s496
      %s500 = sphi 0, %s499
      %s516 = sphi 0, %s500
      %s524 = sphi 0, %s526
      %s527 = sphi 0, %s524
      %s528 = sphi 0, %s527
      %s544 = sphi 0, %s528
      %s552 = sphi 0, %s554
      %s555 = sphi 0, %s552
      %s556 = sphi 0, %s555
      %s572 = sphi 0, %s556
    $region4: #{tpu_custom_call.1} parent=1 // loop_header_branch
      %35 = sbr.rel (%p33) target = $region8
    $region5: #{tpu_custom_call.1} parent=1 // loop_body
      %s37 = ssub.s32 %s32, 1
      %s38 = ssub.s32 %s32, 2
      %s45 = sadd.s32 1, %s40
      %p46 = scmp.ge.s32.totalorder %s45, 2
      %s47 = scalar_select %p46, 0, %s45
      %s48 = sadd.s32 1, %s39
      %s49 = scalar_select %p46, %s48, %s39
      %p50 = scmp.ge.s32.totalorder %s49, 2
      %s51 = scalar_select %p50, 0, %s49
      %s52 = ssub.s32 %s39, %s51
      %p53 = scmp.eq.s32.totalorder %s52, 0
      %s55 = sadd.s32 %s54, 1
      %s56 = scalar_select %p53, %s54, %s55
      %p59 = pneg %p53
      %p60 = scmp.eq.s32.totalorder %s32, 3
      %p61 = por %p59, %p60
      %p62 = scmp.ne.s32.totalorder %s54, %s57
      %p63 = scmp.eq.s32.totalorder %s32, 0
      %p64 = por %p62, %p63
      %p65 = scmp.ne.s32.totalorder %s54, %s57
      %p66 = scmp.eq.s32.totalorder %s37, 3
      %p67 = por %p65, %p66
      %p68 = scmp.ne.s32.totalorder %s57, %s58
      %p69 = scmp.eq.s32.totalorder %s37, 0
      %p70 = por %p68, %p69
      %p71 = scmp.ne.s32.totalorder %s57, %s58
      %p72 = scmp.eq.s32.totalorder %s38, 3
      %p73 = por %p71, %p72
      %p75 = scmp.ne.s32.totalorder %s58, %s74
      %p76 = scmp.eq.s32.totalorder %s38, 0
      %p77 = por %p75, %p76
      %s78 = ssub.s32 %s39, %s51
      %p79 = scmp.eq.s32.totalorder %s78, 0
      %s81 = sadd.s32 %s80, 1
      %s82 = scalar_select %p79, %s80, %s81
      %p85 = pneg %p79
      %p86 = scmp.eq.s32.totalorder %s32, 3
      %p87 = por %p85, %p86
      %p88 = scmp.ne.s32.totalorder %s80, %s83
      %p89 = scmp.eq.s32.totalorder %s32, 0
      %p90 = por %p88, %p89
      %p91 = scmp.ne.s32.totalorder %s80, %s83
      %p92 = scmp.eq.s32.totalorder %s37, 3
      %p93 = por %p91, %p92
      %p94 = scmp.ne.s32.totalorder %s83, %s84
      %p95 = scmp.eq.s32.totalorder %s37, 0
      %p96 = por %p94, %p95
      %p97 = scmp.ne.s32.totalorder %s83, %s84
      %p98 = scmp.eq.s32.totalorder %s38, 3
      %p99 = por %p97, %p98
      %p101 = scmp.ne.s32.totalorder %s84, %s100
      %p102 = scmp.eq.s32.totalorder %s38, 0
      %p103 = por %p101, %p102
      %s104 = ssub.s32 %s40, %s47
      %p105 = scmp.eq.s32.totalorder %s104, 0
      %s107 = sadd.s32 %s106, 1
      %s108 = scalar_select %p105, %s106, %s107
      %p111 = pneg %p105
      %p112 = scmp.eq.s32.totalorder %s32, 3
      %p113 = por %p111, %p112
      %p114 = scmp.ne.s32.totalorder %s106, %s109
      %p115 = scmp.eq.s32.totalorder %s32, 0
      %p116 = por %p114, %p115
      %p117 = scmp.ne.s32.totalorder %s106, %s109
      %p118 = scmp.eq.s32.totalorder %s37, 3
      %p119 = por %p117, %p118
      %p120 = scmp.ne.s32.totalorder %s109, %s110
      %p121 = scmp.eq.s32.totalorder %s37, 0
      %p122 = por %p120, %p121
      %p123 = scmp.ne.s32.totalorder %s109, %s110
      %p124 = scmp.eq.s32.totalorder %s38, 3
      %p125 = por %p123, %p124
      %p127 = scmp.ne.s32.totalorder %s110, %s126
      %p128 = scmp.eq.s32.totalorder %s38, 0
      %p129 = por %p127, %p128
      %s130 = ssub.s32 %s40, %s47
      %p131 = scmp.eq.s32.totalorder %s130, 0
      %s133 = sadd.s32 %s132, 1
      %s134 = scalar_select %p131, %s132, %s133
      %p137 = pneg %p131
      %p138 = scmp.eq.s32.totalorder %s32, 3
      %p139 = por %p137, %p138
      %p140 = scmp.ne.s32.totalorder %s132, %s135
      %p141 = scmp.eq.s32.totalorder %s32, 0
      %p142 = por %p140, %p141
      %p143 = scmp.ne.s32.totalorder %s132, %s135
      %p144 = scmp.eq.s32.totalorder %s37, 3
      %p145 = por %p143, %p144
      %p146 = scmp.ne.s32.totalorder %s135, %s136
      %p147 = scmp.eq.s32.totalorder %s37, 0
      %p148 = por %p146, %p147
      %p149 = scmp.ne.s32.totalorder %s135, %s136
      %p150 = scmp.eq.s32.totalorder %s38, 3
      %p151 = por %p149, %p150
      %p153 = scmp.ne.s32.totalorder %s136, %s152
      %p154 = scmp.eq.s32.totalorder %s38, 0
      %p155 = por %p153, %p154
      %s156 = ssub.s32 %s40, %s47
      %p157 = scmp.eq.s32.totalorder %s156, 0
      %s159 = sadd.s32 %s158, 1
      %s160 = scalar_select %p157, %s158, %s159
      %p163 = pneg %p157
      %p164 = scmp.eq.s32.totalorder %s32, 3
      %p165 = por %p163, %p164
      %p166 = scmp.ne.s32.totalorder %s158, %s161
      %p167 = scmp.eq.s32.totalorder %s32, 0
      %p168 = por %p166, %p167
      %p169 = scmp.ne.s32.totalorder %s158, %s161
      %p170 = scmp.eq.s32.totalorder %s37, 3
      %p171 = por %p169, %p170
      %p172 = scmp.ne.s32.totalorder %s161, %s162
      %p173 = scmp.eq.s32.totalorder %s37, 0
      %p174 = por %p172, %p173
      %p175 = scmp.ne.s32.totalorder %s161, %s162
      %p176 = scmp.eq.s32.totalorder %s38, 3
      %p177 = por %p175, %p176
      %p179 = scmp.ne.s32.totalorder %s162, %s178
      %p180 = scmp.eq.s32.totalorder %s38, 0
      %p181 = por %p179, %p180
      %s182 = ssub.s32 %s40, %s47
      %p183 = scmp.eq.s32.totalorder %s182, 0
      %s185 = sadd.s32 %s184, 1
      %s186 = scalar_select %p183, %s184, %s185
      %p189 = pneg %p183
      %p190 = scmp.eq.s32.totalorder %s32, 3
      %p191 = por %p189, %p190
      %p192 = scmp.ne.s32.totalorder %s184, %s187
      %p193 = scmp.eq.s32.totalorder %s32, 0
      %p194 = por %p192, %p193
      %p195 = scmp.ne.s32.totalorder %s184, %s187
      %p196 = scmp.eq.s32.totalorder %s37, 3
      %p197 = por %p195, %p196
      %p198 = scmp.ne.s32.totalorder %s187, %s188
      %p199 = scmp.eq.s32.totalorder %s37, 0
      %p200 = por %p198, %p199
      %p201 = scmp.ne.s32.totalorder %s187, %s188
      %p202 = scmp.eq.s32.totalorder %s38, 3
      %p203 = por %p201, %p202
      %p205 = scmp.ne.s32.totalorder %s188, %s204
      %p206 = scmp.eq.s32.totalorder %s38, 0
      %p207 = por %p205, %p206
      %s208 = ssub.s32 %s40, %s47
      %p209 = scmp.eq.s32.totalorder %s208, 0
      %s211 = sadd.s32 %s210, 1
      %s212 = scalar_select %p209, %s210, %s211
      %p215 = pneg %p209
      %p216 = scmp.eq.s32.totalorder %s32, 3
      %p217 = por %p215, %p216
      %p218 = scmp.ne.s32.totalorder %s210, %s213
      %p219 = scmp.eq.s32.totalorder %s32, 0
      %p220 = por %p218, %p219
      %p221 = scmp.ne.s32.totalorder %s210, %s213
      %p222 = scmp.eq.s32.totalorder %s37, 3
      %p223 = por %p221, %p222
      %p224 = scmp.ne.s32.totalorder %s213, %s214
      %p225 = scmp.eq.s32.totalorder %s37, 0
      %p226 = por %p224, %p225
      %p227 = scmp.ne.s32.totalorder %s213, %s214
      %p228 = scmp.eq.s32.totalorder %s38, 3
      %p229 = por %p227, %p228
      %p231 = scmp.ne.s32.totalorder %s214, %s230
      %p232 = scmp.eq.s32.totalorder %s38, 0
      %p233 = por %p231, %p232
      %s234 = ssub.s32 %s40, %s47
      %p235 = scmp.eq.s32.totalorder %s234, 0
      %s237 = sadd.s32 %s236, 1
      %s238 = scalar_select %p235, %s236, %s237
      %p241 = pneg %p235
      %p242 = scmp.eq.s32.totalorder %s32, 3
      %p243 = por %p241, %p242
      %p244 = scmp.ne.s32.totalorder %s236, %s239
      %p245 = scmp.eq.s32.totalorder %s32, 0
      %p246 = por %p244, %p245
      %p247 = scmp.ne.s32.totalorder %s236, %s239
      %p248 = scmp.eq.s32.totalorder %s37, 3
      %p249 = por %p247, %p248
      %p250 = scmp.ne.s32.totalorder %s239, %s240
      %p251 = scmp.eq.s32.totalorder %s37, 0
      %p252 = por %p250, %p251
      %p253 = scmp.ne.s32.totalorder %s239, %s240
      %p254 = scmp.eq.s32.totalorder %s38, 3
      %p255 = por %p253, %p254
      %p257 = scmp.ne.s32.totalorder %s240, %s256
      %p258 = scmp.eq.s32.totalorder %s38, 0
      %p259 = por %p257, %p258
      %s260 = ssub.s32 %s40, %s47
      %p261 = scmp.eq.s32.totalorder %s260, 0
      %s263 = sadd.s32 %s262, 1
      %s264 = scalar_select %p261, %s262, %s263
      %p267 = pneg %p261
      %p268 = scmp.eq.s32.totalorder %s32, 3
      %p269 = por %p267, %p268
      %p270 = scmp.ne.s32.totalorder %s262, %s265
      %p271 = scmp.eq.s32.totalorder %s32, 0
      %p272 = por %p270, %p271
      %p273 = scmp.ne.s32.totalorder %s262, %s265
      %p274 = scmp.eq.s32.totalorder %s37, 3
      %p275 = por %p273, %p274
      %p276 = scmp.ne.s32.totalorder %s265, %s266
      %p277 = scmp.eq.s32.totalorder %s37, 0
      %p278 = por %p276, %p277
      %p279 = scmp.ne.s32.totalorder %s265, %s266
      %p280 = scmp.eq.s32.totalorder %s38, 3
      %p281 = por %p279, %p280
      %p283 = scmp.ne.s32.totalorder %s266, %s282
      %p284 = scmp.eq.s32.totalorder %s38, 0
      %p285 = por %p283, %p284
      %s286 = ssub.s32 %s40, %s47
      %p287 = scmp.eq.s32.totalorder %s286, 0
      %s289 = sadd.s32 %s288, 1
      %s290 = scalar_select %p287, %s288, %s289
      %p293 = pneg %p287
      %p294 = scmp.eq.s32.totalorder %s32, 3
      %p295 = por %p293, %p294
      %p296 = scmp.ne.s32.totalorder %s288, %s291
      %p297 = scmp.eq.s32.totalorder %s32, 0
      %p298 = por %p296, %p297
      %p299 = scmp.ne.s32.totalorder %s288, %s291
      %p300 = scmp.eq.s32.totalorder %s37, 3
      %p301 = por %p299, %p300
      %p302 = scmp.ne.s32.totalorder %s291, %s292
      %p303 = scmp.eq.s32.totalorder %s37, 0
      %p304 = por %p302, %p303
      %p305 = scmp.ne.s32.totalorder %s291, %s292
      %p306 = scmp.eq.s32.totalorder %s38, 3
      %p307 = por %p305, %p306
      %p309 = scmp.ne.s32.totalorder %s292, %s308
      %p310 = scmp.eq.s32.totalorder %s38, 0
      %p311 = por %p309, %p310
      %s312 = ssub.s32 %s40, %s47
      %p313 = scmp.eq.s32.totalorder %s312, 0
      %s315 = sadd.s32 %s314, 1
      %s316 = scalar_select %p313, %s314, %s315
      %p319 = pneg %p313
      %p320 = scmp.eq.s32.totalorder %s32, 3
      %p321 = por %p319, %p320
      %p322 = scmp.ne.s32.totalorder %s314, %s317
      %p323 = scmp.eq.s32.totalorder %s32, 0
      %p324 = por %p322, %p323
      %p325 = scmp.ne.s32.totalorder %s314, %s317
      %p326 = scmp.eq.s32.totalorder %s37, 3
      %p327 = por %p325, %p326
      %p328 = scmp.ne.s32.totalorder %s317, %s318
      %p329 = scmp.eq.s32.totalorder %s37, 0
      %p330 = por %p328, %p329
      %p331 = scmp.ne.s32.totalorder %s317, %s318
      %p332 = scmp.eq.s32.totalorder %s38, 3
      %p333 = por %p331, %p332
      %p335 = scmp.ne.s32.totalorder %s318, %s334
      %p336 = scmp.eq.s32.totalorder %s38, 0
      %p337 = por %p335, %p336
      %s338 = ssub.s32 %s40, %s47
      %p339 = scmp.eq.s32.totalorder %s338, 0
      %s341 = sadd.s32 %s340, 1
      %s342 = scalar_select %p339, %s340, %s341
      %p345 = pneg %p339
      %p346 = scmp.eq.s32.totalorder %s32, 3
      %p347 = por %p345, %p346
      %p348 = scmp.ne.s32.totalorder %s340, %s343
      %p349 = scmp.eq.s32.totalorder %s32, 0
      %p350 = por %p348, %p349
      %p351 = scmp.ne.s32.totalorder %s340, %s343
      %p352 = scmp.eq.s32.totalorder %s37, 3
      %p353 = por %p351, %p352
      %p354 = scmp.ne.s32.totalorder %s343, %s344
      %p355 = scmp.eq.s32.totalorder %s37, 0
      %p356 = por %p354, %p355
      %p357 = scmp.ne.s32.totalorder %s343, %s344
      %p358 = scmp.eq.s32.totalorder %s38, 3
      %p359 = por %p357, %p358
      %p361 = scmp.ne.s32.totalorder %s344, %s360
      %p362 = scmp.eq.s32.totalorder %s38, 0
      %p363 = por %p361, %p362
      %s364 = ssub.s32 %s40, %s47
      %p365 = scmp.eq.s32.totalorder %s364, 0
      %s367 = sadd.s32 %s366, 1
      %s368 = scalar_select %p365, %s366, %s367
      %p371 = pneg %p365
      %p372 = scmp.eq.s32.totalorder %s32, 3
      %p373 = por %p371, %p372
      %p374 = scmp.ne.s32.totalorder %s366, %s369
      %p375 = scmp.eq.s32.totalorder %s32, 0
      %p376 = por %p374, %p375
      %p377 = scmp.ne.s32.totalorder %s366, %s369
      %p378 = scmp.eq.s32.totalorder %s37, 3
      %p379 = por %p377, %p378
      %p380 = scmp.ne.s32.totalorder %s369, %s370
      %p381 = scmp.eq.s32.totalorder %s37, 0
      %p382 = por %p380, %p381
      %p383 = scmp.ne.s32.totalorder %s369, %s370
      %p384 = scmp.eq.s32.totalorder %s38, 3
      %p385 = por %p383, %p384
      %p387 = scmp.ne.s32.totalorder %s370, %s386
      %p388 = scmp.eq.s32.totalorder %s38, 0
      %p389 = por %p387, %p388
      %s390 = ssub.s32 %s40, %s47
      %p391 = scmp.eq.s32.totalorder %s390, 0
      %s393 = sadd.s32 %s392, 1
      %s394 = scalar_select %p391, %s392, %s393
      %p397 = pneg %p391
      %p398 = scmp.eq.s32.totalorder %s32, 3
      %p399 = por %p397, %p398
      %p400 = scmp.ne.s32.totalorder %s392, %s395
      %p401 = scmp.eq.s32.totalorder %s32, 0
      %p402 = por %p400, %p401
      %p403 = scmp.ne.s32.totalorder %s392, %s395
      %p404 = scmp.eq.s32.totalorder %s37, 3
      %p405 = por %p403, %p404
      %p406 = scmp.ne.s32.totalorder %s395, %s396
      %p407 = scmp.eq.s32.totalorder %s37, 0
      %p408 = por %p406, %p407
      %p409 = scmp.ne.s32.totalorder %s395, %s396
      %p410 = scmp.eq.s32.totalorder %s38, 3
      %p411 = por %p409, %p410
      %p413 = scmp.ne.s32.totalorder %s396, %s412
      %p414 = scmp.eq.s32.totalorder %s38, 0
      %p415 = por %p413, %p414
      %s416 = ssub.s32 %s40, %s47
      %p417 = scmp.eq.s32.totalorder %s416, 0
      %s419 = sadd.s32 %s418, 1
      %s420 = scalar_select %p417, %s418, %s419
      %p423 = pneg %p417
      %p424 = scmp.eq.s32.totalorder %s32, 3
      %p425 = por %p423, %p424
      %p426 = scmp.ne.s32.totalorder %s418, %s421
      %p427 = scmp.eq.s32.totalorder %s32, 0
      %p428 = por %p426, %p427
      %p429 = scmp.ne.s32.totalorder %s418, %s421
      %p430 = scmp.eq.s32.totalorder %s37, 3
      %p431 = por %p429, %p430
      %p432 = scmp.ne.s32.totalorder %s421, %s422
      %p433 = scmp.eq.s32.totalorder %s37, 0
      %p434 = por %p432, %p433
      %p435 = scmp.ne.s32.totalorder %s421, %s422
      %p436 = scmp.eq.s32.totalorder %s38, 3
      %p437 = por %p435, %p436
      %p439 = scmp.ne.s32.totalorder %s422, %s438
      %p440 = scmp.eq.s32.totalorder %s38, 0
      %p441 = por %p439, %p440
      %s442 = ssub.s32 %s40, %s47
      %p443 = scmp.eq.s32.totalorder %s442, 0
      %s445 = sadd.s32 %s444, 1
      %s446 = scalar_select %p443, %s444, %s445
      %p449 = pneg %p443
      %p450 = scmp.eq.s32.totalorder %s32, 3
      %p451 = por %p449, %p450
      %p452 = scmp.ne.s32.totalorder %s444, %s447
      %p453 = scmp.eq.s32.totalorder %s32, 0
      %p454 = por %p452, %p453
      %p455 = scmp.ne.s32.totalorder %s444, %s447
      %p456 = scmp.eq.s32.totalorder %s37, 3
      %p457 = por %p455, %p456
      %p458 = scmp.ne.s32.totalorder %s447, %s448
      %p459 = scmp.eq.s32.totalorder %s37, 0
      %p460 = por %p458, %p459
      %p461 = scmp.ne.s32.totalorder %s447, %s448
      %p462 = scmp.eq.s32.totalorder %s38, 3
      %p463 = por %p461, %p462
      %p465 = scmp.ne.s32.totalorder %s448, %s464
      %p466 = scmp.eq.s32.totalorder %s38, 0
      %p467 = por %p465, %p466
      %s468 = ssub.s32 %s40, %s47
      %p469 = scmp.eq.s32.totalorder %s468, 0
      %s471 = sadd.s32 %s470, 1
      %s472 = scalar_select %p469, %s470, %s471
      %p475 = pneg %p469
      %p476 = scmp.eq.s32.totalorder %s32, 3
      %p477 = por %p475, %p476
      %p478 = scmp.ne.s32.totalorder %s470, %s473
      %p479 = scmp.eq.s32.totalorder %s32, 0
      %p480 = por %p478, %p479
      %p481 = scmp.ne.s32.totalorder %s470, %s473
      %p482 = scmp.eq.s32.totalorder %s37, 3
      %p483 = por %p481, %p482
      %p484 = scmp.ne.s32.totalorder %s473, %s474
      %p485 = scmp.eq.s32.totalorder %s37, 0
      %p486 = por %p484, %p485
      %p487 = scmp.ne.s32.totalorder %s473, %s474
      %p488 = scmp.eq.s32.totalorder %s38, 3
      %p489 = por %p487, %p488
      %p491 = scmp.ne.s32.totalorder %s474, %s490
      %p492 = scmp.eq.s32.totalorder %s38, 0
      %p493 = por %p491, %p492
      %s494 = ssub.s32 %s40, %s47
      %p495 = scmp.eq.s32.totalorder %s494, 0
      %s497 = sadd.s32 %s496, 1
      %s498 = scalar_select %p495, %s496, %s497
      %p501 = pneg %p495
      %p502 = scmp.eq.s32.totalorder %s32, 3
      %p503 = por %p501, %p502
      %p504 = scmp.ne.s32.totalorder %s496, %s499
      %p505 = scmp.eq.s32.totalorder %s32, 0
      %p506 = por %p504, %p505
      %p507 = scmp.ne.s32.totalorder %s496, %s499
      %p508 = scmp.eq.s32.totalorder %s37, 3
      %p509 = por %p507, %p508
      %p510 = scmp.ne.s32.totalorder %s499, %s500
      %p511 = scmp.eq.s32.totalorder %s37, 0
      %p512 = por %p510, %p511
      %p513 = scmp.ne.s32.totalorder %s499, %s500
      %p514 = scmp.eq.s32.totalorder %s38, 3
      %p515 = por %p513, %p514
      %p517 = scmp.ne.s32.totalorder %s500, %s516
      %p518 = scmp.eq.s32.totalorder %s38, 0
      %p519 = por %p517, %p518
      %s520 = ssub.s32 %s40, %s47
      %s521 = ssub.s32 %s39, %s51
      %s522 = sor.u32 %s520, %s521
      %p523 = scmp.eq.s32.totalorder %s522, 0
      %s525 = sadd.s32 %s524, 1
      %s526 = scalar_select %p523, %s524, %s525
      %p529 = pneg %p523
      %p530 = scmp.eq.s32.totalorder %s32, 3
      %p531 = por %p529, %p530
      %p532 = scmp.ne.s32.totalorder %s524, %s527
      %p533 = scmp.eq.s32.totalorder %s32, 0
      %p534 = por %p532, %p533
      %p535 = scmp.ne.s32.totalorder %s524, %s527
      %p536 = scmp.eq.s32.totalorder %s37, 3
      %p537 = por %p535, %p536
      %p538 = scmp.ne.s32.totalorder %s527, %s528
      %p539 = scmp.eq.s32.totalorder %s37, 0
      %p540 = por %p538, %p539
      %p541 = scmp.ne.s32.totalorder %s527, %s528
      %p542 = scmp.eq.s32.totalorder %s38, 3
      %p543 = por %p541, %p542
      %p545 = scmp.ne.s32.totalorder %s528, %s544
      %p546 = scmp.eq.s32.totalorder %s38, 0
      %p547 = por %p545, %p546
      %s548 = ssub.s32 %s40, %s47
      %s549 = ssub.s32 %s39, %s51
      %s550 = sor.u32 %s548, %s549
      %p551 = scmp.eq.s32.totalorder %s550, 0
      %s553 = sadd.s32 %s552, 1
      %s554 = scalar_select %p551, %s552, %s553
      %p557 = pneg %p551
      %p558 = scmp.eq.s32.totalorder %s32, 3
      %p559 = por %p557, %p558
      %p560 = scmp.ne.s32.totalorder %s552, %s555
      %p561 = scmp.eq.s32.totalorder %s32, 0
      %p562 = por %p560, %p561
      %p563 = scmp.ne.s32.totalorder %s552, %s555
      %p564 = scmp.eq.s32.totalorder %s37, 3
      %p565 = por %p563, %p564
      %p566 = scmp.ne.s32.totalorder %s555, %s556
      %p567 = scmp.eq.s32.totalorder %s37, 0
      %p568 = por %p566, %p567
      %p569 = scmp.ne.s32.totalorder %s555, %s556
      %p570 = scmp.eq.s32.totalorder %s38, 3
      %p571 = por %p569, %p570
      %p573 = scmp.ne.s32.totalorder %s556, %s572
      %p574 = scmp.eq.s32.totalorder %s38, 0
      %p575 = por %p573, %p574
      %p576 = scmp.le.s32.totalorder 1, %s32
      %p577 = scmp.lt.s32.totalorder %s32, 5
      %p578 = pnand %p576, %p577
      %p579 = pneg %p578
      // Predicated region
      $region9: #{tpu_custom_call.1} parent=5 // pred_check
        _
      $region10: #{tpu_custom_call.1} parent=5 // pred_check_branch
        %581 = sbr.rel (%p578) target = $region12
      $region11: #{tpu_custom_call.1} parent=5 // pred_region
        %s582 = ssub.s32 %s32, 1
      $region12: #{tpu_custom_call.1} parent=5 // pred_fallthru
        _
      %p583 = scmp.lt.s32.totalorder %s32, 4
      // Predicated region
      $region13: #{tpu_custom_call.1} parent=5 // pred_check
        %p584 = pneg %p583
      $region14: #{tpu_custom_call.1} parent=5 // pred_check_branch
        %586 = sbr.rel (%p584) target = $region16
      $region15: #{tpu_custom_call.1} parent=5 // pred_region
        // Predicated region
        $region17: #{tpu_custom_call.1} parent=15 // pred_check
          %p587 = pneg %p64
        $region18: #{tpu_custom_call.1} parent=15 // pred_check_branch
          %589 = sbr.rel (%p587) target = $region20
        $region19: #{tpu_custom_call.1} parent=15 // pred_region
          %p590 = scmp.lt.s32.totalorder %s39, 1
          %s591 = scalar_select %p590, %s39, 1
          %s592 = scalar_lea.vmem %s0, %s591
        $region20: #{tpu_custom_call.1} parent=15 // pred_fallthru
          _
        // Predicated region
        $region21: #{tpu_custom_call.1} parent=15 // pred_check
          %p593 = pneg %p90
        $region22: #{tpu_custom_call.1} parent=15 // pred_check_branch
          %595 = sbr.rel (%p593) target = $region24
        $region23: #{tpu_custom_call.1} parent=15 // pred_region
          %p596 = scmp.lt.s32.totalorder %s39, 1
          %s597 = scalar_select %p596, %s39, 1
          %s598 = smul.addr %s597, 8
          %s599 = scalar_lea.vmem %s1, %s598
        $region24: #{tpu_custom_call.1} parent=15 // pred_fallthru
          _
        // Predicated region
        $region25: #{tpu_custom_call.1} parent=15 // pred_check
          %p600 = pneg %p116
        $region26: #{tpu_custom_call.1} parent=15 // pred_check_branch
          %602 = sbr.rel (%p600) target = $region28
        $region27: #{tpu_custom_call.1} parent=15 // pred_region
          %p603 = scmp.lt.s32.totalorder %s40, 1
          %s604 = scalar_select %p603, %s40, 1
          %s605 = smul.addr %s604, 16
          %s606 = smul.addr %s605, 8
          %s607 = scalar_lea.vmem %s2, %s606
        $region28: #{tpu_custom_call.1} parent=15 // pred_fallthru
          _
        // Predicated region
        $region29: #{tpu_custom_call.1} parent=15 // pred_check
          %p608 = pneg %p142
        $region30: #{tpu_custom_call.1} parent=15 // pred_check_branch
          %610 = sbr.rel (%p608) target = $region32
        $region31: #{tpu_custom_call.1} parent=15 // pred_region
          %p611 = scmp.lt.s32.totalorder %s40, 1
          %s612 = scalar_select %p611, %s40, 1
          %s613 = smul.addr %s612, 4
          %s614 = scalar_lea.vmem %s3, %s613
        $region32: #{tpu_custom_call.1} parent=15 // pred_fallthru
          _
        // Predicated region
        $region33: #{tpu_custom_call.1} parent=15 // pred_check
          %p615 = pneg %p168
        $region34: #{tpu_custom_call.1} parent=15 // pred_check_branch
          %617 = sbr.rel (%p615) target = $region36
        $region35: #{tpu_custom_call.1} parent=15 // pred_region
          %p618 = scmp.lt.s32.totalorder %s40, 1
          %s619 = scalar_select %p618, %s40, 1
          %s620 = smul.addr %s619, 16
          %s621 = smul.addr %s620, 8
          %s622 = scalar_lea.vmem %s4, %s621
        $region36: #{tpu_custom_call.1} parent=15 // pred_fallthru
          _
        // Predicated region
        $region37: #{tpu_custom_call.1} parent=15 // pred_check
          %p623 = pneg %p194
        $region38: #{tpu_custom_call.1} parent=15 // pred_check_branch
          %625 = sbr.rel (%p623) target = $region40
        $region39: #{tpu_custom_call.1} parent=15 // pred_region
          %p626 = scmp.lt.s32.totalorder %s40, 1
          %s627 = scalar_select %p626, %s40, 1
          %s628 = smul.addr %s627, 4
          %s629 = scalar_lea.vmem %s5, %s628
        $region40: #{tpu_custom_call.1} parent=15 // pred_fallthru
          _
        // Predicated region
        $region41: #{tpu_custom_call.1} parent=15 // pred_check
          %p630 = pneg %p220
        $region42: #{tpu_custom_call.1} parent=15 // pred_check_branch
          %632 = sbr.rel (%p630) target = $region44
        $region43: #{tpu_custom_call.1} parent=15 // pred_region
          %p633 = scmp.lt.s32.totalorder %s40, 1
          %s634 = scalar_select %p633, %s40, 1
          %s635 = smul.addr %s634, 16
          %s636 = smul.addr %s635, 8
          %s637 = scalar_lea.vmem %s6, %s636
        $region44: #{tpu_custom_call.1} parent=15 // pred_fallthru
          _
        // Predicated region
        $region45: #{tpu_custom_call.1} parent=15 // pred_check
          %p638 = pneg %p246
        $region46: #{tpu_custom_call.1} parent=15 // pred_check_branch
          %640 = sbr.rel (%p638) target = $region48
        $region47: #{tpu_custom_call.1} parent=15 // pred_region
          %p641 = scmp.lt.s32.totalorder %s40, 1
          %s642 = scalar_select %p641, %s40, 1
          %s643 = smul.addr %s642, 4
          %s644 = scalar_lea.vmem %s7, %s643
        $region48: #{tpu_custom_call.1} parent=15 // pred_fallthru
          _
        // Predicated region
        $region49: #{tpu_custom_call.1} parent=15 // pred_check
          %p645 = pneg %p272
        $region50: #{tpu_custom_call.1} parent=15 // pred_check_branch
          %647 = sbr.rel (%p645) target = $region52
        $region51: #{tpu_custom_call.1} parent=15 // pred_region
          %p648 = scmp.lt.s32.totalorder %s40, 1
          %s649 = scalar_select %p648, %s40, 1
          %s650 = smul.addr %s649, 4
          %s651 = smul.addr %s650, 8
          %s652 = scalar_lea.vmem %s8, %s651
        $region52: #{tpu_custom_call.1} parent=15 // pred_fallthru
          _
        // Predicated region
        $region53: #{tpu_custom_call.1} parent=15 // pred_check
          %p653 = pneg %p298
        $region54: #{tpu_custom_call.1} parent=15 // pred_check_branch
          %655 = sbr.rel (%p653) target = $region56
        $region55: #{tpu_custom_call.1} parent=15 // pred_region
          %p656 = scmp.lt.s32.totalorder %s40, 1
          %s657 = scalar_select %p656, %s40, 1
          %s658 = scalar_lea.vmem %s9, %s657
        $region56: #{tpu_custom_call.1} parent=15 // pred_fallthru
          _
        // Predicated region
        $region57: #{tpu_custom_call.1} parent=15 // pred_check
          %p659 = pneg %p324
        $region58: #{tpu_custom_call.1} parent=15 // pred_check_branch
          %661 = sbr.rel (%p659) target = $region60
        $region59: #{tpu_custom_call.1} parent=15 // pred_region
          %p662 = scmp.lt.s32.totalorder %s40, 1
          %s663 = scalar_select %p662, %s40, 1
          %s664 = scalar_lea.vmem %s10, %s663
        $region60: #{tpu_custom_call.1} parent=15 // pred_fallthru
          _
        // Predicated region
        $region61: #{tpu_custom_call.1} parent=15 // pred_check
          %p665 = pneg %p350
        $region62: #{tpu_custom_call.1} parent=15 // pred_check_branch
          %667 = sbr.rel (%p665) target = $region64
        $region63: #{tpu_custom_call.1} parent=15 // pred_region
          %p668 = scmp.lt.s32.totalorder %s40, 1
          %s669 = scalar_select %p668, %s40, 1
          %s670 = scalar_lea.vmem %s11, %s669
        $region64: #{tpu_custom_call.1} parent=15 // pred_fallthru
          _
        // Predicated region
        $region65: #{tpu_custom_call.1} parent=15 // pred_check
          %p671 = pneg %p376
        $region66: #{tpu_custom_call.1} parent=15 // pred_check_branch
          %673 = sbr.rel (%p671) target = $region68
        $region67: #{tpu_custom_call.1} parent=15 // pred_region
          %p674 = scmp.lt.s32.totalorder %s40, 1
          %s675 = scalar_select %p674, %s40, 1
          %s676 = smul.addr %s675, 4
          %s677 = smul.addr %s676, 8
          %s678 = scalar_lea.vmem %s12, %s677
        $region68: #{tpu_custom_call.1} parent=15 // pred_fallthru
          _
        // Predicated region
        $region69: #{tpu_custom_call.1} parent=15 // pred_check
          %p679 = pneg %p402
        $region70: #{tpu_custom_call.1} parent=15 // pred_check_branch
          %681 = sbr.rel (%p679) target = $region72
        $region71: #{tpu_custom_call.1} parent=15 // pred_region
          %p682 = scmp.lt.s32.totalorder %s40, 1
          %s683 = scalar_select %p682, %s40, 1
          %s684 = scalar_lea.vmem %s13, %s683
        $region72: #{tpu_custom_call.1} parent=15 // pred_fallthru
          _
        // Predicated region
        $region73: #{tpu_custom_call.1} parent=15 // pred_check
          %p685 = pneg %p428
        $region74: #{tpu_custom_call.1} parent=15 // pred_check_branch
          %687 = sbr.rel (%p685) target = $region76
        $region75: #{tpu_custom_call.1} parent=15 // pred_region
          %p688 = scmp.lt.s32.totalorder %s40, 1
          %s689 = scalar_select %p688, %s40, 1
          %s690 = smul.addr %s689, 8
          %s691 = smul.addr %s690, 8
          %s692 = scalar_lea.vmem %s14, %s691
        $region76: #{tpu_custom_call.1} parent=15 // pred_fallthru
          _
        // Predicated region
        $region77: #{tpu_custom_call.1} parent=15 // pred_check
          %p693 = pneg %p454
        $region78: #{tpu_custom_call.1} parent=15 // pred_check_branch
          %695 = sbr.rel (%p693) target = $region80
        $region79: #{tpu_custom_call.1} parent=15 // pred_region
          %p696 = scmp.lt.s32.totalorder %s40, 1
          %s697 = scalar_select %p696, %s40, 1
          %s698 = scalar_lea.vmem %s15, %s697
        $region80: #{tpu_custom_call.1} parent=15 // pred_fallthru
          _
        // Predicated region
        $region81: #{tpu_custom_call.1} parent=15 // pred_check
          %p699 = pneg %p480
        $region82: #{tpu_custom_call.1} parent=15 // pred_check_branch
          %701 = sbr.rel (%p699) target = $region84
        $region83: #{tpu_custom_call.1} parent=15 // pred_region
          %p702 = scmp.lt.s32.totalorder %s40, 1
          %s703 = scalar_select %p702, %s40, 1
          %s704 = scalar_lea.vmem %s16, %s703
        $region84: #{tpu_custom_call.1} parent=15 // pred_fallthru
          _
        // Predicated region
        $region85: #{tpu_custom_call.1} parent=15 // pred_check
          %p705 = pneg %p506
        $region86: #{tpu_custom_call.1} parent=15 // pred_check_branch
          %707 = sbr.rel (%p705) target = $region88
        $region87: #{tpu_custom_call.1} parent=15 // pred_region
          %p708 = scmp.lt.s32.totalorder %s40, 1
          %s709 = scalar_select %p708, %s40, 1
          %s710 = scalar_lea.vmem %s17, %s709
        $region88: #{tpu_custom_call.1} parent=15 // pred_fallthru
          _
      $region16: #{tpu_custom_call.1} parent=5 // pred_fallthru
        _
      %p711 = scmp.le.s32.totalorder 1, %s32
      %p712 = scmp.lt.s32.totalorder %s32, 5
      %p713 = pnand %p711, %p712
      %p714 = pneg %p713
      // Predicated region
      $region89: #{tpu_custom_call.1} parent=5 // pred_check
        _
      $region90: #{tpu_custom_call.1} parent=5 // pred_check_branch
        %716 = sbr.rel (%p713) target = $region92
      $region91: #{tpu_custom_call.1} parent=5 // pred_region
        %s717 = ssub.s32 %s32, 1
        %p718 = scmp.lt.s32.totalorder %s41, 1
        %s719 = scalar_select %p718, %s41, 1
        %s720 = scalar_lea.vmem %s0, %s719
        %p721 = pneg %p70
        %p722 = pneg %p67
        %p723 = scmp.lt.s32.totalorder %s41, 1
        %s724 = scalar_select %p723, %s41, 1
        %s725 = smul.addr %s724, 8
        %s726 = scalar_lea.vmem %s1, %s725
        %p727 = pneg %p96
        %p728 = pneg %p93
        %p729 = scmp.lt.s32.totalorder %s42, 1
        %s730 = scalar_select %p729, %s42, 1
        %s731 = smul.addr %s730, 16
        %s732 = smul.addr %s731, 8
        %s733 = scalar_lea.vmem %s2, %s732
        %p734 = pneg %p122
        %p735 = pneg %p119
        %p736 = scmp.lt.s32.totalorder %s42, 1
        %s737 = scalar_select %p736, %s42, 1
        %s738 = smul.addr %s737, 4
        %s739 = scalar_lea.vmem %s3, %s738
        %p740 = pneg %p148
        %p741 = pneg %p145
        %p742 = scmp.lt.s32.totalorder %s42, 1
        %s743 = scalar_select %p742, %s42, 1
        %s744 = smul.addr %s743, 16
        %s745 = smul.addr %s744, 8
        %s746 = scalar_lea.vmem %s4, %s745
        %p747 = pneg %p174
        %p748 = pneg %p171
        %p749 = scmp.lt.s32.totalorder %s42, 1
        %s750 = scalar_select %p749, %s42, 1
        %s751 = smul.addr %s750, 4
        %s752 = scalar_lea.vmem %s5, %s751
        %p753 = pneg %p200
        %p754 = pneg %p197
        %p755 = scmp.lt.s32.totalorder %s42, 1
        %s756 = scalar_select %p755, %s42, 1
        %s757 = smul.addr %s756, 16
        %s758 = smul.addr %s757, 8
        %s759 = scalar_lea.vmem %s6, %s758
        %p760 = pneg %p226
        %p761 = pneg %p223
        %p762 = scmp.lt.s32.totalorder %s42, 1
        %s763 = scalar_select %p762, %s42, 1
        %s764 = smul.addr %s763, 4
        %s765 = scalar_lea.vmem %s7, %s764
        %p766 = pneg %p252
        %p767 = pneg %p249
        %p768 = scmp.lt.s32.totalorder %s42, 1
        %s769 = scalar_select %p768, %s42, 1
        %s770 = smul.addr %s769, 4
        %s771 = smul.addr %s770, 8
        %s772 = scalar_lea.vmem %s8, %s771
        %p773 = pneg %p278
        %p774 = pneg %p275
        %p775 = scmp.lt.s32.totalorder %s42, 1
        %s776 = scalar_select %p775, %s42, 1
        %s777 = scalar_lea.vmem %s9, %s776
        %p778 = pneg %p304
        %p779 = pneg %p301
        %p780 = scmp.lt.s32.totalorder %s42, 1
        %s781 = scalar_select %p780, %s42, 1
        %s782 = scalar_lea.vmem %s10, %s781
        %p783 = pneg %p330
        %p784 = pneg %p327
        %p785 = scmp.lt.s32.totalorder %s42, 1
        %s786 = scalar_select %p785, %s42, 1
        %s787 = scalar_lea.vmem %s11, %s786
        %p788 = pneg %p356
        %p789 = pneg %p353
        %p790 = scmp.lt.s32.totalorder %s42, 1
        %s791 = scalar_select %p790, %s42, 1
        %s792 = smul.addr %s791, 4
        %s793 = smul.addr %s792, 8
        %s794 = scalar_lea.vmem %s12, %s793
        %p795 = pneg %p382
        %p796 = pneg %p379
        %p797 = scmp.lt.s32.totalorder %s42, 1
        %s798 = scalar_select %p797, %s42, 1
        %s799 = scalar_lea.vmem %s13, %s798
        %p800 = pneg %p408
        %p801 = pneg %p405
        %p802 = scmp.lt.s32.totalorder %s42, 1
        %s803 = scalar_select %p802, %s42, 1
        %s804 = smul.addr %s803, 8
        %s805 = smul.addr %s804, 8
        %s806 = scalar_lea.vmem %s14, %s805
        %p807 = pneg %p434
        %p808 = pneg %p431
        %p809 = scmp.lt.s32.totalorder %s42, 1
        %s810 = scalar_select %p809, %s42, 1
        %s811 = scalar_lea.vmem %s15, %s810
        %p812 = pneg %p460
        %p813 = pneg %p457
        %p814 = scmp.lt.s32.totalorder %s42, 1
        %s815 = scalar_select %p814, %s42, 1
        %s816 = scalar_lea.vmem %s16, %s815
        %p817 = pneg %p486
        %p818 = pneg %p483
        %p819 = scmp.lt.s32.totalorder %s42, 1
        %s820 = scalar_select %p819, %s42, 1
        %s821 = scalar_lea.vmem %s17, %s820
        %p822 = pneg %p512
        %p823 = pneg %p509
        %p824 = pneg %p540
        %p825 = pneg %p537
        %s826 = sand.u32 %s527, 1
        %s827 = scalar_lea.sflag [#allocation4], %s826
        %s828 = sand.u32 %s527, 1
        %s829 = smul.addr %s828, 8
        %s830 = scalar_lea.vmem [#allocation3], %s829
        %p831 = pneg %p568
        %p832 = pneg %p565
        %s833 = sand.u32 %s555, 1
        %s834 = scalar_lea.sflag [#allocation6], %s833
        %s835 = sand.u32 %s555, 1
        %s836 = smul.addr %s835, 32
        %s837 = scalar_lea.vmem [#allocation5], %s836
        %p838 = scmp.lt.s32.totalorder %s41, 1
        %s839 = scalar_select %p838, %s41, 1
        %s840 = scalar_lea.vmem %s0, %s839
        %p841 = scmp.lt.s32.totalorder %s41, 1
        %s842 = scalar_select %p841, %s41, 1
        %s843 = smul.addr %s842, 8
        %s844 = scalar_lea.vmem %s1, %s843
        %p845 = scmp.lt.s32.totalorder %s42, 1
        %s846 = scalar_select %p845, %s42, 1
        %s847 = smul.addr %s846, 16
        %s848 = smul.addr %s847, 8
        %s849 = scalar_lea.vmem %s2, %s848
        %p850 = scmp.lt.s32.totalorder %s42, 1
        %s851 = scalar_select %p850, %s42, 1
        %s852 = smul.addr %s851, 4
        %s853 = scalar_lea.vmem %s3, %s852
        %p854 = scmp.lt.s32.totalorder %s42, 1
        %s855 = scalar_select %p854, %s42, 1
        %s856 = smul.addr %s855, 16
        %s857 = smul.addr %s856, 8
        %s858 = scalar_lea.vmem %s4, %s857
        %p859 = scmp.lt.s32.totalorder %s42, 1
        %s860 = scalar_select %p859, %s42, 1
        %s861 = smul.addr %s860, 4
        %s862 = scalar_lea.vmem %s5, %s861
        %p863 = scmp.lt.s32.totalorder %s42, 1
        %s864 = scalar_select %p863, %s42, 1
        %s865 = smul.addr %s864, 16
        %s866 = smul.addr %s865, 8
        %s867 = scalar_lea.vmem %s6, %s866
        %p868 = scmp.lt.s32.totalorder %s42, 1
        %s869 = scalar_select %p868, %s42, 1
        %s870 = smul.addr %s869, 4
        %s871 = scalar_lea.vmem %s7, %s870
        %p872 = scmp.lt.s32.totalorder %s42, 1
        %s873 = scalar_select %p872, %s42, 1
        %s874 = smul.addr %s873, 4
        %s875 = smul.addr %s874, 8
        %s876 = scalar_lea.vmem %s8, %s875
        %p877 = scmp.lt.s32.totalorder %s42, 1
        %s878 = scalar_select %p877, %s42, 1
        %s879 = scalar_lea.vmem %s9, %s878
        %p880 = scmp.lt.s32.totalorder %s42, 1
        %s881 = scalar_select %p880, %s42, 1
        %s882 = scalar_lea.vmem %s10, %s881
        %p883 = scmp.lt.s32.totalorder %s42, 1
        %s884 = scalar_select %p883, %s42, 1
        %s885 = scalar_lea.vmem %s11, %s884
        %p886 = scmp.lt.s32.totalorder %s42, 1
        %s887 = scalar_select %p886, %s42, 1
        %s888 = smul.addr %s887, 4
        %s889 = smul.addr %s888, 8
        %s890 = scalar_lea.vmem %s12, %s889
        %p891 = scmp.lt.s32.totalorder %s42, 1
        %s892 = scalar_select %p891, %s42, 1
        %s893 = scalar_lea.vmem %s13, %s892
        %p894 = scmp.lt.s32.totalorder %s42, 1
        %s895 = scalar_select %p894, %s42, 1
        %s896 = smul.addr %s895, 8
        %s897 = smul.addr %s896, 8
        %s898 = scalar_lea.vmem %s14, %s897
        %p899 = scmp.lt.s32.totalorder %s42, 1
        %s900 = scalar_select %p899, %s42, 1
        %s901 = scalar_lea.vmem %s15, %s900
        %p902 = scmp.lt.s32.totalorder %s42, 1
        %s903 = scalar_select %p902, %s42, 1
        %s904 = scalar_lea.vmem %s16, %s903
        %p905 = scmp.lt.s32.totalorder %s42, 1
        %s906 = scalar_select %p905, %s42, 1
        %s907 = scalar_lea.vmem %s17, %s906
        %p908 = scmp.eq.s32.totalorder %s42, 0
        // Predicated region
        $region93: #{tpu_custom_call.1} parent=91 // pred_check
          %p909 = pneg %p908
        $region94: #{tpu_custom_call.1} parent=91 // pred_check_branch
          %911 = sbr.rel (%p909) target = $region96
        $region95: #{tpu_custom_call.1} parent=91 // pred_region
          %v912 = vld [vmem:[%s844] sm:$0xff]
          %vm913 = vcmask 261120
          %914 = vst.msk [vmem:[#allocation2] sm:$0xff] %vm913, %v912
        $region96: #{tpu_custom_call.1} parent=91 // pred_fallthru
          _
        %v915 = vld [vmem:[#allocation2] sm:$0xff]
        %v916 = vld [vmem:[%s849] sm:$0xff]
        %v917 = vld [vmem:[%s849 + $0x8] sm:$0xff]
        %v918 = vld [vmem:[%s849 + $0x10] sm:$0xff]
        %v919 = vld [vmem:[%s849 + $0x18] sm:$0xff]
        %v920 = vld [vmem:[%s849 + $0x20] sm:$0xff]
        %v921 = vld [vmem:[%s849 + $0x28] sm:$0xff]
        %v922 = vld [vmem:[%s849 + $0x30] sm:$0xff]
        %v923 = vld [vmem:[%s849 + $0x38] sm:$0xff]
        %v924 = vld [vmem:[%s849 + $0x40] sm:$0xff]
        %v925 = vld [vmem:[%s849 + $0x48] sm:$0xff]
        %v926 = vld [vmem:[%s849 + $0x50] sm:$0xff]
        %v927 = vld [vmem:[%s849 + $0x58] sm:$0xff]
        %v928 = vld [vmem:[%s849 + $0x60] sm:$0xff]
        %v929 = vld [vmem:[%s849 + $0x68] sm:$0xff]
        %v930 = vld [vmem:[%s849 + $0x70] sm:$0xff]
        %v931 = vld [vmem:[%s849 + $0x78] sm:$0xff]
        %v932 = vld [vmem:[%s853] sm:$0x1]
        %v933 = vld [vmem:[%s853 + $0x1] sm:$0x1]
        %v934 = vld [vmem:[%s853 + $0x2] sm:$0x1]
        %v935 = vld [vmem:[%s853 + $0x3] sm:$0x1]
        %v940 = vlaneseq
        %v941 = vshrl.u32 %v940, 7
        %v942 = vsub.s32 0, %v941
        %v943 = vrot.slane %v932, %v942
        %v944 = vlaneseq
        %v945 = vshrl.u32 %v944, 7
        %v946 = vsub.s32 0, %v945
        %v947 = vrot.slane %v933, %v946
        %v948 = vlaneseq
        %v949 = vshrl.u32 %v948, 7
        %v950 = vsub.s32 0, %v949
        %v951 = vrot.slane %v934, %v950
        %v952 = vlaneseq
        %v953 = vshrl.u32 %v952, 7
        %v954 = vsub.s32 0, %v953
        %v955 = vrot.slane %v935, %v954
        %vm960 = vcmask 261120
        %v962 = vsel %vm960, %v915, 0
        %964 = vmatprep.subr.mxu0 0.0
        %965 = vmatpush1.msra.mxu0 %v916
        %966 = vmatprep.subr.mxu0 0.0
        %967 = vmatpush1.msra.mxu0 %v917
        %968 = vmatprep.subr.mxu0 0.0
        %969 = vmatpush1.msra.mxu0 %v918
        %970 = vmatprep.subr.mxu0 0.0
        %971 = vmatpush1.msra.mxu0 %v919
        %972 = vmatprep.subr.mxu0 0.0
        %973 = vmatpush1.msra.mxu0 0.0
        %974 = vmatprep.subr.mxu0 0.0
        %975 = vmatpush1.msra.mxu0 0.0
        %976 = vmatprep.subr.mxu0 0.0
        %977 = vmatpush1.msra.mxu0 0.0
        %978 = vmatprep.subr.mxu0 0.0
        %979 = vmatpush1.msra.mxu0 0.0
        %980 = vmatprep.subr.mxu0 0.0
        %981 = vmatpush1.msra.mxu0 0.0
        %982 = vmatprep.subr.mxu0 0.0
        %983 = vmatpush1.msra.mxu0 0.0
        %984 = vmatprep.subr.mxu0 0.0
        %985 = vmatpush1.msra.mxu0 0.0
        %986 = vmatprep.subr.mxu0 0.0
        %987 = vmatpush1.msra.mxu0 0.0
        %988 = vmatprep.subr.mxu0 0.0
        %989 = vmatpush1.msra.mxu0 0.0
        %990 = vmatprep.subr.mxu0 0.0
        %991 = vmatpush1.msra.mxu0 0.0
        %992 = vmatprep.subr.mxu0 0.0
        %993 = vmatpush1.msra.mxu0 0.0
        %994 = vmatprep.subr.mxu0 0.0
        %995 = vmatpush1.msra.mxu0 0.0
        %996 = vmatprep.subr.mxu0 0.0
        %997 = vmatpush1.msra.mxu0 0.0
        %998 = vmatprep.subr.mxu0 0.0
        %999 = vmatpush1.msra.mxu0 0.0
        %1000 = vmatprep.subr.mxu0 0.0
        %1001 = vmatpush1.msra.mxu0 0.0
        %1002 = vmatprep.subr.mxu0 0.0
        %1003 = vmatpush1.msra.mxu0 0.0
        %1004 = vmatprep.subr.mxu0 0.0
        %1005 = vmatpush1.msra.mxu0 0.0
        %1006 = vmatprep.subr.mxu0 0.0
        %1007 = vmatpush1.msra.mxu0 0.0
        %1008 = vmatprep.subr.mxu0 0.0
        %1009 = vmatpush1.msra.mxu0 0.0
        %1010 = vmatprep.subr.mxu0 0.0
        %1011 = vmatpush1.msra.mxu0 0.0
        %1012 = vmatprep.subr.mxu0 0.0
        %1013 = vmatpush1.msra.mxu0 0.0
        %1014 = vmatprep.subr.mxu0 0.0
        %1015 = vmatpush1.msra.mxu0 0.0
        %1016 = vmatprep.subr.mxu0 0.0
        %1017 = vmatpush1.msra.mxu0 0.0
        %1018 = vmatprep.subr.mxu0 0.0
        %1019 = vmatpush1.msra.mxu0 0.0
        %1020 = vmatprep.subr.mxu0 0.0
        %1021 = vmatpush1.msra.mxu0 0.0
        %1022 = vmatprep.subr.mxu0 0.0
        %1023 = vmatpush1.msra.mxu0 0.0
        %1024 = vmatprep.subr.mxu0 0.0
        %1025 = vmatpush1.msra.mxu0 0.0
        %1026 = vmatprep.subr.mxu0 0.0
        %1027 = vmatpush1.msra.mxu0 0.0
        %1028 = vmatprep.mubr.f32.mxu0 0.0
        %1029 = vmatmul.mubr.f32.gmra.mrb[0].mxu0 %v962
        %v1030 = vpop.f32.mrb[0].mxu0
        %v1031 = vadd.f32 %v943, %v1030
        %v1032 = vpop.f32.mrb[0].mxu0
        %1033 = vdwg.mxu0
        %1034 = vmatprep.subr.mxu0 0.0
        %1035 = vmatpush1.msra.mxu0 %v920
        %1036 = vmatprep.subr.mxu0 0.0
        %1037 = vmatpush1.msra.mxu0 %v921
        %1038 = vmatprep.subr.mxu0 0.0
        %1039 = vmatpush1.msra.mxu0 %v922
        %1040 = vmatprep.subr.mxu0 0.0
        %1041 = vmatpush1.msra.mxu0 %v923
        %1042 = vmatprep.subr.mxu0 0.0
        %1043 = vmatpush1.msra.mxu0 0.0
        %1044 = vmatprep.subr.mxu0 0.0
        %1045 = vmatpush1.msra.mxu0 0.0
        %1046 = vmatprep.subr.mxu0 0.0
        %1047 = vmatpush1.msra.mxu0 0.0
        %1048 = vmatprep.subr.mxu0 0.0
        %1049 = vmatpush1.msra.mxu0 0.0
        %1050 = vmatprep.subr.mxu0 0.0
        %1051 = vmatpush1.msra.mxu0 0.0
        %1052 = vmatprep.subr.mxu0 0.0
        %1053 = vmatpush1.msra.mxu0 0.0
        %1054 = vmatprep.subr.mxu0 0.0
        %1055 = vmatpush1.msra.mxu0 0.0
        %1056 = vmatprep.subr.mxu0 0.0
        %1057 = vmatpush1.msra.mxu0 0.0
        %1058 = vmatprep.subr.mxu0 0.0
        %1059 = vmatpush1.msra.mxu0 0.0
        %1060 = vmatprep.subr.mxu0 0.0
        %1061 = vmatpush1.msra.mxu0 0.0
        %1062 = vmatprep.subr.mxu0 0.0
        %1063 = vmatpush1.msra.mxu0 0.0
        %1064 = vmatprep.subr.mxu0 0.0
        %1065 = vmatpush1.msra.mxu0 0.0
        %1066 = vmatprep.subr.mxu0 0.0
        %1067 = vmatpush1.msra.mxu0 0.0
        %1068 = vmatprep.subr.mxu0 0.0
        %1069 = vmatpush1.msra.mxu0 0.0
        %1070 = vmatprep.subr.mxu0 0.0
        %1071 = vmatpush1.msra.mxu0 0.0
        %1072 = vmatprep.subr.mxu0 0.0
        %1073 = vmatpush1.msra.mxu0 0.0
        %1074 = vmatprep.subr.mxu0 0.0
        %1075 = vmatpush1.msra.mxu0 0.0
        %1076 = vmatprep.subr.mxu0 0.0
        %1077 = vmatpush1.msra.mxu0 0.0
        %1078 = vmatprep.subr.mxu0 0.0
        %1079 = vmatpush1.msra.mxu0 0.0
        %1080 = vmatprep.subr.mxu0 0.0
        %1081 = vmatpush1.msra.mxu0 0.0
        %1082 = vmatprep.subr.mxu0 0.0
        %1083 = vmatpush1.msra.mxu0 0.0
        %1084 = vmatprep.subr.mxu0 0.0
        %1085 = vmatpush1.msra.mxu0 0.0
        %1086 = vmatprep.subr.mxu0 0.0
        %1087 = vmatpush1.msra.mxu0 0.0
        %1088 = vmatprep.subr.mxu0 0.0
        %1089 = vmatpush1.msra.mxu0 0.0
        %1090 = vmatprep.subr.mxu0 0.0
        %1091 = vmatpush1.msra.mxu0 0.0
        %1092 = vmatprep.subr.mxu0 0.0
        %1093 = vmatpush1.msra.mxu0 0.0
        %1094 = vmatprep.subr.mxu0 0.0
        %1095 = vmatpush1.msra.mxu0 0.0
        %1096 = vmatprep.subr.mxu0 0.0
        %1097 = vmatpush1.msra.mxu0 0.0
        %1098 = vmatprep.mubr.f32.mxu0 0.0
        %1099 = vmatmul.mubr.f32.gmra.mrb[0].mxu0 %v962
        %v1100 = vpop.f32.mrb[0].mxu0
        %v1101 = vadd.f32 %v947, %v1100
        %v1102 = vpop.f32.mrb[0].mxu0
        %1103 = vdwg.mxu0
        %1104 = vmatprep.subr.mxu0 0.0
        %1105 = vmatpush1.msra.mxu0 %v924
        %1106 = vmatprep.subr.mxu0 0.0
        %1107 = vmatpush1.msra.mxu0 %v925
        %1108 = vmatprep.subr.mxu0 0.0
        %1109 = vmatpush1.msra.mxu0 %v926
        %1110 = vmatprep.subr.mxu0 0.0
        %1111 = vmatpush1.msra.mxu0 %v927
        %1112 = vmatprep.subr.mxu0 0.0
        %1113 = vmatpush1.msra.mxu0 0.0
        %1114 = vmatprep.subr.mxu0 0.0
        %1115 = vmatpush1.msra.mxu0 0.0
        %1116 = vmatprep.subr.mxu0 0.0
        %1117 = vmatpush1.msra.mxu0 0.0
        %1118 = vmatprep.subr.mxu0 0.0
        %1119 = vmatpush1.msra.mxu0 0.0
        %1120 = vmatprep.subr.mxu0 0.0
        %1121 = vmatpush1.msra.mxu0 0.0
        %1122 = vmatprep.subr.mxu0 0.0
        %1123 = vmatpush1.msra.mxu0 0.0
        %1124 = vmatprep.subr.mxu0 0.0
        %1125 = vmatpush1.msra.mxu0 0.0
        %1126 = vmatprep.subr.mxu0 0.0
        %1127 = vmatpush1.msra.mxu0 0.0
        %1128 = vmatprep.subr.mxu0 0.0
        %1129 = vmatpush1.msra.mxu0 0.0
        %1130 = vmatprep.subr.mxu0 0.0
        %1131 = vmatpush1.msra.mxu0 0.0
        %1132 = vmatprep.subr.mxu0 0.0
        %1133 = vmatpush1.msra.mxu0 0.0
        %1134 = vmatprep.subr.mxu0 0.0
        %1135 = vmatpush1.msra.mxu0 0.0
        %1136 = vmatprep.subr.mxu0 0.0
        %1137 = vmatpush1.msra.mxu0 0.0
        %1138 = vmatprep.subr.mxu0 0.0
        %1139 = vmatpush1.msra.mxu0 0.0
        %1140 = vmatprep.subr.mxu0 0.0
        %1141 = vmatpush1.msra.mxu0 0.0
        %1142 = vmatprep.subr.mxu0 0.0
        %1143 = vmatpush1.msra.mxu0 0.0
        %1144 = vmatprep.subr.mxu0 0.0
        %1145 = vmatpush1.msra.mxu0 0.0
        %1146 = vmatprep.subr.mxu0 0.0
        %1147 = vmatpush1.msra.mxu0 0.0
        %1148 = vmatprep.subr.mxu0 0.0
        %1149 = vmatpush1.msra.mxu0 0.0
        %1150 = vmatprep.subr.mxu0 0.0
        %1151 = vmatpush1.msra.mxu0 0.0
        %1152 = vmatprep.subr.mxu0 0.0
        %1153 = vmatpush1.msra.mxu0 0.0
        %1154 = vmatprep.subr.mxu0 0.0
        %1155 = vmatpush1.msra.mxu0 0.0
        %1156 = vmatprep.subr.mxu0 0.0
        %1157 = vmatpush1.msra.mxu0 0.0
        %1158 = vmatprep.subr.mxu0 0.0
        %1159 = vmatpush1.msra.mxu0 0.0
        %1160 = vmatprep.subr.mxu0 0.0
        %1161 = vmatpush1.msra.mxu0 0.0
        %1162 = vmatprep.subr.mxu0 0.0
        %1163 = vmatpush1.msra.mxu0 0.0
        %1164 = vmatprep.subr.mxu0 0.0
        %1165 = vmatpush1.msra.mxu0 0.0
        %1166 = vmatprep.subr.mxu0 0.0
        %1167 = vmatpush1.msra.mxu0 0.0
        %1168 = vmatprep.mubr.f32.mxu0 0.0
        %1169 = vmatmul.mubr.f32.gmra.mrb[0].mxu0 %v962
        %v1170 = vpop.f32.mrb[0].mxu0
        %v1171 = vadd.f32 %v951, %v1170
        %v1172 = vpop.f32.mrb[0].mxu0
        %1173 = vdwg.mxu0
        %1174 = vmatprep.subr.mxu0 0.0
        %1175 = vmatpush1.msra.mxu0 %v928
        %1176 = vmatprep.subr.mxu0 0.0
        %1177 = vmatpush1.msra.mxu0 %v929
        %1178 = vmatprep.subr.mxu0 0.0
        %1179 = vmatpush1.msra.mxu0 %v930
        %1180 = vmatprep.subr.mxu0 0.0
        %1181 = vmatpush1.msra.mxu0 %v931
        %1182 = vmatprep.subr.mxu0 0.0
        %1183 = vmatpush1.msra.mxu0 0.0
        %1184 = vmatprep.subr.mxu0 0.0
        %1185 = vmatpush1.msra.mxu0 0.0
        %1186 = vmatprep.subr.mxu0 0.0
        %1187 = vmatpush1.msra.mxu0 0.0
        %1188 = vmatprep.subr.mxu0 0.0
        %1189 = vmatpush1.msra.mxu0 0.0
        %1190 = vmatprep.subr.mxu0 0.0
        %1191 = vmatpush1.msra.mxu0 0.0
        %1192 = vmatprep.subr.mxu0 0.0
        %1193 = vmatpush1.msra.mxu0 0.0
        %1194 = vmatprep.subr.mxu0 0.0
        %1195 = vmatpush1.msra.mxu0 0.0
        %1196 = vmatprep.subr.mxu0 0.0
        %1197 = vmatpush1.msra.mxu0 0.0
        %1198 = vmatprep.subr.mxu0 0.0
        %1199 = vmatpush1.msra.mxu0 0.0
        %1200 = vmatprep.subr.mxu0 0.0
        %1201 = vmatpush1.msra.mxu0 0.0
        %1202 = vmatprep.subr.mxu0 0.0
        %1203 = vmatpush1.msra.mxu0 0.0
        %1204 = vmatprep.subr.mxu0 0.0
        %1205 = vmatpush1.msra.mxu0 0.0
        %1206 = vmatprep.subr.mxu0 0.0
        %1207 = vmatpush1.msra.mxu0 0.0
        %1208 = vmatprep.subr.mxu0 0.0
        %1209 = vmatpush1.msra.mxu0 0.0
        %1210 = vmatprep.subr.mxu0 0.0
        %1211 = vmatpush1.msra.mxu0 0.0
        %1212 = vmatprep.subr.mxu0 0.0
        %1213 = vmatpush1.msra.mxu0 0.0
        %1214 = vmatprep.subr.mxu0 0.0
        %1215 = vmatpush1.msra.mxu0 0.0
        %1216 = vmatprep.subr.mxu0 0.0
        %1217 = vmatpush1.msra.mxu0 0.0
        %1218 = vmatprep.subr.mxu0 0.0
        %1219 = vmatpush1.msra.mxu0 0.0
        %1220 = vmatprep.subr.mxu0 0.0
        %1221 = vmatpush1.msra.mxu0 0.0
        %1222 = vmatprep.subr.mxu0 0.0
        %1223 = vmatpush1.msra.mxu0 0.0
        %1224 = vmatprep.subr.mxu0 0.0
        %1225 = vmatpush1.msra.mxu0 0.0
        %1226 = vmatprep.subr.mxu0 0.0
        %1227 = vmatpush1.msra.mxu0 0.0
        %1228 = vmatprep.subr.mxu0 0.0
        %1229 = vmatpush1.msra.mxu0 0.0
        %1230 = vmatprep.subr.mxu0 0.0
        %1231 = vmatpush1.msra.mxu0 0.0
        %1232 = vmatprep.subr.mxu0 0.0
        %1233 = vmatpush1.msra.mxu0 0.0
        %1234 = vmatprep.subr.mxu0 0.0
        %1235 = vmatpush1.msra.mxu0 0.0
        %1236 = vmatprep.subr.mxu0 0.0
        %1237 = vmatpush1.msra.mxu0 0.0
        %1238 = vmatprep.mubr.f32.mxu0 0.0
        %1239 = vmatmul.mubr.f32.gmra.mrb[0].mxu0 %v962
        %v1240 = vpop.f32.mrb[0].mxu0
        %v1241 = vadd.f32 %v955, %v1240
        %v1242 = vpop.f32.mrb[0].mxu0
        %1243 = vdwg.mxu0
        %v1244 = vld [vmem:[%s858] sm:$0xff]
        %v1245 = vld [vmem:[%s858 + $0x8] sm:$0xff]
        %v1246 = vld [vmem:[%s858 + $0x10] sm:$0xff]
        %v1247 = vld [vmem:[%s858 + $0x18] sm:$0xff]
        %v1248 = vld [vmem:[%s858 + $0x20] sm:$0xff]
        %v1249 = vld [vmem:[%s858 + $0x28] sm:$0xff]
        %v1250 = vld [vmem:[%s858 + $0x30] sm:$0xff]
        %v1251 = vld [vmem:[%s858 + $0x38] sm:$0xff]
        %v1252 = vld [vmem:[%s858 + $0x40] sm:$0xff]
        %v1253 = vld [vmem:[%s858 + $0x48] sm:$0xff]
        %v1254 = vld [vmem:[%s858 + $0x50] sm:$0xff]
        %v1255 = vld [vmem:[%s858 + $0x58] sm:$0xff]
        %v1256 = vld [vmem:[%s858 + $0x60] sm:$0xff]
        %v1257 = vld [vmem:[%s858 + $0x68] sm:$0xff]
        %v1258 = vld [vmem:[%s858 + $0x70] sm:$0xff]
        %v1259 = vld [vmem:[%s858 + $0x78] sm:$0xff]
        %v1260 = vld [vmem:[%s862] sm:$0x1]
        %v1261 = vld [vmem:[%s862 + $0x1] sm:$0x1]
        %v1262 = vld [vmem:[%s862 + $0x2] sm:$0x1]
        %v1263 = vld [vmem:[%s862 + $0x3] sm:$0x1]
        %v1268 = vlaneseq
        %v1269 = vshrl.u32 %v1268, 7
        %v1270 = vsub.s32 0, %v1269
        %v1271 = vrot.slane %v1260, %v1270
        %v1272 = vlaneseq
        %v1273 = vshrl.u32 %v1272, 7
        %v1274 = vsub.s32 0, %v1273
        %v1275 = vrot.slane %v1261, %v1274
        %v1276 = vlaneseq
        %v1277 = vshrl.u32 %v1276, 7
        %v1278 = vsub.s32 0, %v1277
        %v1279 = vrot.slane %v1262, %v1278
        %v1280 = vlaneseq
        %v1281 = vshrl.u32 %v1280, 7
        %v1282 = vsub.s32 0, %v1281
        %v1283 = vrot.slane %v1263, %v1282
        %1288 = vmatprep.subr.mxu0 0.0
        %1289 = vmatpush1.msra.mxu0 %v1244
        %1290 = vmatprep.subr.mxu0 0.0
        %1291 = vmatpush1.msra.mxu0 %v1245
        %1292 = vmatprep.subr.mxu0 0.0
        %1293 = vmatpush1.msra.mxu0 %v1246
        %1294 = vmatprep.subr.mxu0 0.0
        %1295 = vmatpush1.msra.mxu0 %v1247
        %1296 = vmatprep.subr.mxu0 0.0
        %1297 = vmatpush1.msra.mxu0 0.0
        %1298 = vmatprep.subr.mxu0 0.0
        %1299 = vmatpush1.msra.mxu0 0.0
        %1300 = vmatprep.subr.mxu0 0.0
        %1301 = vmatpush1.msra.mxu0 0.0
        %1302 = vmatprep.subr.mxu0 0.0
        %1303 = vmatpush1.msra.mxu0 0.0
        %1304 = vmatprep.subr.mxu0 0.0
        %1305 = vmatpush1.msra.mxu0 0.0
        %1306 = vmatprep.subr.mxu0 0.0
        %1307 = vmatpush1.msra.mxu0 0.0
        %1308 = vmatprep.subr.mxu0 0.0
        %1309 = vmatpush1.msra.mxu0 0.0
        %1310 = vmatprep.subr.mxu0 0.0
        %1311 = vmatpush1.msra.mxu0 0.0
        %1312 = vmatprep.subr.mxu0 0.0
        %1313 = vmatpush1.msra.mxu0 0.0
        %1314 = vmatprep.subr.mxu0 0.0
        %1315 = vmatpush1.msra.mxu0 0.0
        %1316 = vmatprep.subr.mxu0 0.0
        %1317 = vmatpush1.msra.mxu0 0.0
        %1318 = vmatprep.subr.mxu0 0.0
        %1319 = vmatpush1.msra.mxu0 0.0
        %1320 = vmatprep.subr.mxu0 0.0
        %1321 = vmatpush1.msra.mxu0 0.0
        %1322 = vmatprep.subr.mxu0 0.0
        %1323 = vmatpush1.msra.mxu0 0.0
        %1324 = vmatprep.subr.mxu0 0.0
        %1325 = vmatpush1.msra.mxu0 0.0
        %1326 = vmatprep.subr.mxu0 0.0
        %1327 = vmatpush1.msra.mxu0 0.0
        %1328 = vmatprep.subr.mxu0 0.0
        %1329 = vmatpush1.msra.mxu0 0.0
        %1330 = vmatprep.subr.mxu0 0.0
        %1331 = vmatpush1.msra.mxu0 0.0
        %1332 = vmatprep.subr.mxu0 0.0
        %1333 = vmatpush1.msra.mxu0 0.0
        %1334 = vmatprep.subr.mxu0 0.0
        %1335 = vmatpush1.msra.mxu0 0.0
        %1336 = vmatprep.subr.mxu0 0.0
        %1337 = vmatpush1.msra.mxu0 0.0
        %1338 = vmatprep.subr.mxu0 0.0
        %1339 = vmatpush1.msra.mxu0 0.0
        %1340 = vmatprep.subr.mxu0 0.0
        %1341 = vmatpush1.msra.mxu0 0.0
        %1342 = vmatprep.subr.mxu0 0.0
        %1343 = vmatpush1.msra.mxu0 0.0
        %1344 = vmatprep.subr.mxu0 0.0
        %1345 = vmatpush1.msra.mxu0 0.0
        %1346 = vmatprep.subr.mxu0 0.0
        %1347 = vmatpush1.msra.mxu0 0.0
        %1348 = vmatprep.subr.mxu0 0.0
        %1349 = vmatpush1.msra.mxu0 0.0
        %1350 = vmatprep.subr.mxu0 0.0
        %1351 = vmatpush1.msra.mxu0 0.0
        %1352 = vmatprep.mubr.f32.mxu0 0.0
        %1353 = vmatmul.mubr.f32.gmra.mrb[0].mxu0 %v962
        %v1354 = vpop.f32.mrb[0].mxu0
        %v1355 = vadd.f32 %v1271, %v1354
        %v1356 = vpop.f32.mrb[0].mxu0
        %1357 = vdwg.mxu0
        %1358 = vmatprep.subr.mxu0 0.0
        %1359 = vmatpush1.msra.mxu0 %v1248
        %1360 = vmatprep.subr.mxu0 0.0
        %1361 = vmatpush1.msra.mxu0 %v1249
        %1362 = vmatprep.subr.mxu0 0.0
        %1363 = vmatpush1.msra.mxu0 %v1250
        %1364 = vmatprep.subr.mxu0 0.0
        %1365 = vmatpush1.msra.mxu0 %v1251
        %1366 = vmatprep.subr.mxu0 0.0
        %1367 = vmatpush1.msra.mxu0 0.0
        %1368 = vmatprep.subr.mxu0 0.0
        %1369 = vmatpush1.msra.mxu0 0.0
        %1370 = vmatprep.subr.mxu0 0.0
        %1371 = vmatpush1.msra.mxu0 0.0
        %1372 = vmatprep.subr.mxu0 0.0
        %1373 = vmatpush1.msra.mxu0 0.0
        %1374 = vmatprep.subr.mxu0 0.0
        %1375 = vmatpush1.msra.mxu0 0.0
        %1376 = vmatprep.subr.mxu0 0.0
        %1377 = vmatpush1.msra.mxu0 0.0
        %1378 = vmatprep.subr.mxu0 0.0
        %1379 = vmatpush1.msra.mxu0 0.0
        %1380 = vmatprep.subr.mxu0 0.0
        %1381 = vmatpush1.msra.mxu0 0.0
        %1382 = vmatprep.subr.mxu0 0.0
        %1383 = vmatpush1.msra.mxu0 0.0
        %1384 = vmatprep.subr.mxu0 0.0
        %1385 = vmatpush1.msra.mxu0 0.0
        %1386 = vmatprep.subr.mxu0 0.0
        %1387 = vmatpush1.msra.mxu0 0.0
        %1388 = vmatprep.subr.mxu0 0.0
        %1389 = vmatpush1.msra.mxu0 0.0
        %1390 = vmatprep.subr.mxu0 0.0
        %1391 = vmatpush1.msra.mxu0 0.0
        %1392 = vmatprep.subr.mxu0 0.0
        %1393 = vmatpush1.msra.mxu0 0.0
        %1394 = vmatprep.subr.mxu0 0.0
        %1395 = vmatpush1.msra.mxu0 0.0
        %1396 = vmatprep.subr.mxu0 0.0
        %1397 = vmatpush1.msra.mxu0 0.0
        %1398 = vmatprep.subr.mxu0 0.0
        %1399 = vmatpush1.msra.mxu0 0.0
        %1400 = vmatprep.subr.mxu0 0.0
        %1401 = vmatpush1.msra.mxu0 0.0
        %1402 = vmatprep.subr.mxu0 0.0
        %1403 = vmatpush1.msra.mxu0 0.0
        %1404 = vmatprep.subr.mxu0 0.0
        %1405 = vmatpush1.msra.mxu0 0.0
        %1406 = vmatprep.subr.mxu0 0.0
        %1407 = vmatpush1.msra.mxu0 0.0
        %1408 = vmatprep.subr.mxu0 0.0
        %1409 = vmatpush1.msra.mxu0 0.0
        %1410 = vmatprep.subr.mxu0 0.0
        %1411 = vmatpush1.msra.mxu0 0.0
        %1412 = vmatprep.subr.mxu0 0.0
        %1413 = vmatpush1.msra.mxu0 0.0
        %1414 = vmatprep.subr.mxu0 0.0
        %1415 = vmatpush1.msra.mxu0 0.0
        %1416 = vmatprep.subr.mxu0 0.0
        %1417 = vmatpush1.msra.mxu0 0.0
        %1418 = vmatprep.subr.mxu0 0.0
        %1419 = vmatpush1.msra.mxu0 0.0
        %1420 = vmatprep.subr.mxu0 0.0
        %1421 = vmatpush1.msra.mxu0 0.0
        %1422 = vmatprep.mubr.f32.mxu0 0.0
        %1423 = vmatmul.mubr.f32.gmra.mrb[0].mxu0 %v962
        %v1424 = vpop.f32.mrb[0].mxu0
        %v1425 = vadd.f32 %v1275, %v1424
        %v1426 = vpop.f32.mrb[0].mxu0
        %1427 = vdwg.mxu0
        %1428 = vmatprep.subr.mxu0 0.0
        %1429 = vmatpush1.msra.mxu0 %v1252
        %1430 = vmatprep.subr.mxu0 0.0
        %1431 = vmatpush1.msra.mxu0 %v1253
        %1432 = vmatprep.subr.mxu0 0.0
        %1433 = vmatpush1.msra.mxu0 %v1254
        %1434 = vmatprep.subr.mxu0 0.0
        %1435 = vmatpush1.msra.mxu0 %v1255
        %1436 = vmatprep.subr.mxu0 0.0
        %1437 = vmatpush1.msra.mxu0 0.0
        %1438 = vmatprep.subr.mxu0 0.0
        %1439 = vmatpush1.msra.mxu0 0.0
        %1440 = vmatprep.subr.mxu0 0.0
        %1441 = vmatpush1.msra.mxu0 0.0
        %1442 = vmatprep.subr.mxu0 0.0
        %1443 = vmatpush1.msra.mxu0 0.0
        %1444 = vmatprep.subr.mxu0 0.0
        %1445 = vmatpush1.msra.mxu0 0.0
        %1446 = vmatprep.subr.mxu0 0.0
        %1447 = vmatpush1.msra.mxu0 0.0
        %1448 = vmatprep.subr.mxu0 0.0
        %1449 = vmatpush1.msra.mxu0 0.0
        %1450 = vmatprep.subr.mxu0 0.0
        %1451 = vmatpush1.msra.mxu0 0.0
        %1452 = vmatprep.subr.mxu0 0.0
        %1453 = vmatpush1.msra.mxu0 0.0
        %1454 = vmatprep.subr.mxu0 0.0
        %1455 = vmatpush1.msra.mxu0 0.0
        %1456 = vmatprep.subr.mxu0 0.0
        %1457 = vmatpush1.msra.mxu0 0.0
        %1458 = vmatprep.subr.mxu0 0.0
        %1459 = vmatpush1.msra.mxu0 0.0
        %1460 = vmatprep.subr.mxu0 0.0
        %1461 = vmatpush1.msra.mxu0 0.0
        %1462 = vmatprep.subr.mxu0 0.0
        %1463 = vmatpush1.msra.mxu0 0.0
        %1464 = vmatprep.subr.mxu0 0.0
        %1465 = vmatpush1.msra.mxu0 0.0
        %1466 = vmatprep.subr.mxu0 0.0
        %1467 = vmatpush1.msra.mxu0 0.0
        %1468 = vmatprep.subr.mxu0 0.0
        %1469 = vmatpush1.msra.mxu0 0.0
        %1470 = vmatprep.subr.mxu0 0.0
        %1471 = vmatpush1.msra.mxu0 0.0
        %1472 = vmatprep.subr.mxu0 0.0
        %1473 = vmatpush1.msra.mxu0 0.0
        %1474 = vmatprep.subr.mxu0 0.0
        %1475 = vmatpush1.msra.mxu0 0.0
        %1476 = vmatprep.subr.mxu0 0.0
        %1477 = vmatpush1.msra.mxu0 0.0
        %1478 = vmatprep.subr.mxu0 0.0
        %1479 = vmatpush1.msra.mxu0 0.0
        %1480 = vmatprep.subr.mxu0 0.0
        %1481 = vmatpush1.msra.mxu0 0.0
        %1482 = vmatprep.subr.mxu0 0.0
        %1483 = vmatpush1.msra.mxu0 0.0
        %1484 = vmatprep.subr.mxu0 0.0
        %1485 = vmatpush1.msra.mxu0 0.0
        %1486 = vmatprep.subr.mxu0 0.0
        %1487 = vmatpush1.msra.mxu0 0.0
        %1488 = vmatprep.subr.mxu0 0.0
        %1489 = vmatpush1.msra.mxu0 0.0
        %1490 = vmatprep.subr.mxu0 0.0
        %1491 = vmatpush1.msra.mxu0 0.0
        %1492 = vmatprep.mubr.f32.mxu0 0.0
        %1493 = vmatmul.mubr.f32.gmra.mrb[0].mxu0 %v962
        %v1494 = vpop.f32.mrb[0].mxu0
        %v1495 = vadd.f32 %v1279, %v1494
        %v1496 = vpop.f32.mrb[0].mxu0
        %1497 = vdwg.mxu0
        %1498 = vmatprep.subr.mxu0 0.0
        %1499 = vmatpush1.msra.mxu0 %v1256
        %1500 = vmatprep.subr.mxu0 0.0
        %1501 = vmatpush1.msra.mxu0 %v1257
        %1502 = vmatprep.subr.mxu0 0.0
        %1503 = vmatpush1.msra.mxu0 %v1258
        %1504 = vmatprep.subr.mxu0 0.0
        %1505 = vmatpush1.msra.mxu0 %v1259
        %1506 = vmatprep.subr.mxu0 0.0
        %1507 = vmatpush1.msra.mxu0 0.0
        %1508 = vmatprep.subr.mxu0 0.0
        %1509 = vmatpush1.msra.mxu0 0.0
        %1510 = vmatprep.subr.mxu0 0.0
        %1511 = vmatpush1.msra.mxu0 0.0
        %1512 = vmatprep.subr.mxu0 0.0
        %1513 = vmatpush1.msra.mxu0 0.0
        %1514 = vmatprep.subr.mxu0 0.0
        %1515 = vmatpush1.msra.mxu0 0.0
        %1516 = vmatprep.subr.mxu0 0.0
        %1517 = vmatpush1.msra.mxu0 0.0
        %1518 = vmatprep.subr.mxu0 0.0
        %1519 = vmatpush1.msra.mxu0 0.0
        %1520 = vmatprep.subr.mxu0 0.0
        %1521 = vmatpush1.msra.mxu0 0.0
        %1522 = vmatprep.subr.mxu0 0.0
        %1523 = vmatpush1.msra.mxu0 0.0
        %1524 = vmatprep.subr.mxu0 0.0
        %1525 = vmatpush1.msra.mxu0 0.0
        %1526 = vmatprep.subr.mxu0 0.0
        %1527 = vmatpush1.msra.mxu0 0.0
        %1528 = vmatprep.subr.mxu0 0.0
        %1529 = vmatpush1.msra.mxu0 0.0
        %1530 = vmatprep.subr.mxu0 0.0
        %1531 = vmatpush1.msra.mxu0 0.0
        %1532 = vmatprep.subr.mxu0 0.0
        %1533 = vmatpush1.msra.mxu0 0.0
        %1534 = vmatprep.subr.mxu0 0.0
        %1535 = vmatpush1.msra.mxu0 0.0
        %1536 = vmatprep.subr.mxu0 0.0
        %1537 = vmatpush1.msra.mxu0 0.0
        %1538 = vmatprep.subr.mxu0 0.0
        %1539 = vmatpush1.msra.mxu0 0.0
        %1540 = vmatprep.subr.mxu0 0.0
        %1541 = vmatpush1.msra.mxu0 0.0
        %1542 = vmatprep.subr.mxu0 0.0
        %1543 = vmatpush1.msra.mxu0 0.0
        %1544 = vmatprep.subr.mxu0 0.0
        %1545 = vmatpush1.msra.mxu0 0.0
        %1546 = vmatprep.subr.mxu0 0.0
        %1547 = vmatpush1.msra.mxu0 0.0
        %1548 = vmatprep.subr.mxu0 0.0
        %1549 = vmatpush1.msra.mxu0 0.0
        %1550 = vmatprep.subr.mxu0 0.0
        %1551 = vmatpush1.msra.mxu0 0.0
        %1552 = vmatprep.subr.mxu0 0.0
        %1553 = vmatpush1.msra.mxu0 0.0
        %1554 = vmatprep.subr.mxu0 0.0
        %1555 = vmatpush1.msra.mxu0 0.0
        %1556 = vmatprep.subr.mxu0 0.0
        %1557 = vmatpush1.msra.mxu0 0.0
        %1558 = vmatprep.subr.mxu0 0.0
        %1559 = vmatpush1.msra.mxu0 0.0
        %1560 = vmatprep.subr.mxu0 0.0
        %1561 = vmatpush1.msra.mxu0 0.0
        %1562 = vmatprep.mubr.f32.mxu0 0.0
        %1563 = vmatmul.mubr.f32.gmra.mrb[0].mxu0 %v962
        %v1564 = vpop.f32.mrb[0].mxu0
        %v1565 = vadd.f32 %v1283, %v1564
        %v1566 = vpop.f32.mrb[0].mxu0
        %1567 = vdwg.mxu0
        %v1568 = vld [vmem:[%s867] sm:$0xff]
        %v1569 = vld [vmem:[%s867 + $0x8] sm:$0xff]
        %v1570 = vld [vmem:[%s867 + $0x10] sm:$0xff]
        %v1571 = vld [vmem:[%s867 + $0x18] sm:$0xff]
        %v1572 = vld [vmem:[%s867 + $0x20] sm:$0xff]
        %v1573 = vld [vmem:[%s867 + $0x28] sm:$0xff]
        %v1574 = vld [vmem:[%s867 + $0x30] sm:$0xff]
        %v1575 = vld [vmem:[%s867 + $0x38] sm:$0xff]
        %v1576 = vld [vmem:[%s867 + $0x40] sm:$0xff]
        %v1577 = vld [vmem:[%s867 + $0x48] sm:$0xff]
        %v1578 = vld [vmem:[%s867 + $0x50] sm:$0xff]
        %v1579 = vld [vmem:[%s867 + $0x58] sm:$0xff]
        %v1580 = vld [vmem:[%s867 + $0x60] sm:$0xff]
        %v1581 = vld [vmem:[%s867 + $0x68] sm:$0xff]
        %v1582 = vld [vmem:[%s867 + $0x70] sm:$0xff]
        %v1583 = vld [vmem:[%s867 + $0x78] sm:$0xff]
        %v1584 = vld [vmem:[%s871] sm:$0x1]
        %v1585 = vld [vmem:[%s871 + $0x1] sm:$0x1]
        %v1586 = vld [vmem:[%s871 + $0x2] sm:$0x1]
        %v1587 = vld [vmem:[%s871 + $0x3] sm:$0x1]
        %v1592 = vlaneseq
        %v1593 = vshrl.u32 %v1592, 7
        %v1594 = vsub.s32 0, %v1593
        %v1595 = vrot.slane %v1584, %v1594
        %v1596 = vlaneseq
        %v1597 = vshrl.u32 %v1596, 7
        %v1598 = vsub.s32 0, %v1597
        %v1599 = vrot.slane %v1585, %v1598
        %v1600 = vlaneseq
        %v1601 = vshrl.u32 %v1600, 7
        %v1602 = vsub.s32 0, %v1601
        %v1603 = vrot.slane %v1586, %v1602
        %v1604 = vlaneseq
        %v1605 = vshrl.u32 %v1604, 7
        %v1606 = vsub.s32 0, %v1605
        %v1607 = vrot.slane %v1587, %v1606
        %1612 = vmatprep.subr.mxu0 0.0
        %1613 = vmatpush1.msra.mxu0 %v1568
        %1614 = vmatprep.subr.mxu0 0.0
        %1615 = vmatpush1.msra.mxu0 %v1569
        %1616 = vmatprep.subr.mxu0 0.0
        %1617 = vmatpush1.msra.mxu0 %v1570
        %1618 = vmatprep.subr.mxu0 0.0
        %1619 = vmatpush1.msra.mxu0 %v1571
        %1620 = vmatprep.subr.mxu0 0.0
        %1621 = vmatpush1.msra.mxu0 0.0
        %1622 = vmatprep.subr.mxu0 0.0
        %1623 = vmatpush1.msra.mxu0 0.0
        %1624 = vmatprep.subr.mxu0 0.0
        %1625 = vmatpush1.msra.mxu0 0.0
        %1626 = vmatprep.subr.mxu0 0.0
        %1627 = vmatpush1.msra.mxu0 0.0
        %1628 = vmatprep.subr.mxu0 0.0
        %1629 = vmatpush1.msra.mxu0 0.0
        %1630 = vmatprep.subr.mxu0 0.0
        %1631 = vmatpush1.msra.mxu0 0.0
        %1632 = vmatprep.subr.mxu0 0.0
        %1633 = vmatpush1.msra.mxu0 0.0
        %1634 = vmatprep.subr.mxu0 0.0
        %1635 = vmatpush1.msra.mxu0 0.0
        %1636 = vmatprep.subr.mxu0 0.0
        %1637 = vmatpush1.msra.mxu0 0.0
        %1638 = vmatprep.subr.mxu0 0.0
        %1639 = vmatpush1.msra.mxu0 0.0
        %1640 = vmatprep.subr.mxu0 0.0
        %1641 = vmatpush1.msra.mxu0 0.0
        %1642 = vmatprep.subr.mxu0 0.0
        %1643 = vmatpush1.msra.mxu0 0.0
        %1644 = vmatprep.subr.mxu0 0.0
        %1645 = vmatpush1.msra.mxu0 0.0
        %1646 = vmatprep.subr.mxu0 0.0
        %1647 = vmatpush1.msra.mxu0 0.0
        %1648 = vmatprep.subr.mxu0 0.0
        %1649 = vmatpush1.msra.mxu0 0.0
        %1650 = vmatprep.subr.mxu0 0.0
        %1651 = vmatpush1.msra.mxu0 0.0
        %1652 = vmatprep.subr.mxu0 0.0
        %1653 = vmatpush1.msra.mxu0 0.0
        %1654 = vmatprep.subr.mxu0 0.0
        %1655 = vmatpush1.msra.mxu0 0.0
        %1656 = vmatprep.subr.mxu0 0.0
        %1657 = vmatpush1.msra.mxu0 0.0
        %1658 = vmatprep.subr.mxu0 0.0
        %1659 = vmatpush1.msra.mxu0 0.0
        %1660 = vmatprep.subr.mxu0 0.0
        %1661 = vmatpush1.msra.mxu0 0.0
        %1662 = vmatprep.subr.mxu0 0.0
        %1663 = vmatpush1.msra.mxu0 0.0
        %1664 = vmatprep.subr.mxu0 0.0
        %1665 = vmatpush1.msra.mxu0 0.0
        %1666 = vmatprep.subr.mxu0 0.0
        %1667 = vmatpush1.msra.mxu0 0.0
        %1668 = vmatprep.subr.mxu0 0.0
        %1669 = vmatpush1.msra.mxu0 0.0
        %1670 = vmatprep.subr.mxu0 0.0
        %1671 = vmatpush1.msra.mxu0 0.0
        %1672 = vmatprep.subr.mxu0 0.0
        %1673 = vmatpush1.msra.mxu0 0.0
        %1674 = vmatprep.subr.mxu0 0.0
        %1675 = vmatpush1.msra.mxu0 0.0
        %1676 = vmatprep.mubr.f32.mxu0 0.0
        %1677 = vmatmul.mubr.f32.gmra.mrb[0].mxu0 %v962
        %v1678 = vpop.f32.mrb[0].mxu0
        %v1679 = vadd.f32 %v1595, %v1678
        %v1680 = vpop.f32.mrb[0].mxu0
        %1681 = vdwg.mxu0
        %1682 = vmatprep.subr.mxu0 0.0
        %1683 = vmatpush1.msra.mxu0 %v1572
        %1684 = vmatprep.subr.mxu0 0.0
        %1685 = vmatpush1.msra.mxu0 %v1573
        %1686 = vmatprep.subr.mxu0 0.0
        %1687 = vmatpush1.msra.mxu0 %v1574
        %1688 = vmatprep.subr.mxu0 0.0
        %1689 = vmatpush1.msra.mxu0 %v1575
        %1690 = vmatprep.subr.mxu0 0.0
        %1691 = vmatpush1.msra.mxu0 0.0
        %1692 = vmatprep.subr.mxu0 0.0
        %1693 = vmatpush1.msra.mxu0 0.0
        %1694 = vmatprep.subr.mxu0 0.0
        %1695 = vmatpush1.msra.mxu0 0.0
        %1696 = vmatprep.subr.mxu0 0.0
        %1697 = vmatpush1.msra.mxu0 0.0
        %1698 = vmatprep.subr.mxu0 0.0
        %1699 = vmatpush1.msra.mxu0 0.0
        %1700 = vmatprep.subr.mxu0 0.0
        %1701 = vmatpush1.msra.mxu0 0.0
        %1702 = vmatprep.subr.mxu0 0.0
        %1703 = vmatpush1.msra.mxu0 0.0
        %1704 = vmatprep.subr.mxu0 0.0
        %1705 = vmatpush1.msra.mxu0 0.0
        %1706 = vmatprep.subr.mxu0 0.0
        %1707 = vmatpush1.msra.mxu0 0.0
        %1708 = vmatprep.subr.mxu0 0.0
        %1709 = vmatpush1.msra.mxu0 0.0
        %1710 = vmatprep.subr.mxu0 0.0
        %1711 = vmatpush1.msra.mxu0 0.0
        %1712 = vmatprep.subr.mxu0 0.0
        %1713 = vmatpush1.msra.mxu0 0.0
        %1714 = vmatprep.subr.mxu0 0.0
        %1715 = vmatpush1.msra.mxu0 0.0
        %1716 = vmatprep.subr.mxu0 0.0
        %1717 = vmatpush1.msra.mxu0 0.0
        %1718 = vmatprep.subr.mxu0 0.0
        %1719 = vmatpush1.msra.mxu0 0.0
        %1720 = vmatprep.subr.mxu0 0.0
        %1721 = vmatpush1.msra.mxu0 0.0
        %1722 = vmatprep.subr.mxu0 0.0
        %1723 = vmatpush1.msra.mxu0 0.0
        %1724 = vmatprep.subr.mxu0 0.0
        %1725 = vmatpush1.msra.mxu0 0.0
        %1726 = vmatprep.subr.mxu0 0.0
        %1727 = vmatpush1.msra.mxu0 0.0
        %1728 = vmatprep.subr.mxu0 0.0
        %1729 = vmatpush1.msra.mxu0 0.0
        %1730 = vmatprep.subr.mxu0 0.0
        %1731 = vmatpush1.msra.mxu0 0.0
        %1732 = vmatprep.subr.mxu0 0.0
        %1733 = vmatpush1.msra.mxu0 0.0
        %1734 = vmatprep.subr.mxu0 0.0
        %1735 = vmatpush1.msra.mxu0 0.0
        %1736 = vmatprep.subr.mxu0 0.0
        %1737 = vmatpush1.msra.mxu0 0.0
        %1738 = vmatprep.subr.mxu0 0.0
        %1739 = vmatpush1.msra.mxu0 0.0
        %1740 = vmatprep.subr.mxu0 0.0
        %1741 = vmatpush1.msra.mxu0 0.0
        %1742 = vmatprep.subr.mxu0 0.0
        %1743 = vmatpush1.msra.mxu0 0.0
        %1744 = vmatprep.subr.mxu0 0.0
        %1745 = vmatpush1.msra.mxu0 0.0
        %1746 = vmatprep.mubr.f32.mxu0 0.0
        %1747 = vmatmul.mubr.f32.gmra.mrb[0].mxu0 %v962
        %v1748 = vpop.f32.mrb[0].mxu0
        %v1749 = vadd.f32 %v1599, %v1748
        %v1750 = vpop.f32.mrb[0].mxu0
        %1751 = vdwg.mxu0
        %1752 = vmatprep.subr.mxu0 0.0
        %1753 = vmatpush1.msra.mxu0 %v1576
        %1754 = vmatprep.subr.mxu0 0.0
        %1755 = vmatpush1.msra.mxu0 %v1577
        %1756 = vmatprep.subr.mxu0 0.0
        %1757 = vmatpush1.msra.mxu0 %v1578
        %1758 = vmatprep.subr.mxu0 0.0
        %1759 = vmatpush1.msra.mxu0 %v1579
        %1760 = vmatprep.subr.mxu0 0.0
        %1761 = vmatpush1.msra.mxu0 0.0
        %1762 = vmatprep.subr.mxu0 0.0
        %1763 = vmatpush1.msra.mxu0 0.0
        %1764 = vmatprep.subr.mxu0 0.0
        %1765 = vmatpush1.msra.mxu0 0.0
        %1766 = vmatprep.subr.mxu0 0.0
        %1767 = vmatpush1.msra.mxu0 0.0
        %1768 = vmatprep.subr.mxu0 0.0
        %1769 = vmatpush1.msra.mxu0 0.0
        %1770 = vmatprep.subr.mxu0 0.0
        %1771 = vmatpush1.msra.mxu0 0.0
        %1772 = vmatprep.subr.mxu0 0.0
        %1773 = vmatpush1.msra.mxu0 0.0
        %1774 = vmatprep.subr.mxu0 0.0
        %1775 = vmatpush1.msra.mxu0 0.0
        %1776 = vmatprep.subr.mxu0 0.0
        %1777 = vmatpush1.msra.mxu0 0.0
        %1778 = vmatprep.subr.mxu0 0.0
        %1779 = vmatpush1.msra.mxu0 0.0
        %1780 = vmatprep.subr.mxu0 0.0
        %1781 = vmatpush1.msra.mxu0 0.0
        %1782 = vmatprep.subr.mxu0 0.0
        %1783 = vmatpush1.msra.mxu0 0.0
        %1784 = vmatprep.subr.mxu0 0.0
        %1785 = vmatpush1.msra.mxu0 0.0
        %1786 = vmatprep.subr.mxu0 0.0
        %1787 = vmatpush1.msra.mxu0 0.0
        %1788 = vmatprep.subr.mxu0 0.0
        %1789 = vmatpush1.msra.mxu0 0.0
        %1790 = vmatprep.subr.mxu0 0.0
        %1791 = vmatpush1.msra.mxu0 0.0
        %1792 = vmatprep.subr.mxu0 0.0
        %1793 = vmatpush1.msra.mxu0 0.0
        %1794 = vmatprep.subr.mxu0 0.0
        %1795 = vmatpush1.msra.mxu0 0.0
        %1796 = vmatprep.subr.mxu0 0.0
        %1797 = vmatpush1.msra.mxu0 0.0
        %1798 = vmatprep.subr.mxu0 0.0
        %1799 = vmatpush1.msra.mxu0 0.0
        %1800 = vmatprep.subr.mxu0 0.0
        %1801 = vmatpush1.msra.mxu0 0.0
        %1802 = vmatprep.subr.mxu0 0.0
        %1803 = vmatpush1.msra.mxu0 0.0
        %1804 = vmatprep.subr.mxu0 0.0
        %1805 = vmatpush1.msra.mxu0 0.0
        %1806 = vmatprep.subr.mxu0 0.0
        %1807 = vmatpush1.msra.mxu0 0.0
        %1808 = vmatprep.subr.mxu0 0.0
        %1809 = vmatpush1.msra.mxu0 0.0
        %1810 = vmatprep.subr.mxu0 0.0
        %1811 = vmatpush1.msra.mxu0 0.0
        %1812 = vmatprep.subr.mxu0 0.0
        %1813 = vmatpush1.msra.mxu0 0.0
        %1814 = vmatprep.subr.mxu0 0.0
        %1815 = vmatpush1.msra.mxu0 0.0
        %1816 = vmatprep.mubr.f32.mxu0 0.0
        %1817 = vmatmul.mubr.f32.gmra.mrb[0].mxu0 %v962
        %v1818 = vpop.f32.mrb[0].mxu0
        %v1819 = vadd.f32 %v1603, %v1818
        %v1820 = vpop.f32.mrb[0].mxu0
        %1821 = vdwg.mxu0
        %1822 = vmatprep.subr.mxu0 0.0
        %1823 = vmatpush1.msra.mxu0 %v1580
        %1824 = vmatprep.subr.mxu0 0.0
        %1825 = vmatpush1.msra.mxu0 %v1581
        %1826 = vmatprep.subr.mxu0 0.0
        %1827 = vmatpush1.msra.mxu0 %v1582
        %1828 = vmatprep.subr.mxu0 0.0
        %1829 = vmatpush1.msra.mxu0 %v1583
        %1830 = vmatprep.subr.mxu0 0.0
        %1831 = vmatpush1.msra.mxu0 0.0
        %1832 = vmatprep.subr.mxu0 0.0
        %1833 = vmatpush1.msra.mxu0 0.0
        %1834 = vmatprep.subr.mxu0 0.0
        %1835 = vmatpush1.msra.mxu0 0.0
        %1836 = vmatprep.subr.mxu0 0.0
        %1837 = vmatpush1.msra.mxu0 0.0
        %1838 = vmatprep.subr.mxu0 0.0
        %1839 = vmatpush1.msra.mxu0 0.0
        %1840 = vmatprep.subr.mxu0 0.0
        %1841 = vmatpush1.msra.mxu0 0.0
        %1842 = vmatprep.subr.mxu0 0.0
        %1843 = vmatpush1.msra.mxu0 0.0
        %1844 = vmatprep.subr.mxu0 0.0
        %1845 = vmatpush1.msra.mxu0 0.0
        %1846 = vmatprep.subr.mxu0 0.0
        %1847 = vmatpush1.msra.mxu0 0.0
        %1848 = vmatprep.subr.mxu0 0.0
        %1849 = vmatpush1.msra.mxu0 0.0
        %1850 = vmatprep.subr.mxu0 0.0
        %1851 = vmatpush1.msra.mxu0 0.0
        %1852 = vmatprep.subr.mxu0 0.0
        %1853 = vmatpush1.msra.mxu0 0.0
        %1854 = vmatprep.subr.mxu0 0.0
        %1855 = vmatpush1.msra.mxu0 0.0
        %1856 = vmatprep.subr.mxu0 0.0
        %1857 = vmatpush1.msra.mxu0 0.0
        %1858 = vmatprep.subr.mxu0 0.0
        %1859 = vmatpush1.msra.mxu0 0.0
        %1860 = vmatprep.subr.mxu0 0.0
        %1861 = vmatpush1.msra.mxu0 0.0
        %1862 = vmatprep.subr.mxu0 0.0
        %1863 = vmatpush1.msra.mxu0 0.0
        %1864 = vmatprep.subr.mxu0 0.0
        %1865 = vmatpush1.msra.mxu0 0.0
        %1866 = vmatprep.subr.mxu0 0.0
        %1867 = vmatpush1.msra.mxu0 0.0
        %1868 = vmatprep.subr.mxu0 0.0
        %1869 = vmatpush1.msra.mxu0 0.0
        %1870 = vmatprep.subr.mxu0 0.0
        %1871 = vmatpush1.msra.mxu0 0.0
        %1872 = vmatprep.subr.mxu0 0.0
        %1873 = vmatpush1.msra.mxu0 0.0
        %1874 = vmatprep.subr.mxu0 0.0
        %1875 = vmatpush1.msra.mxu0 0.0
        %1876 = vmatprep.subr.mxu0 0.0
        %1877 = vmatpush1.msra.mxu0 0.0
        %1878 = vmatprep.subr.mxu0 0.0
        %1879 = vmatpush1.msra.mxu0 0.0
        %1880 = vmatprep.subr.mxu0 0.0
        %1881 = vmatpush1.msra.mxu0 0.0
        %1882 = vmatprep.subr.mxu0 0.0
        %1883 = vmatpush1.msra.mxu0 0.0
        %1884 = vmatprep.subr.mxu0 0.0
        %1885 = vmatpush1.msra.mxu0 0.0
        %1886 = vmatprep.mubr.f32.mxu0 0.0
        %1887 = vmatmul.mubr.f32.gmra.mrb[0].mxu0 %v962
        %v1888 = vpop.f32.mrb[0].mxu0
        %v1889 = vadd.f32 %v1607, %v1888
        %v1890 = vpop.f32.mrb[0].mxu0
        %1891 = vdwg.mxu0
        %v1892 = vld [vmem:[%s840] sm:$0x1]
        %v1894 = vlaneseq
        %v1895 = vshrl.u32 %v1894, 7
        %v1896 = vsub.s32 0, %v1895
        %v1897 = vrot.slane %v1892, %v1896
        %vm1899 = vcmask 64512
        %v1901 = vsel %vm1899, %v1031, 0
        %v1904 = vsel %vm1899, %v1355, 0
        %1906 = vmatprep.subr.mxu0 0.0
        %1907 = vmatpush1.xpose.msra.mxu0 %v1904
        %1908 = vmatprep.subr.mxu0 0.0
        %1909 = vmatpush1.xpose.msra.mxu0 0.0
        %1910 = vmatprep.subr.mxu0 0.0
        %1911 = vmatpush1.xpose.msra.mxu0 0.0
        %1912 = vmatprep.subr.mxu0 0.0
        %1913 = vmatpush1.xpose.msra.mxu0 0.0
        %1914 = vmatprep.subr.mxu0 0.0
        %1915 = vmatpush1.xpose.msra.mxu0 0.0
        %1916 = vmatprep.subr.mxu0 0.0
        %1917 = vmatpush1.xpose.msra.mxu0 0.0
        %1918 = vmatprep.subr.mxu0 0.0
        %1919 = vmatpush1.xpose.msra.mxu0 0.0
        %1920 = vmatprep.subr.mxu0 0.0
        %1921 = vmatpush1.xpose.msra.mxu0 0.0
        %1922 = vmatprep.subr.mxu0 0.0
        %1923 = vmatpush1.xpose.msra.mxu0 0.0
        %1924 = vmatprep.subr.mxu0 0.0
        %1925 = vmatpush1.xpose.msra.mxu0 0.0
        %1926 = vmatprep.subr.mxu0 0.0
        %1927 = vmatpush1.xpose.msra.mxu0 0.0
        %1928 = vmatprep.subr.mxu0 0.0
        %1929 = vmatpush1.xpose.msra.mxu0 0.0
        %1930 = vmatprep.subr.mxu0 0.0
        %1931 = vmatpush1.xpose.msra.mxu0 0.0
        %1932 = vmatprep.subr.mxu0 0.0
        %1933 = vmatpush1.xpose.msra.mxu0 0.0
        %1934 = vmatprep.subr.mxu0 0.0
        %1935 = vmatpush1.xpose.msra.mxu0 0.0
        %1936 = vmatprep.subr.mxu0 0.0
        %1937 = vmatpush1.xpose.msra.mxu0 0.0
        %1938 = vmatprep.subr.mxu0 0.0
        %1939 = vmatpush1.xpose.msra.mxu0 0.0
        %1940 = vmatprep.subr.mxu0 0.0
        %1941 = vmatpush1.xpose.msra.mxu0 0.0
        %1942 = vmatprep.subr.mxu0 0.0
        %1943 = vmatpush1.xpose.msra.mxu0 0.0
        %1944 = vmatprep.subr.mxu0 0.0
        %1945 = vmatpush1.xpose.msra.mxu0 0.0
        %1946 = vmatprep.subr.mxu0 0.0
        %1947 = vmatpush1.xpose.msra.mxu0 0.0
        %1948 = vmatprep.subr.mxu0 0.0
        %1949 = vmatpush1.xpose.msra.mxu0 0.0
        %1950 = vmatprep.subr.mxu0 0.0
        %1951 = vmatpush1.xpose.msra.mxu0 0.0
        %1952 = vmatprep.subr.mxu0 0.0
        %1953 = vmatpush1.xpose.msra.mxu0 0.0
        %1954 = vmatprep.subr.mxu0 0.0
        %1955 = vmatpush1.xpose.msra.mxu0 0.0
        %1956 = vmatprep.subr.mxu0 0.0
        %1957 = vmatpush1.xpose.msra.mxu0 0.0
        %1958 = vmatprep.subr.mxu0 0.0
        %1959 = vmatpush1.xpose.msra.mxu0 0.0
        %1960 = vmatprep.subr.mxu0 0.0
        %1961 = vmatpush1.xpose.msra.mxu0 0.0
        %1962 = vmatprep.subr.mxu0 0.0
        %1963 = vmatpush1.xpose.msra.mxu0 0.0
        %1964 = vmatprep.subr.mxu0 0.0
        %1965 = vmatpush1.xpose.msra.mxu0 0.0
        %1966 = vmatprep.subr.mxu0 0.0
        %1967 = vmatpush1.xpose.msra.mxu0 0.0
        %1968 = vmatprep.subr.mxu0 0.0
        %1969 = vmatpush1.xpose.msra.mxu0 0.0
        %1970 = vmatprep.mubr.f32.mxu0 0.0
        %1971 = vmatmul.mubr.f32.gmra.mrb[0].mxu0 %v1901
        %v1972 = vpop.f32.mrb[0].mxu0
        %v1973 = vadd.f32 %v1897, %v1972
        %v1974 = vpop.f32.mrb[0].mxu0
        %1975 = vdwg.mxu0
        %v1977 = vsel %vm1899, %v1101, 0
        %v1980 = vsel %vm1899, %v1425, 0
        %1982 = vmatprep.subr.mxu0 0.0
        %1983 = vmatpush1.xpose.msra.mxu0 %v1980
        %1984 = vmatprep.subr.mxu0 0.0
        %1985 = vmatpush1.xpose.msra.mxu0 0.0
        %1986 = vmatprep.subr.mxu0 0.0
        %1987 = vmatpush1.xpose.msra.mxu0 0.0
        %1988 = vmatprep.subr.mxu0 0.0
        %1989 = vmatpush1.xpose.msra.mxu0 0.0
        %1990 = vmatprep.subr.mxu0 0.0
        %1991 = vmatpush1.xpose.msra.mxu0 0.0
        %1992 = vmatprep.subr.mxu0 0.0
        %1993 = vmatpush1.xpose.msra.mxu0 0.0
        %1994 = vmatprep.subr.mxu0 0.0
        %1995 = vmatpush1.xpose.msra.mxu0 0.0
        %1996 = vmatprep.subr.mxu0 0.0
        %1997 = vmatpush1.xpose.msra.mxu0 0.0
        %1998 = vmatprep.subr.mxu0 0.0
        %1999 = vmatpush1.xpose.msra.mxu0 0.0
        %2000 = vmatprep.subr.mxu0 0.0
        %2001 = vmatpush1.xpose.msra.mxu0 0.0
        %2002 = vmatprep.subr.mxu0 0.0
        %2003 = vmatpush1.xpose.msra.mxu0 0.0
        %2004 = vmatprep.subr.mxu0 0.0
        %2005 = vmatpush1.xpose.msra.mxu0 0.0
        %2006 = vmatprep.subr.mxu0 0.0
        %2007 = vmatpush1.xpose.msra.mxu0 0.0
        %2008 = vmatprep.subr.mxu0 0.0
        %2009 = vmatpush1.xpose.msra.mxu0 0.0
        %2010 = vmatprep.subr.mxu0 0.0
        %2011 = vmatpush1.xpose.msra.mxu0 0.0
        %2012 = vmatprep.subr.mxu0 0.0
        %2013 = vmatpush1.xpose.msra.mxu0 0.0
        %2014 = vmatprep.subr.mxu0 0.0
        %2015 = vmatpush1.xpose.msra.mxu0 0.0
        %2016 = vmatprep.subr.mxu0 0.0
        %2017 = vmatpush1.xpose.msra.mxu0 0.0
        %2018 = vmatprep.subr.mxu0 0.0
        %2019 = vmatpush1.xpose.msra.mxu0 0.0
        %2020 = vmatprep.subr.mxu0 0.0
        %2021 = vmatpush1.xpose.msra.mxu0 0.0
        %2022 = vmatprep.subr.mxu0 0.0
        %2023 = vmatpush1.xpose.msra.mxu0 0.0
        %2024 = vmatprep.subr.mxu0 0.0
        %2025 = vmatpush1.xpose.msra.mxu0 0.0
        %2026 = vmatprep.subr.mxu0 0.0
        %2027 = vmatpush1.xpose.msra.mxu0 0.0
        %2028 = vmatprep.subr.mxu0 0.0
        %2029 = vmatpush1.xpose.msra.mxu0 0.0
        %2030 = vmatprep.subr.mxu0 0.0
        %2031 = vmatpush1.xpose.msra.mxu0 0.0
        %2032 = vmatprep.subr.mxu0 0.0
        %2033 = vmatpush1.xpose.msra.mxu0 0.0
        %2034 = vmatprep.subr.mxu0 0.0
        %2035 = vmatpush1.xpose.msra.mxu0 0.0
        %2036 = vmatprep.subr.mxu0 0.0
        %2037 = vmatpush1.xpose.msra.mxu0 0.0
        %2038 = vmatprep.subr.mxu0 0.0
        %2039 = vmatpush1.xpose.msra.mxu0 0.0
        %2040 = vmatprep.subr.mxu0 0.0
        %2041 = vmatpush1.xpose.msra.mxu0 0.0
        %2042 = vmatprep.subr.mxu0 0.0
        %2043 = vmatpush1.xpose.msra.mxu0 0.0
        %2044 = vmatprep.subr.mxu0 0.0
        %2045 = vmatpush1.xpose.msra.mxu0 0.0
        %2046 = vmatprep.mubr.f32.mxu0 0.0
        %2047 = vmatmul.mubr.f32.gmra.mrb[0].mxu0 %v1977
        %v2048 = vpop.f32.mrb[0].mxu0
        %v2049 = vadd.f32 %v1897, %v2048
        %v2050 = vpop.f32.mrb[0].mxu0
        %2051 = vdwg.mxu0
        %v2053 = vsel %vm1899, %v1171, 0
        %v2056 = vsel %vm1899, %v1495, 0
        %2058 = vmatprep.subr.mxu0 0.0
        %2059 = vmatpush1.xpose.msra.mxu0 %v2056
        %2060 = vmatprep.subr.mxu0 0.0
        %2061 = vmatpush1.xpose.msra.mxu0 0.0
        %2062 = vmatprep.subr.mxu0 0.0
        %2063 = vmatpush1.xpose.msra.mxu0 0.0
        %2064 = vmatprep.subr.mxu0 0.0
        %2065 = vmatpush1.xpose.msra.mxu0 0.0
        %2066 = vmatprep.subr.mxu0 0.0
        %2067 = vmatpush1.xpose.msra.mxu0 0.0
        %2068 = vmatprep.subr.mxu0 0.0
        %2069 = vmatpush1.xpose.msra.mxu0 0.0
        %2070 = vmatprep.subr.mxu0 0.0
        %2071 = vmatpush1.xpose.msra.mxu0 0.0
        %2072 = vmatprep.subr.mxu0 0.0
        %2073 = vmatpush1.xpose.msra.mxu0 0.0
        %2074 = vmatprep.subr.mxu0 0.0
        %2075 = vmatpush1.xpose.msra.mxu0 0.0
        %2076 = vmatprep.subr.mxu0 0.0
        %2077 = vmatpush1.xpose.msra.mxu0 0.0
        %2078 = vmatprep.subr.mxu0 0.0
        %2079 = vmatpush1.xpose.msra.mxu0 0.0
        %2080 = vmatprep.subr.mxu0 0.0
        %2081 = vmatpush1.xpose.msra.mxu0 0.0
        %2082 = vmatprep.subr.mxu0 0.0
        %2083 = vmatpush1.xpose.msra.mxu0 0.0
        %2084 = vmatprep.subr.mxu0 0.0
        %2085 = vmatpush1.xpose.msra.mxu0 0.0
        %2086 = vmatprep.subr.mxu0 0.0
        %2087 = vmatpush1.xpose.msra.mxu0 0.0
        %2088 = vmatprep.subr.mxu0 0.0
        %2089 = vmatpush1.xpose.msra.mxu0 0.0
        %2090 = vmatprep.subr.mxu0 0.0
        %2091 = vmatpush1.xpose.msra.mxu0 0.0
        %2092 = vmatprep.subr.mxu0 0.0
        %2093 = vmatpush1.xpose.msra.mxu0 0.0
        %2094 = vmatprep.subr.mxu0 0.0
        %2095 = vmatpush1.xpose.msra.mxu0 0.0
        %2096 = vmatprep.subr.mxu0 0.0
        %2097 = vmatpush1.xpose.msra.mxu0 0.0
        %2098 = vmatprep.subr.mxu0 0.0
        %2099 = vmatpush1.xpose.msra.mxu0 0.0
        %2100 = vmatprep.subr.mxu0 0.0
        %2101 = vmatpush1.xpose.msra.mxu0 0.0
        %2102 = vmatprep.subr.mxu0 0.0
        %2103 = vmatpush1.xpose.msra.mxu0 0.0
        %2104 = vmatprep.subr.mxu0 0.0
        %2105 = vmatpush1.xpose.msra.mxu0 0.0
        %2106 = vmatprep.subr.mxu0 0.0
        %2107 = vmatpush1.xpose.msra.mxu0 0.0
        %2108 = vmatprep.subr.mxu0 0.0
        %2109 = vmatpush1.xpose.msra.mxu0 0.0
        %2110 = vmatprep.subr.mxu0 0.0
        %2111 = vmatpush1.xpose.msra.mxu0 0.0
        %2112 = vmatprep.subr.mxu0 0.0
        %2113 = vmatpush1.xpose.msra.mxu0 0.0
        %2114 = vmatprep.subr.mxu0 0.0
        %2115 = vmatpush1.xpose.msra.mxu0 0.0
        %2116 = vmatprep.subr.mxu0 0.0
        %2117 = vmatpush1.xpose.msra.mxu0 0.0
        %2118 = vmatprep.subr.mxu0 0.0
        %2119 = vmatpush1.xpose.msra.mxu0 0.0
        %2120 = vmatprep.subr.mxu0 0.0
        %2121 = vmatpush1.xpose.msra.mxu0 0.0
        %2122 = vmatprep.mubr.f32.mxu0 0.0
        %2123 = vmatmul.mubr.f32.gmra.mrb[0].mxu0 %v2053
        %v2124 = vpop.f32.mrb[0].mxu0
        %v2125 = vadd.f32 %v1897, %v2124
        %v2126 = vpop.f32.mrb[0].mxu0
        %2127 = vdwg.mxu0
        %v2129 = vsel %vm1899, %v1241, 0
        %v2132 = vsel %vm1899, %v1565, 0
        %2134 = vmatprep.subr.mxu0 0.0
        %2135 = vmatpush1.xpose.msra.mxu0 %v2132
        %2136 = vmatprep.subr.mxu0 0.0
        %2137 = vmatpush1.xpose.msra.mxu0 0.0
        %2138 = vmatprep.subr.mxu0 0.0
        %2139 = vmatpush1.xpose.msra.mxu0 0.0
        %2140 = vmatprep.subr.mxu0 0.0
        %2141 = vmatpush1.xpose.msra.mxu0 0.0
        %2142 = vmatprep.subr.mxu0 0.0
        %2143 = vmatpush1.xpose.msra.mxu0 0.0
        %2144 = vmatprep.subr.mxu0 0.0
        %2145 = vmatpush1.xpose.msra.mxu0 0.0
        %2146 = vmatprep.subr.mxu0 0.0
        %2147 = vmatpush1.xpose.msra.mxu0 0.0
        %2148 = vmatprep.subr.mxu0 0.0
        %2149 = vmatpush1.xpose.msra.mxu0 0.0
        %2150 = vmatprep.subr.mxu0 0.0
        %2151 = vmatpush1.xpose.msra.mxu0 0.0
        %2152 = vmatprep.subr.mxu0 0.0
        %2153 = vmatpush1.xpose.msra.mxu0 0.0
        %2154 = vmatprep.subr.mxu0 0.0
        %2155 = vmatpush1.xpose.msra.mxu0 0.0
        %2156 = vmatprep.subr.mxu0 0.0
        %2157 = vmatpush1.xpose.msra.mxu0 0.0
        %2158 = vmatprep.subr.mxu0 0.0
        %2159 = vmatpush1.xpose.msra.mxu0 0.0
        %2160 = vmatprep.subr.mxu0 0.0
        %2161 = vmatpush1.xpose.msra.mxu0 0.0
        %2162 = vmatprep.subr.mxu0 0.0
        %2163 = vmatpush1.xpose.msra.mxu0 0.0
        %2164 = vmatprep.subr.mxu0 0.0
        %2165 = vmatpush1.xpose.msra.mxu0 0.0
        %2166 = vmatprep.subr.mxu0 0.0
        %2167 = vmatpush1.xpose.msra.mxu0 0.0
        %2168 = vmatprep.subr.mxu0 0.0
        %2169 = vmatpush1.xpose.msra.mxu0 0.0
        %2170 = vmatprep.subr.mxu0 0.0
        %2171 = vmatpush1.xpose.msra.mxu0 0.0
        %2172 = vmatprep.subr.mxu0 0.0
        %2173 = vmatpush1.xpose.msra.mxu0 0.0
        %2174 = vmatprep.subr.mxu0 0.0
        %2175 = vmatpush1.xpose.msra.mxu0 0.0
        %2176 = vmatprep.subr.mxu0 0.0
        %2177 = vmatpush1.xpose.msra.mxu0 0.0
        %2178 = vmatprep.subr.mxu0 0.0
        %2179 = vmatpush1.xpose.msra.mxu0 0.0
        %2180 = vmatprep.subr.mxu0 0.0
        %2181 = vmatpush1.xpose.msra.mxu0 0.0
        %2182 = vmatprep.subr.mxu0 0.0
        %2183 = vmatpush1.xpose.msra.mxu0 0.0
        %2184 = vmatprep.subr.mxu0 0.0
        %2185 = vmatpush1.xpose.msra.mxu0 0.0
        %2186 = vmatprep.subr.mxu0 0.0
        %2187 = vmatpush1.xpose.msra.mxu0 0.0
        %2188 = vmatprep.subr.mxu0 0.0
        %2189 = vmatpush1.xpose.msra.mxu0 0.0
        %2190 = vmatprep.subr.mxu0 0.0
        %2191 = vmatpush1.xpose.msra.mxu0 0.0
        %2192 = vmatprep.subr.mxu0 0.0
        %2193 = vmatpush1.xpose.msra.mxu0 0.0
        %2194 = vmatprep.subr.mxu0 0.0
        %2195 = vmatpush1.xpose.msra.mxu0 0.0
        %2196 = vmatprep.subr.mxu0 0.0
        %2197 = vmatpush1.xpose.msra.mxu0 0.0
        %2198 = vmatprep.mubr.f32.mxu0 0.0
        %2199 = vmatmul.mubr.f32.gmra.mrb[0].mxu0 %v2129
        %v2200 = vpop.f32.mrb[0].mxu0
        %v2201 = vadd.f32 %v1897, %v2200
        %v2202 = vpop.f32.mrb[0].mxu0
        %2203 = vdwg.mxu0
        %v2204 = vsel %vm1899, %v1973, -inf
        %2205 = vmax.xlane.f32.xlu0 %v2204
        %v2206 = vpop.xlane.xlu0 %2205
        %v2207 = vsel %vm1899, %v2049, -inf
        %2208 = vmax.xlane.f32.xlu0 %v2207
        %v2209 = vpop.xlane.xlu0 %2208
        %v2210 = vsel %vm1899, %v2125, -inf
        %2211 = vmax.xlane.f32.xlu0 %v2210
        %v2212 = vpop.xlane.xlu0 %2211
        %v2213 = vsel %vm1899, %v2201, -inf
        %2214 = vmax.xlane.f32.xlu0 %v2213
        %v2215 = vpop.xlane.xlu0 %2214
        %v2216 = vsub.f32 %v1973, %v2206
        %v2217 = vsub.f32 %v2049, %v2209
        %v2218 = vsub.f32 %v2125, %v2212
        %v2219 = vsub.f32 %v2201, %v2215
        %v2220 = vmul.f32 %v2216, 1.442695
        %v2221 = vpow.pop %v2220
        %v2222 = vmul.f32 %v2217, 1.442695
        %v2223 = vpow.pop %v2222
        %v2224 = vmul.f32 %v2218, 1.442695
        %v2225 = vpow.pop %v2224
        %v2226 = vmul.f32 %v2219, 1.442695
        %v2227 = vpow.pop %v2226
        %v2228 = vsel %vm1899, %v2221, 0.0
        %2229 = vadd.xlane.f32.xlu0 %v2228
        %v2230 = vpop.xlane.xlu0 %2229
        %v2231 = vsel %vm1899, %v2223, 0.0
        %2232 = vadd.xlane.f32.xlu0 %v2231
        %v2233 = vpop.xlane.xlu0 %2232
        %v2234 = vsel %vm1899, %v2225, 0.0
        %2235 = vadd.xlane.f32.xlu0 %v2234
        %v2236 = vpop.xlane.xlu0 %2235
        %v2237 = vsel %vm1899, %v2227, 0.0
        %2238 = vadd.xlane.f32.xlu0 %v2237
        %v2239 = vpop.xlane.xlu0 %2238
        %v2240 = vrcp.pop %v2230
        %v2241 = vrcp.pop %v2233
        %v2242 = vrcp.pop %v2236
        %v2243 = vrcp.pop %v2239
        %v2244 = vmul.f32 %v2221, %v2240
        %v2245 = vmul.f32 %v2223, %v2241
        %v2246 = vmul.f32 %v2225, %v2242
        %v2247 = vmul.f32 %v2227, %v2243
        %2248 = vst.msk [vmem:[%s837] sm:$0xff] %vm1899, %v2244
        %2249 = vst.msk [vmem:[%s837 + $0x8] sm:$0xff] %vm1899, %v2245
        %2250 = vst.msk [vmem:[%s837 + $0x10] sm:$0xff] %vm1899, %v2246
        %2251 = vst.msk [vmem:[%s837 + $0x18] sm:$0xff] %vm1899, %v2247
        %v2253 = vsel %vm1899, %v2244, 0
        %2255 = vmatprep.subr.mxu0 0.0
        %2256 = vmatpush1.msra.mxu0 %v1679
        %2257 = vmatprep.subr.mxu0 0.0
        %2258 = vmatpush1.msra.mxu0 0.0
        %2259 = vmatprep.subr.mxu0 0.0
        %2260 = vmatpush1.msra.mxu0 0.0
        %2261 = vmatprep.subr.mxu0 0.0
        %2262 = vmatpush1.msra.mxu0 0.0
        %2263 = vmatprep.subr.mxu0 0.0
        %2264 = vmatpush1.msra.mxu0 0.0
        %2265 = vmatprep.subr.mxu0 0.0
        %2266 = vmatpush1.msra.mxu0 0.0
        %2267 = vmatprep.subr.mxu0 0.0
        %2268 = vmatpush1.msra.mxu0 0.0
        %2269 = vmatprep.subr.mxu0 0.0
        %2270 = vmatpush1.msra.mxu0 0.0
        %2271 = vmatprep.subr.mxu0 0.0
        %2272 = vmatpush1.msra.mxu0 0.0
        %2273 = vmatprep.subr.mxu0 0.0
        %2274 = vmatpush1.msra.mxu0 0.0
        %2275 = vmatprep.subr.mxu0 0.0
        %2276 = vmatpush1.msra.mxu0 0.0
        %2277 = vmatprep.subr.mxu0 0.0
        %2278 = vmatpush1.msra.mxu0 0.0
        %2279 = vmatprep.subr.mxu0 0.0
        %2280 = vmatpush1.msra.mxu0 0.0
        %2281 = vmatprep.subr.mxu0 0.0
        %2282 = vmatpush1.msra.mxu0 0.0
        %2283 = vmatprep.subr.mxu0 0.0
        %2284 = vmatpush1.msra.mxu0 0.0
        %2285 = vmatprep.subr.mxu0 0.0
        %2286 = vmatpush1.msra.mxu0 0.0
        %2287 = vmatprep.subr.mxu0 0.0
        %2288 = vmatpush1.msra.mxu0 0.0
        %2289 = vmatprep.subr.mxu0 0.0
        %2290 = vmatpush1.msra.mxu0 0.0
        %2291 = vmatprep.subr.mxu0 0.0
        %2292 = vmatpush1.msra.mxu0 0.0
        %2293 = vmatprep.subr.mxu0 0.0
        %2294 = vmatpush1.msra.mxu0 0.0
        %2295 = vmatprep.subr.mxu0 0.0
        %2296 = vmatpush1.msra.mxu0 0.0
        %2297 = vmatprep.subr.mxu0 0.0
        %2298 = vmatpush1.msra.mxu0 0.0
        %2299 = vmatprep.subr.mxu0 0.0
        %2300 = vmatpush1.msra.mxu0 0.0
        %2301 = vmatprep.subr.mxu0 0.0
        %2302 = vmatpush1.msra.mxu0 0.0
        %2303 = vmatprep.subr.mxu0 0.0
        %2304 = vmatpush1.msra.mxu0 0.0
        %2305 = vmatprep.subr.mxu0 0.0
        %2306 = vmatpush1.msra.mxu0 0.0
        %2307 = vmatprep.subr.mxu0 0.0
        %2308 = vmatpush1.msra.mxu0 0.0
        %2309 = vmatprep.subr.mxu0 0.0
        %2310 = vmatpush1.msra.mxu0 0.0
        %2311 = vmatprep.subr.mxu0 0.0
        %2312 = vmatpush1.msra.mxu0 0.0
        %2313 = vmatprep.subr.mxu0 0.0
        %2314 = vmatpush1.msra.mxu0 0.0
        %2315 = vmatprep.subr.mxu0 0.0
        %2316 = vmatpush1.msra.mxu0 0.0
        %2317 = vmatprep.subr.mxu0 0.0
        %2318 = vmatpush1.msra.mxu0 0.0
        %2319 = vmatprep.mubr.f32.mxu0 0.0
        %2320 = vmatmul.mubr.f32.gmra.mrb[0].mxu0 %v2253
        %v2321 = vpop.f32.mrb[0].mxu0
        %v2322 = vadd.f32 0.0, %v2321
        %v2323 = vpop.f32.mrb[0].mxu0
        %2324 = vdwg.mxu0
        %v2326 = vsel %vm1899, %v2245, 0
        %2328 = vmatprep.subr.mxu0 0.0
        %2329 = vmatpush1.msra.mxu0 %v1749
        %2330 = vmatprep.subr.mxu0 0.0
        %2331 = vmatpush1.msra.mxu0 0.0
        %2332 = vmatprep.subr.mxu0 0.0
        %2333 = vmatpush1.msra.mxu0 0.0
        %2334 = vmatprep.subr.mxu0 0.0
        %2335 = vmatpush1.msra.mxu0 0.0
        %2336 = vmatprep.subr.mxu0 0.0
        %2337 = vmatpush1.msra.mxu0 0.0
        %2338 = vmatprep.subr.mxu0 0.0
        %2339 = vmatpush1.msra.mxu0 0.0
        %2340 = vmatprep.subr.mxu0 0.0
        %2341 = vmatpush1.msra.mxu0 0.0
        %2342 = vmatprep.subr.mxu0 0.0
        %2343 = vmatpush1.msra.mxu0 0.0
        %2344 = vmatprep.subr.mxu0 0.0
        %2345 = vmatpush1.msra.mxu0 0.0
        %2346 = vmatprep.subr.mxu0 0.0
        %2347 = vmatpush1.msra.mxu0 0.0
        %2348 = vmatprep.subr.mxu0 0.0
        %2349 = vmatpush1.msra.mxu0 0.0
        %2350 = vmatprep.subr.mxu0 0.0
        %2351 = vmatpush1.msra.mxu0 0.0
        %2352 = vmatprep.subr.mxu0 0.0
        %2353 = vmatpush1.msra.mxu0 0.0
        %2354 = vmatprep.subr.mxu0 0.0
        %2355 = vmatpush1.msra.mxu0 0.0
        %2356 = vmatprep.subr.mxu0 0.0
        %2357 = vmatpush1.msra.mxu0 0.0
        %2358 = vmatprep.subr.mxu0 0.0
        %2359 = vmatpush1.msra.mxu0 0.0
        %2360 = vmatprep.subr.mxu0 0.0
        %2361 = vmatpush1.msra.mxu0 0.0
        %2362 = vmatprep.subr.mxu0 0.0
        %2363 = vmatpush1.msra.mxu0 0.0
        %2364 = vmatprep.subr.mxu0 0.0
        %2365 = vmatpush1.msra.mxu0 0.0
        %2366 = vmatprep.subr.mxu0 0.0
        %2367 = vmatpush1.msra.mxu0 0.0
        %2368 = vmatprep.subr.mxu0 0.0
        %2369 = vmatpush1.msra.mxu0 0.0
        %2370 = vmatprep.subr.mxu0 0.0
        %2371 = vmatpush1.msra.mxu0 0.0
        %2372 = vmatprep.subr.mxu0 0.0
        %2373 = vmatpush1.msra.mxu0 0.0
        %2374 = vmatprep.subr.mxu0 0.0
        %2375 = vmatpush1.msra.mxu0 0.0
        %2376 = vmatprep.subr.mxu0 0.0
        %2377 = vmatpush1.msra.mxu0 0.0
        %2378 = vmatprep.subr.mxu0 0.0
        %2379 = vmatpush1.msra.mxu0 0.0
        %2380 = vmatprep.subr.mxu0 0.0
        %2381 = vmatpush1.msra.mxu0 0.0
        %2382 = vmatprep.subr.mxu0 0.0
        %2383 = vmatpush1.msra.mxu0 0.0
        %2384 = vmatprep.subr.mxu0 0.0
        %2385 = vmatpush1.msra.mxu0 0.0
        %2386 = vmatprep.subr.mxu0 0.0
        %2387 = vmatpush1.msra.mxu0 0.0
        %2388 = vmatprep.subr.mxu0 0.0
        %2389 = vmatpush1.msra.mxu0 0.0
        %2390 = vmatprep.subr.mxu0 0.0
        %2391 = vmatpush1.msra.mxu0 0.0
        %2392 = vmatprep.mubr.f32.mxu0 0.0
        %2393 = vmatmul.mubr.f32.gmra.mrb[0].mxu0 %v2326
        %v2394 = vpop.f32.mrb[0].mxu0
        %v2395 = vadd.f32 0.0, %v2394
        %v2396 = vpop.f32.mrb[0].mxu0
        %2397 = vdwg.mxu0
        %v2399 = vsel %vm1899, %v2246, 0
        %2401 = vmatprep.subr.mxu0 0.0
        %2402 = vmatpush1.msra.mxu0 %v1819
        %2403 = vmatprep.subr.mxu0 0.0
        %2404 = vmatpush1.msra.mxu0 0.0
        %2405 = vmatprep.subr.mxu0 0.0
        %2406 = vmatpush1.msra.mxu0 0.0
        %2407 = vmatprep.subr.mxu0 0.0
        %2408 = vmatpush1.msra.mxu0 0.0
        %2409 = vmatprep.subr.mxu0 0.0
        %2410 = vmatpush1.msra.mxu0 0.0
        %2411 = vmatprep.subr.mxu0 0.0
        %2412 = vmatpush1.msra.mxu0 0.0
        %2413 = vmatprep.subr.mxu0 0.0
        %2414 = vmatpush1.msra.mxu0 0.0
        %2415 = vmatprep.subr.mxu0 0.0
        %2416 = vmatpush1.msra.mxu0 0.0
        %2417 = vmatprep.subr.mxu0 0.0
        %2418 = vmatpush1.msra.mxu0 0.0
        %2419 = vmatprep.subr.mxu0 0.0
        %2420 = vmatpush1.msra.mxu0 0.0
        %2421 = vmatprep.subr.mxu0 0.0
        %2422 = vmatpush1.msra.mxu0 0.0
        %2423 = vmatprep.subr.mxu0 0.0
        %2424 = vmatpush1.msra.mxu0 0.0
        %2425 = vmatprep.subr.mxu0 0.0
        %2426 = vmatpush1.msra.mxu0 0.0
        %2427 = vmatprep.subr.mxu0 0.0
        %2428 = vmatpush1.msra.mxu0 0.0
        %2429 = vmatprep.subr.mxu0 0.0
        %2430 = vmatpush1.msra.mxu0 0.0
        %2431 = vmatprep.subr.mxu0 0.0
        %2432 = vmatpush1.msra.mxu0 0.0
        %2433 = vmatprep.subr.mxu0 0.0
        %2434 = vmatpush1.msra.mxu0 0.0
        %2435 = vmatprep.subr.mxu0 0.0
        %2436 = vmatpush1.msra.mxu0 0.0
        %2437 = vmatprep.subr.mxu0 0.0
        %2438 = vmatpush1.msra.mxu0 0.0
        %2439 = vmatprep.subr.mxu0 0.0
        %2440 = vmatpush1.msra.mxu0 0.0
        %2441 = vmatprep.subr.mxu0 0.0
        %2442 = vmatpush1.msra.mxu0 0.0
        %2443 = vmatprep.subr.mxu0 0.0
        %2444 = vmatpush1.msra.mxu0 0.0
        %2445 = vmatprep.subr.mxu0 0.0
        %2446 = vmatpush1.msra.mxu0 0.0
        %2447 = vmatprep.subr.mxu0 0.0
        %2448 = vmatpush1.msra.mxu0 0.0
        %2449 = vmatprep.subr.mxu0 0.0
        %2450 = vmatpush1.msra.mxu0 0.0
        %2451 = vmatprep.subr.mxu0 0.0
        %2452 = vmatpush1.msra.mxu0 0.0
        %2453 = vmatprep.subr.mxu0 0.0
        %2454 = vmatpush1.msra.mxu0 0.0
        %2455 = vmatprep.subr.mxu0 0.0
        %2456 = vmatpush1.msra.mxu0 0.0
        %2457 = vmatprep.subr.mxu0 0.0
        %2458 = vmatpush1.msra.mxu0 0.0
        %2459 = vmatprep.subr.mxu0 0.0
        %2460 = vmatpush1.msra.mxu0 0.0
        %2461 = vmatprep.subr.mxu0 0.0
        %2462 = vmatpush1.msra.mxu0 0.0
        %2463 = vmatprep.subr.mxu0 0.0
        %2464 = vmatpush1.msra.mxu0 0.0
        %2465 = vmatprep.mubr.f32.mxu0 0.0
        %2466 = vmatmul.mubr.f32.gmra.mrb[0].mxu0 %v2399
        %v2467 = vpop.f32.mrb[0].mxu0
        %v2468 = vadd.f32 0.0, %v2467
        %v2469 = vpop.f32.mrb[0].mxu0
        %2470 = vdwg.mxu0
        %v2472 = vsel %vm1899, %v2247, 0
        %2474 = vmatprep.subr.mxu0 0.0
        %2475 = vmatpush1.msra.mxu0 %v1889
        %2476 = vmatprep.subr.mxu0 0.0
        %2477 = vmatpush1.msra.mxu0 0.0
        %2478 = vmatprep.subr.mxu0 0.0
        %2479 = vmatpush1.msra.mxu0 0.0
        %2480 = vmatprep.subr.mxu0 0.0
        %2481 = vmatpush1.msra.mxu0 0.0
        %2482 = vmatprep.subr.mxu0 0.0
        %2483 = vmatpush1.msra.mxu0 0.0
        %2484 = vmatprep.subr.mxu0 0.0
        %2485 = vmatpush1.msra.mxu0 0.0
        %2486 = vmatprep.subr.mxu0 0.0
        %2487 = vmatpush1.msra.mxu0 0.0
        %2488 = vmatprep.subr.mxu0 0.0
        %2489 = vmatpush1.msra.mxu0 0.0
        %2490 = vmatprep.subr.mxu0 0.0
        %2491 = vmatpush1.msra.mxu0 0.0
        %2492 = vmatprep.subr.mxu0 0.0
        %2493 = vmatpush1.msra.mxu0 0.0
        %2494 = vmatprep.subr.mxu0 0.0
        %2495 = vmatpush1.msra.mxu0 0.0
        %2496 = vmatprep.subr.mxu0 0.0
        %2497 = vmatpush1.msra.mxu0 0.0
        %2498 = vmatprep.subr.mxu0 0.0
        %2499 = vmatpush1.msra.mxu0 0.0
        %2500 = vmatprep.subr.mxu0 0.0
        %2501 = vmatpush1.msra.mxu0 0.0
        %2502 = vmatprep.subr.mxu0 0.0
        %2503 = vmatpush1.msra.mxu0 0.0
        %2504 = vmatprep.subr.mxu0 0.0
        %2505 = vmatpush1.msra.mxu0 0.0
        %2506 = vmatprep.subr.mxu0 0.0
        %2507 = vmatpush1.msra.mxu0 0.0
        %2508 = vmatprep.subr.mxu0 0.0
        %2509 = vmatpush1.msra.mxu0 0.0
        %2510 = vmatprep.subr.mxu0 0.0
        %2511 = vmatpush1.msra.mxu0 0.0
        %2512 = vmatprep.subr.mxu0 0.0
        %2513 = vmatpush1.msra.mxu0 0.0
        %2514 = vmatprep.subr.mxu0 0.0
        %2515 = vmatpush1.msra.mxu0 0.0
        %2516 = vmatprep.subr.mxu0 0.0
        %2517 = vmatpush1.msra.mxu0 0.0
        %2518 = vmatprep.subr.mxu0 0.0
        %2519 = vmatpush1.msra.mxu0 0.0
        %2520 = vmatprep.subr.mxu0 0.0
        %2521 = vmatpush1.msra.mxu0 0.0
        %2522 = vmatprep.subr.mxu0 0.0
        %2523 = vmatpush1.msra.mxu0 0.0
        %2524 = vmatprep.subr.mxu0 0.0
        %2525 = vmatpush1.msra.mxu0 0.0
        %2526 = vmatprep.subr.mxu0 0.0
        %2527 = vmatpush1.msra.mxu0 0.0
        %2528 = vmatprep.subr.mxu0 0.0
        %2529 = vmatpush1.msra.mxu0 0.0
        %2530 = vmatprep.subr.mxu0 0.0
        %2531 = vmatpush1.msra.mxu0 0.0
        %2532 = vmatprep.subr.mxu0 0.0
        %2533 = vmatpush1.msra.mxu0 0.0
        %2534 = vmatprep.subr.mxu0 0.0
        %2535 = vmatpush1.msra.mxu0 0.0
        %2536 = vmatprep.subr.mxu0 0.0
        %2537 = vmatpush1.msra.mxu0 0.0
        %2538 = vmatprep.mubr.f32.mxu0 0.0
        %2539 = vmatmul.mubr.f32.gmra.mrb[0].mxu0 %v2472
        %v2540 = vpop.f32.mrb[0].mxu0
        %v2541 = vadd.f32 0.0, %v2540
        %v2542 = vpop.f32.mrb[0].mxu0
        %2543 = vdwg.mxu0
        %v2544 = vld [vmem:[%s876] sm:$0xff]
        %v2545 = vld [vmem:[%s876 + $0x8] sm:$0xff]
        %v2546 = vld [vmem:[%s876 + $0x10] sm:$0xff]
        %v2547 = vld [vmem:[%s876 + $0x18] sm:$0xff]
        %v2549 = vsel %vm1899, %v2322, 0
        %2551 = vmatprep.subr.mxu0 0.0
        %2552 = vmatpush1.msra.mxu0 %v2544
        %2553 = vmatprep.subr.mxu0 0.0
        %2554 = vmatpush1.msra.mxu0 0.0
        %2555 = vmatprep.subr.mxu0 0.0
        %2556 = vmatpush1.msra.mxu0 0.0
        %2557 = vmatprep.subr.mxu0 0.0
        %2558 = vmatpush1.msra.mxu0 0.0
        %2559 = vmatprep.subr.mxu0 0.0
        %2560 = vmatpush1.msra.mxu0 0.0
        %2561 = vmatprep.subr.mxu0 0.0
        %2562 = vmatpush1.msra.mxu0 0.0
        %2563 = vmatprep.subr.mxu0 0.0
        %2564 = vmatpush1.msra.mxu0 0.0
        %2565 = vmatprep.subr.mxu0 0.0
        %2566 = vmatpush1.msra.mxu0 0.0
        %2567 = vmatprep.subr.mxu0 0.0
        %2568 = vmatpush1.msra.mxu0 0.0
        %2569 = vmatprep.subr.mxu0 0.0
        %2570 = vmatpush1.msra.mxu0 0.0
        %2571 = vmatprep.subr.mxu0 0.0
        %2572 = vmatpush1.msra.mxu0 0.0
        %2573 = vmatprep.subr.mxu0 0.0
        %2574 = vmatpush1.msra.mxu0 0.0
        %2575 = vmatprep.subr.mxu0 0.0
        %2576 = vmatpush1.msra.mxu0 0.0
        %2577 = vmatprep.subr.mxu0 0.0
        %2578 = vmatpush1.msra.mxu0 0.0
        %2579 = vmatprep.subr.mxu0 0.0
        %2580 = vmatpush1.msra.mxu0 0.0
        %2581 = vmatprep.subr.mxu0 0.0
        %2582 = vmatpush1.msra.mxu0 0.0
        %2583 = vmatprep.subr.mxu0 0.0
        %2584 = vmatpush1.msra.mxu0 0.0
        %2585 = vmatprep.subr.mxu0 0.0
        %2586 = vmatpush1.msra.mxu0 0.0
        %2587 = vmatprep.subr.mxu0 0.0
        %2588 = vmatpush1.msra.mxu0 0.0
        %2589 = vmatprep.subr.mxu0 0.0
        %2590 = vmatpush1.msra.mxu0 0.0
        %2591 = vmatprep.subr.mxu0 0.0
        %2592 = vmatpush1.msra.mxu0 0.0
        %2593 = vmatprep.subr.mxu0 0.0
        %2594 = vmatpush1.msra.mxu0 0.0
        %2595 = vmatprep.subr.mxu0 0.0
        %2596 = vmatpush1.msra.mxu0 0.0
        %2597 = vmatprep.subr.mxu0 0.0
        %2598 = vmatpush1.msra.mxu0 0.0
        %2599 = vmatprep.subr.mxu0 0.0
        %2600 = vmatpush1.msra.mxu0 0.0
        %2601 = vmatprep.subr.mxu0 0.0
        %2602 = vmatpush1.msra.mxu0 0.0
        %2603 = vmatprep.subr.mxu0 0.0
        %2604 = vmatpush1.msra.mxu0 0.0
        %2605 = vmatprep.subr.mxu0 0.0
        %2606 = vmatpush1.msra.mxu0 0.0
        %2607 = vmatprep.subr.mxu0 0.0
        %2608 = vmatpush1.msra.mxu0 0.0
        %2609 = vmatprep.subr.mxu0 0.0
        %2610 = vmatpush1.msra.mxu0 0.0
        %2611 = vmatprep.subr.mxu0 0.0
        %2612 = vmatpush1.msra.mxu0 0.0
        %2613 = vmatprep.subr.mxu0 0.0
        %2614 = vmatpush1.msra.mxu0 0.0
        %2615 = vmatprep.mubr.f32.mxu0 0.0
        %2616 = vmatmul.mubr.f32.gmra.mrb[0].mxu0 %v2549
        %v2617 = vpop.f32.mrb[0].mxu0
        %v2618 = vadd.f32 0.0, %v2617
        %v2619 = vpop.f32.mrb[0].mxu0
        %2620 = vdwg.mxu0
        %v2622 = vsel %vm1899, %v2395, 0
        %2624 = vmatprep.subr.mxu0 0.0
        %2625 = vmatpush1.msra.mxu0 %v2545
        %2626 = vmatprep.subr.mxu0 0.0
        %2627 = vmatpush1.msra.mxu0 0.0
        %2628 = vmatprep.subr.mxu0 0.0
        %2629 = vmatpush1.msra.mxu0 0.0
        %2630 = vmatprep.subr.mxu0 0.0
        %2631 = vmatpush1.msra.mxu0 0.0
        %2632 = vmatprep.subr.mxu0 0.0
        %2633 = vmatpush1.msra.mxu0 0.0
        %2634 = vmatprep.subr.mxu0 0.0
        %2635 = vmatpush1.msra.mxu0 0.0
        %2636 = vmatprep.subr.mxu0 0.0
        %2637 = vmatpush1.msra.mxu0 0.0
        %2638 = vmatprep.subr.mxu0 0.0
        %2639 = vmatpush1.msra.mxu0 0.0
        %2640 = vmatprep.subr.mxu0 0.0
        %2641 = vmatpush1.msra.mxu0 0.0
        %2642 = vmatprep.subr.mxu0 0.0
        %2643 = vmatpush1.msra.mxu0 0.0
        %2644 = vmatprep.subr.mxu0 0.0
        %2645 = vmatpush1.msra.mxu0 0.0
        %2646 = vmatprep.subr.mxu0 0.0
        %2647 = vmatpush1.msra.mxu0 0.0
        %2648 = vmatprep.subr.mxu0 0.0
        %2649 = vmatpush1.msra.mxu0 0.0
        %2650 = vmatprep.subr.mxu0 0.0
        %2651 = vmatpush1.msra.mxu0 0.0
        %2652 = vmatprep.subr.mxu0 0.0
        %2653 = vmatpush1.msra.mxu0 0.0
        %2654 = vmatprep.subr.mxu0 0.0
        %2655 = vmatpush1.msra.mxu0 0.0
        %2656 = vmatprep.subr.mxu0 0.0
        %2657 = vmatpush1.msra.mxu0 0.0
        %2658 = vmatprep.subr.mxu0 0.0
        %2659 = vmatpush1.msra.mxu0 0.0
        %2660 = vmatprep.subr.mxu0 0.0
        %2661 = vmatpush1.msra.mxu0 0.0
        %2662 = vmatprep.subr.mxu0 0.0
        %2663 = vmatpush1.msra.mxu0 0.0
        %2664 = vmatprep.subr.mxu0 0.0
        %2665 = vmatpush1.msra.mxu0 0.0
        %2666 = vmatprep.subr.mxu0 0.0
        %2667 = vmatpush1.msra.mxu0 0.0
        %2668 = vmatprep.subr.mxu0 0.0
        %2669 = vmatpush1.msra.mxu0 0.0
        %2670 = vmatprep.subr.mxu0 0.0
        %2671 = vmatpush1.msra.mxu0 0.0
        %2672 = vmatprep.subr.mxu0 0.0
        %2673 = vmatpush1.msra.mxu0 0.0
        %2674 = vmatprep.subr.mxu0 0.0
        %2675 = vmatpush1.msra.mxu0 0.0
        %2676 = vmatprep.subr.mxu0 0.0
        %2677 = vmatpush1.msra.mxu0 0.0
        %2678 = vmatprep.subr.mxu0 0.0
        %2679 = vmatpush1.msra.mxu0 0.0
        %2680 = vmatprep.subr.mxu0 0.0
        %2681 = vmatpush1.msra.mxu0 0.0
        %2682 = vmatprep.subr.mxu0 0.0
        %2683 = vmatpush1.msra.mxu0 0.0
        %2684 = vmatprep.subr.mxu0 0.0
        %2685 = vmatpush1.msra.mxu0 0.0
        %2686 = vmatprep.subr.mxu0 0.0
        %2687 = vmatpush1.msra.mxu0 0.0
        %2688 = vmatprep.mubr.f32.mxu0 0.0
        %2689 = vmatmul.mubr.f32.gmra.mrb[0].mxu0 %v2622
        %v2690 = vpop.f32.mrb[0].mxu0
        %v2691 = vadd.f32 0.0, %v2690
        %v2692 = vpop.f32.mrb[0].mxu0
        %2693 = vdwg.mxu0
        %v2695 = vsel %vm1899, %v2468, 0
        %2697 = vmatprep.subr.mxu0 0.0
        %2698 = vmatpush1.msra.mxu0 %v2546
        %2699 = vmatprep.subr.mxu0 0.0
        %2700 = vmatpush1.msra.mxu0 0.0
        %2701 = vmatprep.subr.mxu0 0.0
        %2702 = vmatpush1.msra.mxu0 0.0
        %2703 = vmatprep.subr.mxu0 0.0
        %2704 = vmatpush1.msra.mxu0 0.0
        %2705 = vmatprep.subr.mxu0 0.0
        %2706 = vmatpush1.msra.mxu0 0.0
        %2707 = vmatprep.subr.mxu0 0.0
        %2708 = vmatpush1.msra.mxu0 0.0
        %2709 = vmatprep.subr.mxu0 0.0
        %2710 = vmatpush1.msra.mxu0 0.0
        %2711 = vmatprep.subr.mxu0 0.0
        %2712 = vmatpush1.msra.mxu0 0.0
        %2713 = vmatprep.subr.mxu0 0.0
        %2714 = vmatpush1.msra.mxu0 0.0
        %2715 = vmatprep.subr.mxu0 0.0
        %2716 = vmatpush1.msra.mxu0 0.0
        %2717 = vmatprep.subr.mxu0 0.0
        %2718 = vmatpush1.msra.mxu0 0.0
        %2719 = vmatprep.subr.mxu0 0.0
        %2720 = vmatpush1.msra.mxu0 0.0
        %2721 = vmatprep.subr.mxu0 0.0
        %2722 = vmatpush1.msra.mxu0 0.0
        %2723 = vmatprep.subr.mxu0 0.0
        %2724 = vmatpush1.msra.mxu0 0.0
        %2725 = vmatprep.subr.mxu0 0.0
        %2726 = vmatpush1.msra.mxu0 0.0
        %2727 = vmatprep.subr.mxu0 0.0
        %2728 = vmatpush1.msra.mxu0 0.0
        %2729 = vmatprep.subr.mxu0 0.0
        %2730 = vmatpush1.msra.mxu0 0.0
        %2731 = vmatprep.subr.mxu0 0.0
        %2732 = vmatpush1.msra.mxu0 0.0
        %2733 = vmatprep.subr.mxu0 0.0
        %2734 = vmatpush1.msra.mxu0 0.0
        %2735 = vmatprep.subr.mxu0 0.0
        %2736 = vmatpush1.msra.mxu0 0.0
        %2737 = vmatprep.subr.mxu0 0.0
        %2738 = vmatpush1.msra.mxu0 0.0
        %2739 = vmatprep.subr.mxu0 0.0
        %2740 = vmatpush1.msra.mxu0 0.0
        %2741 = vmatprep.subr.mxu0 0.0
        %2742 = vmatpush1.msra.mxu0 0.0
        %2743 = vmatprep.subr.mxu0 0.0
        %2744 = vmatpush1.msra.mxu0 0.0
        %2745 = vmatprep.subr.mxu0 0.0
        %2746 = vmatpush1.msra.mxu0 0.0
        %2747 = vmatprep.subr.mxu0 0.0
        %2748 = vmatpush1.msra.mxu0 0.0
        %2749 = vmatprep.subr.mxu0 0.0
        %2750 = vmatpush1.msra.mxu0 0.0
        %2751 = vmatprep.subr.mxu0 0.0
        %2752 = vmatpush1.msra.mxu0 0.0
        %2753 = vmatprep.subr.mxu0 0.0
        %2754 = vmatpush1.msra.mxu0 0.0
        %2755 = vmatprep.subr.mxu0 0.0
        %2756 = vmatpush1.msra.mxu0 0.0
        %2757 = vmatprep.subr.mxu0 0.0
        %2758 = vmatpush1.msra.mxu0 0.0
        %2759 = vmatprep.subr.mxu0 0.0
        %2760 = vmatpush1.msra.mxu0 0.0
        %2761 = vmatprep.mubr.f32.mxu0 0.0
        %2762 = vmatmul.mubr.f32.gmra.mrb[0].mxu0 %v2695
        %v2763 = vpop.f32.mrb[0].mxu0
        %v2764 = vadd.f32 0.0, %v2763
        %v2765 = vpop.f32.mrb[0].mxu0
        %2766 = vdwg.mxu0
        %v2768 = vsel %vm1899, %v2541, 0
        %2770 = vmatprep.subr.mxu0 0.0
        %2771 = vmatpush1.msra.mxu0 %v2547
        %2772 = vmatprep.subr.mxu0 0.0
        %2773 = vmatpush1.msra.mxu0 0.0
        %2774 = vmatprep.subr.mxu0 0.0
        %2775 = vmatpush1.msra.mxu0 0.0
        %2776 = vmatprep.subr.mxu0 0.0
        %2777 = vmatpush1.msra.mxu0 0.0
        %2778 = vmatprep.subr.mxu0 0.0
        %2779 = vmatpush1.msra.mxu0 0.0
        %2780 = vmatprep.subr.mxu0 0.0
        %2781 = vmatpush1.msra.mxu0 0.0
        %2782 = vmatprep.subr.mxu0 0.0
        %2783 = vmatpush1.msra.mxu0 0.0
        %2784 = vmatprep.subr.mxu0 0.0
        %2785 = vmatpush1.msra.mxu0 0.0
        %2786 = vmatprep.subr.mxu0 0.0
        %2787 = vmatpush1.msra.mxu0 0.0
        %2788 = vmatprep.subr.mxu0 0.0
        %2789 = vmatpush1.msra.mxu0 0.0
        %2790 = vmatprep.subr.mxu0 0.0
        %2791 = vmatpush1.msra.mxu0 0.0
        %2792 = vmatprep.subr.mxu0 0.0
        %2793 = vmatpush1.msra.mxu0 0.0
        %2794 = vmatprep.subr.mxu0 0.0
        %2795 = vmatpush1.msra.mxu0 0.0
        %2796 = vmatprep.subr.mxu0 0.0
        %2797 = vmatpush1.msra.mxu0 0.0
        %2798 = vmatprep.subr.mxu0 0.0
        %2799 = vmatpush1.msra.mxu0 0.0
        %2800 = vmatprep.subr.mxu0 0.0
        %2801 = vmatpush1.msra.mxu0 0.0
        %2802 = vmatprep.subr.mxu0 0.0
        %2803 = vmatpush1.msra.mxu0 0.0
        %2804 = vmatprep.subr.mxu0 0.0
        %2805 = vmatpush1.msra.mxu0 0.0
        %2806 = vmatprep.subr.mxu0 0.0
        %2807 = vmatpush1.msra.mxu0 0.0
        %2808 = vmatprep.subr.mxu0 0.0
        %2809 = vmatpush1.msra.mxu0 0.0
        %2810 = vmatprep.subr.mxu0 0.0
        %2811 = vmatpush1.msra.mxu0 0.0
        %2812 = vmatprep.subr.mxu0 0.0
        %2813 = vmatpush1.msra.mxu0 0.0
        %2814 = vmatprep.subr.mxu0 0.0
        %2815 = vmatpush1.msra.mxu0 0.0
        %2816 = vmatprep.subr.mxu0 0.0
        %2817 = vmatpush1.msra.mxu0 0.0
        %2818 = vmatprep.subr.mxu0 0.0
        %2819 = vmatpush1.msra.mxu0 0.0
        %2820 = vmatprep.subr.mxu0 0.0
        %2821 = vmatpush1.msra.mxu0 0.0
        %2822 = vmatprep.subr.mxu0 0.0
        %2823 = vmatpush1.msra.mxu0 0.0
        %2824 = vmatprep.subr.mxu0 0.0
        %2825 = vmatpush1.msra.mxu0 0.0
        %2826 = vmatprep.subr.mxu0 0.0
        %2827 = vmatpush1.msra.mxu0 0.0
        %2828 = vmatprep.subr.mxu0 0.0
        %2829 = vmatpush1.msra.mxu0 0.0
        %2830 = vmatprep.subr.mxu0 0.0
        %2831 = vmatpush1.msra.mxu0 0.0
        %2832 = vmatprep.subr.mxu0 0.0
        %2833 = vmatpush1.msra.mxu0 0.0
        %2834 = vmatprep.mubr.f32.mxu0 0.0
        %2835 = vmatmul.mubr.f32.gmra.mrb[0].mxu0 %v2768
        %v2836 = vpop.f32.mrb[0].mxu0
        %v2837 = vadd.f32 0.0, %v2836
        %v2838 = vpop.f32.mrb[0].mxu0
        %2839 = vdwg.mxu0
        %v2840 = vsel %vm960, %v2618, 0.0
        %v2841 = vsel %vm960, %v2691, 0.0
        %v2842 = vadd.f32 %v2840, %v2841
        %v2843 = vsel %vm960, %v2764, 0.0
        %v2844 = vadd.f32 %v2842, %v2843
        %v2845 = vsel %vm960, %v2837, 0.0
        %v2846 = vadd.f32 %v2844, %v2845
        %v2847 = vld [vmem:[%s879] sm:$0x1]
        %v2849 = vlaneseq
        %v2850 = vshrl.u32 %v2849, 7
        %v2851 = vsub.s32 0, %v2850
        %v2852 = vrot.slane %v2847, %v2851
        %v2854 = vadd.f32 %v2846, %v2852
        %v2855 = vadd.f32 %v2854, %v915
        %v2856 = vld [vmem:[%s882] sm:$0x1]
        %v2857 = vld [vmem:[%s885] sm:$0x1]
        %v2858 = vsel %vm960, %v2855, 0.0
        %2859 = vadd.xlane.f32.xlu0 %v2858
        %v2860 = vpop.xlane.xlu0 %2859
        %v2861 = vrcp.pop 32.0
        %v2862 = vmul.f32 %v2860, %v2861
        %v2863 = vsub.f32 %v2855, %v2862
        %v2864 = vmul.f32 %v2863, %v2863
        %v2865 = vsel %vm960, %v2864, 0.0
        %2866 = vadd.xlane.f32.xlu0 %v2865
        %v2867 = vpop.xlane.xlu0 %2866
        %v2868 = vmul.f32 %v2867, %v2861
        %v2869 = vadd.f32 %v2868, 1e-05
        %v2870 = vrsqrt.pop %v2869
        %v2871 = vmul.f32 %v2863, %v2870
        %v2873 = vlaneseq
        %v2874 = vshrl.u32 %v2873, 7
        %v2875 = vsub.s32 0, %v2874
        %v2876 = vrot.slane %v2856, %v2875
        %v2878 = vmul.f32 %v2871, %v2876
        %v2880 = vlaneseq
        %v2881 = vshrl.u32 %v2880, 7
        %v2882 = vsub.s32 0, %v2881
        %v2883 = vrot.slane %v2857, %v2882
        %v2885 = vadd.f32 %v2878, %v2883
        %v2886 = vld [vmem:[%s890] sm:$0xff]
        %v2887 = vld [vmem:[%s890 + $0x8] sm:$0xff]
        %v2888 = vld [vmem:[%s890 + $0x10] sm:$0xff]
        %v2889 = vld [vmem:[%s890 + $0x18] sm:$0xff]
        %v2890 = vld [vmem:[%s893] sm:$0x1]
        %v2892 = vlaneseq
        %v2893 = vshrl.u32 %v2892, 7
        %v2894 = vsub.s32 0, %v2893
        %v2895 = vrot.slane %v2890, %v2894
        %v2898 = vsel %vm960, %v2885, 0
        %2900 = vmatprep.subr.mxu0 0.0
        %2901 = vmatpush1.msra.mxu0 %v2886
        %2902 = vmatprep.subr.mxu0 0.0
        %2903 = vmatpush1.msra.mxu0 %v2887
        %2904 = vmatprep.subr.mxu0 0.0
        %2905 = vmatpush1.msra.mxu0 %v2888
        %2906 = vmatprep.subr.mxu0 0.0
        %2907 = vmatpush1.msra.mxu0 %v2889
        %2908 = vmatprep.subr.mxu0 0.0
        %2909 = vmatpush1.msra.mxu0 0.0
        %2910 = vmatprep.subr.mxu0 0.0
        %2911 = vmatpush1.msra.mxu0 0.0
        %2912 = vmatprep.subr.mxu0 0.0
        %2913 = vmatpush1.msra.mxu0 0.0
        %2914 = vmatprep.subr.mxu0 0.0
        %2915 = vmatpush1.msra.mxu0 0.0
        %2916 = vmatprep.subr.mxu0 0.0
        %2917 = vmatpush1.msra.mxu0 0.0
        %2918 = vmatprep.subr.mxu0 0.0
        %2919 = vmatpush1.msra.mxu0 0.0
        %2920 = vmatprep.subr.mxu0 0.0
        %2921 = vmatpush1.msra.mxu0 0.0
        %2922 = vmatprep.subr.mxu0 0.0
        %2923 = vmatpush1.msra.mxu0 0.0
        %2924 = vmatprep.subr.mxu0 0.0
        %2925 = vmatpush1.msra.mxu0 0.0
        %2926 = vmatprep.subr.mxu0 0.0
        %2927 = vmatpush1.msra.mxu0 0.0
        %2928 = vmatprep.subr.mxu0 0.0
        %2929 = vmatpush1.msra.mxu0 0.0
        %2930 = vmatprep.subr.mxu0 0.0
        %2931 = vmatpush1.msra.mxu0 0.0
        %2932 = vmatprep.subr.mxu0 0.0
        %2933 = vmatpush1.msra.mxu0 0.0
        %2934 = vmatprep.subr.mxu0 0.0
        %2935 = vmatpush1.msra.mxu0 0.0
        %2936 = vmatprep.subr.mxu0 0.0
        %2937 = vmatpush1.msra.mxu0 0.0
        %2938 = vmatprep.subr.mxu0 0.0
        %2939 = vmatpush1.msra.mxu0 0.0
        %2940 = vmatprep.subr.mxu0 0.0
        %2941 = vmatpush1.msra.mxu0 0.0
        %2942 = vmatprep.subr.mxu0 0.0
        %2943 = vmatpush1.msra.mxu0 0.0
        %2944 = vmatprep.subr.mxu0 0.0
        %2945 = vmatpush1.msra.mxu0 0.0
        %2946 = vmatprep.subr.mxu0 0.0
        %2947 = vmatpush1.msra.mxu0 0.0
        %2948 = vmatprep.subr.mxu0 0.0
        %2949 = vmatpush1.msra.mxu0 0.0
        %2950 = vmatprep.subr.mxu0 0.0
        %2951 = vmatpush1.msra.mxu0 0.0
        %2952 = vmatprep.subr.mxu0 0.0
        %2953 = vmatpush1.msra.mxu0 0.0
        %2954 = vmatprep.subr.mxu0 0.0
        %2955 = vmatpush1.msra.mxu0 0.0
        %2956 = vmatprep.subr.mxu0 0.0
        %2957 = vmatpush1.msra.mxu0 0.0
        %2958 = vmatprep.subr.mxu0 0.0
        %2959 = vmatpush1.msra.mxu0 0.0
        %2960 = vmatprep.subr.mxu0 0.0
        %2961 = vmatpush1.msra.mxu0 0.0
        %2962 = vmatprep.subr.mxu0 0.0
        %2963 = vmatpush1.msra.mxu0 0.0
        %2964 = vmatprep.mubr.f32.mxu0 0.0
        %2965 = vmatmul.mubr.f32.gmra.mrb[0].mxu0 %v2898
        %v2966 = vpop.f32.mrb[0].mxu0
        %v2967 = vadd.f32 %v2895, %v2966
        %v2968 = vpop.f32.mrb[0].mxu0
        %2969 = vdwg.mxu0
        %v2970 = vmax.f32 %v2967, 0.0
        %v2971 = vld [vmem:[%s898] sm:$0xff]
        %v2972 = vld [vmem:[%s898 + $0x8] sm:$0xff]
        %v2973 = vld [vmem:[%s898 + $0x10] sm:$0xff]
        %v2974 = vld [vmem:[%s898 + $0x18] sm:$0xff]
        %v2975 = vld [vmem:[%s898 + $0x20] sm:$0xff]
        %v2976 = vld [vmem:[%s898 + $0x28] sm:$0xff]
        %v2977 = vld [vmem:[%s898 + $0x30] sm:$0xff]
        %v2978 = vld [vmem:[%s898 + $0x38] sm:$0xff]
        %v2979 = vld [vmem:[%s901] sm:$0x1]
        %v2981 = vlaneseq
        %v2982 = vshrl.u32 %v2981, 7
        %v2983 = vsub.s32 0, %v2982
        %v2984 = vrot.slane %v2979, %v2983
        %vm2986 = vcmask 523264
        %v2988 = vsel %vm2986, %v2970, 0
        %2990 = vmatprep.subr.mxu0 0.0
        %2991 = vmatpush1.msra.mxu0 %v2971
        %2992 = vmatprep.subr.mxu0 0.0
        %2993 = vmatpush1.msra.mxu0 %v2972
        %2994 = vmatprep.subr.mxu0 0.0
        %2995 = vmatpush1.msra.mxu0 %v2973
        %2996 = vmatprep.subr.mxu0 0.0
        %2997 = vmatpush1.msra.mxu0 %v2974
        %2998 = vmatprep.subr.mxu0 0.0
        %2999 = vmatpush1.msra.mxu0 %v2975
        %3000 = vmatprep.subr.mxu0 0.0
        %3001 = vmatpush1.msra.mxu0 %v2976
        %3002 = vmatprep.subr.mxu0 0.0
        %3003 = vmatpush1.msra.mxu0 %v2977
        %3004 = vmatprep.subr.mxu0 0.0
        %3005 = vmatpush1.msra.mxu0 %v2978
        %3006 = vmatprep.subr.mxu0 0.0
        %3007 = vmatpush1.msra.mxu0 0.0
        %3008 = vmatprep.subr.mxu0 0.0
        %3009 = vmatpush1.msra.mxu0 0.0
        %3010 = vmatprep.subr.mxu0 0.0
        %3011 = vmatpush1.msra.mxu0 0.0
        %3012 = vmatprep.subr.mxu0 0.0
        %3013 = vmatpush1.msra.mxu0 0.0
        %3014 = vmatprep.subr.mxu0 0.0
        %3015 = vmatpush1.msra.mxu0 0.0
        %3016 = vmatprep.subr.mxu0 0.0
        %3017 = vmatpush1.msra.mxu0 0.0
        %3018 = vmatprep.subr.mxu0 0.0
        %3019 = vmatpush1.msra.mxu0 0.0
        %3020 = vmatprep.subr.mxu0 0.0
        %3021 = vmatpush1.msra.mxu0 0.0
        %3022 = vmatprep.subr.mxu0 0.0
        %3023 = vmatpush1.msra.mxu0 0.0
        %3024 = vmatprep.subr.mxu0 0.0
        %3025 = vmatpush1.msra.mxu0 0.0
        %3026 = vmatprep.subr.mxu0 0.0
        %3027 = vmatpush1.msra.mxu0 0.0
        %3028 = vmatprep.subr.mxu0 0.0
        %3029 = vmatpush1.msra.mxu0 0.0
        %3030 = vmatprep.subr.mxu0 0.0
        %3031 = vmatpush1.msra.mxu0 0.0
        %3032 = vmatprep.subr.mxu0 0.0
        %3033 = vmatpush1.msra.mxu0 0.0
        %3034 = vmatprep.subr.mxu0 0.0
        %3035 = vmatpush1.msra.mxu0 0.0
        %3036 = vmatprep.subr.mxu0 0.0
        %3037 = vmatpush1.msra.mxu0 0.0
        %3038 = vmatprep.subr.mxu0 0.0
        %3039 = vmatpush1.msra.mxu0 0.0
        %3040 = vmatprep.subr.mxu0 0.0
        %3041 = vmatpush1.msra.mxu0 0.0
        %3042 = vmatprep.subr.mxu0 0.0
        %3043 = vmatpush1.msra.mxu0 0.0
        %3044 = vmatprep.subr.mxu0 0.0
        %3045 = vmatpush1.msra.mxu0 0.0
        %3046 = vmatprep.subr.mxu0 0.0
        %3047 = vmatpush1.msra.mxu0 0.0
        %3048 = vmatprep.subr.mxu0 0.0
        %3049 = vmatpush1.msra.mxu0 0.0
        %3050 = vmatprep.subr.mxu0 0.0
        %3051 = vmatpush1.msra.mxu0 0.0
        %3052 = vmatprep.subr.mxu0 0.0
        %3053 = vmatpush1.msra.mxu0 0.0
        %3054 = vmatprep.mubr.f32.mxu0 0.0
        %3055 = vmatmul.mubr.f32.gmra.mrb[0].mxu0 %v2988
        %v3056 = vpop.f32.mrb[0].mxu0
        %v3057 = vadd.f32 %v2984, %v3056
        %v3058 = vpop.f32.mrb[0].mxu0
        %3059 = vdwg.mxu0
        %v3060 = vadd.f32 %v3057, %v2885
        %v3061 = vld [vmem:[%s904] sm:$0x1]
        %v3062 = vld [vmem:[%s907] sm:$0x1]
        %v3063 = vsel %vm960, %v3060, 0.0
        %3064 = vadd.xlane.f32.xlu0 %v3063
        %v3065 = vpop.xlane.xlu0 %3064
        %v3066 = vmul.f32 %v3065, %v2861
        %v3067 = vsub.f32 %v3060, %v3066
        %v3068 = vmul.f32 %v3067, %v3067
        %v3069 = vsel %vm960, %v3068, 0.0
        %3070 = vadd.xlane.f32.xlu0 %v3069
        %v3071 = vpop.xlane.xlu0 %3070
        %v3072 = vmul.f32 %v3071, %v2861
        %v3073 = vadd.f32 %v3072, 1e-05
        %v3074 = vrsqrt.pop %v3073
        %v3075 = vmul.f32 %v3067, %v3074
        %v3077 = vlaneseq
        %v3078 = vshrl.u32 %v3077, 7
        %v3079 = vsub.s32 0, %v3078
        %v3080 = vrot.slane %v3061, %v3079
        %v3082 = vmul.f32 %v3075, %v3080
        %v3084 = vlaneseq
        %v3085 = vshrl.u32 %v3084, 7
        %v3086 = vsub.s32 0, %v3085
        %v3087 = vrot.slane %v3062, %v3086
        %v3089 = vadd.f32 %v3082, %v3087
        %3090 = vst.msk [vmem:[#allocation2] sm:$0xff] %vm960, %v3089
        %3091 = vst.msk [vmem:[%s830] sm:$0xff] %vm960, %v3089
        %s3092 = sand.u32 %s527, 1
        %s3093 = scalar_lea.sflag [#allocation4], %s3092
        %s3094 = sand.u32 %s527, 1
        %s3095 = smul.addr %s3094, 8
        %s3096 = scalar_lea.vmem [#allocation3], %s3095
        %s3097 = sand.u32 %s555, 1
        %s3098 = scalar_lea.sflag [#allocation6], %s3097
        %s3099 = sand.u32 %s555, 1
        %s3100 = smul.addr %s3099, 32
        %s3101 = scalar_lea.vmem [#allocation5], %s3100
        // Predicated region
        $region97: #{tpu_custom_call.1} parent=91 // pred_check
          %p3102 = pneg %p537
        $region98: #{tpu_custom_call.1} parent=91 // pred_check_branch
          %3104 = sbr.rel (%p3102) target = $region100
        $region99: #{tpu_custom_call.1} parent=91 // pred_region
          %s3106 = ssub.s32 128, 128
          %3107 = vsyncadd %s3093, %s3106
          %s3108 = smul.addr %s42, 2
          %s3109 = sadd.s32 %s41, %s3108
          %s3110 = smul.addr %s3109, 128
          %s3111 = scalar_lea.hbm %s18, %s3110
          %s3113 = sshll.u32 %s3096, 4
          %s3114 = int_to_ptr.vmem [resolvable:$true] %s3113
          %3116 = dma.vmem_to_hbm [thread:$0]  %s3114, 128, %s3111, %s3093
        $region100: #{tpu_custom_call.1} parent=91 // pred_fallthru
          _
        // Predicated region
        $region101: #{tpu_custom_call.1} parent=91 // pred_check
          %p3117 = pneg %p565
        $region102: #{tpu_custom_call.1} parent=91 // pred_check_branch
          %3119 = sbr.rel (%p3117) target = $region104
        $region103: #{tpu_custom_call.1} parent=91 // pred_region
          %s3121 = ssub.s32 512, 512
          %3122 = vsyncadd %s3098, %s3121
          %s3123 = smul.addr %s41, 4
          %s3124 = smul.addr %s42, 8
          %s3125 = sadd.s32 %s3123, %s3124
          %s3126 = smul.addr %s3125, 128
          %s3127 = scalar_lea.hbm %s19, %s3126
          %s3128 = sshll.u32 %s3101, 4
          %s3129 = int_to_ptr.vmem [resolvable:$true] %s3128
          %3134 = dma.vmem_to_hbm [thread:$0]  %s3129, 512, %s3127, %s3098, 128, 128, 8
        $region104: #{tpu_custom_call.1} parent=91 // pred_fallthru
          _
      $region92: #{tpu_custom_call.1} parent=5 // pred_fallthru
        _
      %p3135 = scmp.le.s32.totalorder 2, %s32
      // Predicated region
      $region105: #{tpu_custom_call.1} parent=5 // pred_check
        %p3136 = pneg %p3135
      $region106: #{tpu_custom_call.1} parent=5 // pred_check_branch
        %3138 = sbr.rel (%p3136) target = $region108
      $region107: #{tpu_custom_call.1} parent=5 // pred_region
        %s3139 = ssub.s32 %s32, 2
        // Predicated region
        $region109: #{tpu_custom_call.1} parent=107 // pred_check
          %p3140 = pneg %p543
        $region110: #{tpu_custom_call.1} parent=107 // pred_check_branch
          %3142 = sbr.rel (%p3140) target = $region112
        $region111: #{tpu_custom_call.1} parent=107 // pred_region
          %s3143 = sand.u32 %s528, 1
          %s3144 = scalar_lea.sflag [#allocation4], %s3143
          %s3145 = sand.u32 %s528, 1
          %s3146 = smul.addr %s3145, 8
          %s3147 = scalar_lea.vmem [#allocation3], %s3146
          %3148 = dma.done %s3144, 128
        $region112: #{tpu_custom_call.1} parent=107 // pred_fallthru
          _
        // Predicated region
        $region113: #{tpu_custom_call.1} parent=107 // pred_check
          %p3149 = pneg %p571
        $region114: #{tpu_custom_call.1} parent=107 // pred_check_branch
          %3151 = sbr.rel (%p3149) target = $region116
        $region115: #{tpu_custom_call.1} parent=107 // pred_region
          %s3152 = sand.u32 %s556, 1
          %s3153 = scalar_lea.sflag [#allocation6], %s3152
          %s3154 = sand.u32 %s556, 1
          %s3155 = smul.addr %s3154, 32
          %s3156 = scalar_lea.vmem [#allocation5], %s3155
          %3157 = dma.done %s3153, 512
        $region116: #{tpu_custom_call.1} parent=107 // pred_fallthru
          _
      $region108: #{tpu_custom_call.1} parent=5 // pred_fallthru
        _
    $region6: #{tpu_custom_call.1} parent=1 // loop_footer
      %s36 = sadd.s32 1, %s32
    $region7: #{tpu_custom_call.1} parent=1 // loop_footer_branch
      %31 = sbr.rel target = $region3
    $region8: #{tpu_custom_call.1} parent=1 // loop_exit
      _
    %3158 = vsyncpa [#allocation4], 1
    %s3159 = scalar_lea.sflag [#allocation4], 1
    %3160 = vsyncpa %s3159, 1
    %3161 = vsyncpa [#allocation6], 1
    %s3162 = scalar_lea.sflag [#allocation6], 1
    %3163 = vsyncpa %s3162, 1

</llo_original>
